<compile_context>
chip_gen: v5e
topology: v5e:2x2
jax: 0.10.0
libtpu: 0.0.40
codegen_flags: <defaults>
</compile_context>

<pallas_src>
import jax
import jax.numpy as jnp
from jax.experimental import pallas as pl
from jax.experimental.pallas import tpu as pltpu

VISUAL_DIM = 1024
LANG_DIM = 1024
HIDDEN_DIM = 256
OUTPUT_DIM = 7
OUT_PAD = 128          # lane-dense padded action head (sliced back to 7 outside)


def _round_up(x, m):
    return (x + m - 1) // m * m


def _k_tiling(K):
    """K tiling: prefer a lane-aligned (multiple-of-128) divisor of K so no zero
    padding / wasted DMA+MXU work is needed; vis_w block (tk, 1024) bf16 <= 4 MiB so
    two pipeline buffers fit every generation comfortably."""
    max_tk = 2048                                    # 2048*1024*2 B = 4 MiB per block
    if K % 128 == 0:
        divs = [t for t in range(128, min(K, max_tk) + 1, 128) if K % t == 0]
        # for small K keep a few accumulation steps so the pipelined path is exercised
        small = [t for t in divs if t <= max(K // 3, 128)]
        if K <= max_tk and small:
            return K, max(small)
        return K, max(divs)
    tk = 256 if K <= 4096 else max_tk                # fallback: pad K
    return _round_up(K, tk), tk


# ---------------- parameter construction (deterministic, synthetic) ----------------

def init_linear(key, in_dim, out_dim):
    # mimic torch.nn.Linear default init: U(-1/sqrt(fan_in), 1/sqrt(fan_in))
    kw, kb = jax.random.split(key)
    bound = 1.0 / (in_dim ** 0.5)
    w = jax.random.uniform(kw, (in_dim, out_dim), jnp.float32, -bound, bound)
    b = jax.random.uniform(kb, (1, out_dim), jnp.float32, -bound, bound)
    return w, b


def init_params(key, img_feat_dim, view_num=2, frames=1):
    fv = frames * view_num
    k_vis, k1, k2, k3 = jax.random.split(key, 4)
    params = {}
    # synthetic stand-in for the DecisionNCE visual encoder (see TODO above); bf16
    # storage halves the HBM traffic of the dominant operand.
    w, b = init_linear(k_vis, img_feat_dim, VISUAL_DIM)
    params["vis_w"] = w.astype(jnp.bfloat16)
    params["vis_b"] = b                                      # f32; folded into b1 later
    # decoder: MLP(input_dim, [hidden, hidden], output_dim); s_dim = 0 (default)
    input_dim = VISUAL_DIM * fv + LANG_DIM
    w1, params["b1"] = init_linear(k1, input_dim, HIDDEN_DIM)
    w2, params["b2"] = init_linear(k2, HIDDEN_DIM, HIDDEN_DIM)
    w3, b3 = init_linear(k3, HIDDEN_DIM, OUTPUT_DIM)
    params["w1"] = w1.astype(jnp.bfloat16)
    params["w2"] = w2.astype(jnp.bfloat16)
    # zero-pad the 7-wide head to 128 lanes so the kernel's stores are lane-dense
    params["w3"] = jnp.pad(w3, ((0, 0), (0, OUT_PAD - OUTPUT_DIM))).astype(jnp.bfloat16)
    params["b3"] = jnp.pad(b3, ((0, 0), (0, OUT_PAD - OUTPUT_DIM)))
    return params


# ---------------- fused forward ----------------

def mini_bc_pretrain_forward(params, imgs, texts):
    """imgs: (B, F, V, C, H, W) float32; texts: (B, 1024) float32 (Tensor pass-through)."""
    B, F, V, C, H, W = imgs.shape
    FV = F * V
    K = C * H * W
    K_pad, tk = _k_tiling(K)
    nk = K_pad // tk

    # pad batch so kernel row counts are sublane friendly (bf16 image rows mult of 16)
    Bp = _round_up(max(B, 8), 8)
    if (FV * Bp) % 16:
        Bp = _round_up(max(B, 16), 16)
    rows = FV * Bp

    # (B,F,V,C,H,W) -> (FV, Bp, K_pad) -> (rows, K_pad): view-major rows, so each
    # view's batch rows form a contiguous 8-aligned slab of the accumulator.  Cast to
    # bf16 *before* the transpose/pad so the XLA layout pass moves half the bytes.
    x = imgs.reshape(B, FV, K).astype(jnp.bfloat16).transpose(1, 0, 2)
    x = jnp.pad(x, ((0, 0), (0, Bp - B), (0, K_pad - K)))
    x = x.reshape(rows, K_pad)

    vis_w = params["vis_w"]                                     # (K, 1024) bf16
    if vis_w.shape[0] != K_pad:
        vis_w = jnp.pad(vis_w, ((0, K_pad - K), (0, 0)))

    txt = jnp.pad(texts.astype(jnp.bfloat16), ((0, Bp - B), (0, 0)))  # (Bp, 1024) bf16

    w1, w2, w3 = params["w1"], params["w2"], params["w3"]       # bf16
    b2, b3 = params["b2"], params["b3"]                         # f32
    # fold the visual-encoder bias into the layer-1 bias (exact algebra) so the kernel
    # feeds layer 1 straight from accumulator slices.
    hp = jax.lax.Precision.HIGHEST
    w1_img_sum = w1[: FV * VISUAL_DIM, :].astype(jnp.float32)
    w1_img_sum = w1_img_sum.reshape(FV, VISUAL_DIM, HIDDEN_DIM).sum(axis=0)
    b1 = params["b1"] + jnp.dot(params["vis_b"], w1_img_sum, precision=hp)   # (1, 256)

    def kernel(x_ref, vw_ref, txt_ref, w1_ref, b1_ref, w2_ref, b2_ref,
               w3_ref, b3_ref, o_ref, acc_ref):
        k = pl.program_id(0)

        @pl.when(k == 0)
        def _():
            acc_ref[...] = jnp.zeros_like(acc_ref)

        # visual encoder: bf16 x bf16 -> f32 accumulate on the MXU
        acc_ref[...] += jnp.dot(x_ref[...], vw_ref[...],
                                preferred_element_type=jnp.float32)

        @pl.when(k == pl.num_programs(0) - 1)
        def _():
            # decoder layer 1: concat folded into per-block w1 slices, vis_b folded
            # into b1; every matmul LHS cast to bf16 (native MXU path, f32 accum).
            h = jnp.dot(txt_ref[...],
                        w1_ref[pl.ds(FV * VISUAL_DIM, LANG_DIM), :],
                        preferred_element_type=jnp.float32) + b1_ref[...]
            for j in range(FV):                                 # static unroll, FV small
                h = h + jnp.dot(acc_ref[pl.ds(j * Bp, Bp), :].astype(jnp.bfloat16),
                                w1_ref[pl.ds(j * VISUAL_DIM, VISUAL_DIM), :],
                                preferred_element_type=jnp.float32)
            h = jnp.maximum(h, 0.0)
            h = jnp.dot(h.astype(jnp.bfloat16), w2_ref[...],
                        preferred_element_type=jnp.float32) + b2_ref[...]
            h = jnp.maximum(h, 0.0)
            o_ref[...] = (jnp.dot(h.astype(jnp.bfloat16), w3_ref[...],
                                  preferred_element_type=jnp.float32)
                          + b3_ref[...]).astype(o_ref.dtype)

    const = lambda k: (0, 0)
    resident = pl.Buffered(1)   # grid-constant blocks: DMA'd once, single VMEM buffer

    def const_spec(shape):
        return pl.BlockSpec(shape, const, pipeline_mode=resident)

    in_specs = [
        pl.BlockSpec((rows, tk), lambda k: (0, k)),            # x: K-tiled (2 buffers)
        pl.BlockSpec((tk, VISUAL_DIM), lambda k: (k, 0)),      # vis_w: K-tiled (2 buf)
        const_spec((Bp, LANG_DIM)),                            # texts (bf16)
        const_spec(w1.shape),                                  # w1: image + text blocks
        const_spec((1, HIDDEN_DIM)),                           # b1 (vis_b folded in)
        const_spec((HIDDEN_DIM, HIDDEN_DIM)),                  # w2
        const_spec((1, HIDDEN_DIM)),                           # b2
        const_spec((HIDDEN_DIM, OUT_PAD)),                     # w3 (lane-padded)
        const_spec((1, OUT_PAD)),                              # b3 (lane-padded)
    ]
    out_spec = pl.BlockSpec((Bp, OUT_PAD), const, pipeline_mode=resident)

    # VMEM budget computed from the actual buffers (no hard-coded 32 MiB ceiling);
    # capped below v7x's 64 MiB physical VMEM.
    nbytes = lambda a: a.size * a.dtype.itemsize
    vmem_need = (
        2 * rows * tk * 2                    # x block, double buffered (bf16)
        + 2 * tk * VISUAL_DIM * 2            # vis_w block, double buffered (bf16)
        + rows * VISUAL_DIM * 4              # f32 accumulator scratch
        + nbytes(txt) + nbytes(w1) + nbytes(b1)
        + nbytes(w2) + nbytes(b2) + nbytes(w3) + nbytes(b3)
        + Bp * OUT_PAD * 4                   # output block
    )
    vmem_limit = int(min(max(vmem_need * 5 // 4 + (2 << 20), 32 << 20), 64 << 20))

    flops = 2 * rows * K_pad * VISUAL_DIM + 2 * Bp * (
        w1.shape[0] * HIDDEN_DIM + HIDDEN_DIM * HIDDEN_DIM + HIDDEN_DIM * OUT_PAD)
    bytes_accessed = (nbytes(x) + nbytes(vis_w) + nbytes(txt) + nbytes(w1)
                      + nbytes(w2) + nbytes(w3) + Bp * OUT_PAD * 4)

    out = pl.pallas_call(
        kernel,
        out_shape=jax.ShapeDtypeStruct((Bp, OUT_PAD), jnp.float32),
        grid_spec=pltpu.PrefetchScalarGridSpec(
            num_scalar_prefetch=0,
            grid=(nk,),
            in_specs=in_specs,
            out_specs=out_spec,
            scratch_shapes=[pltpu.VMEM((rows, VISUAL_DIM), jnp.float32)],
        ),
        compiler_params=pltpu.CompilerParams(
            # K is a reduction axis; intentionally no parallel axis — at small batch
            # the kernel is HBM-bound on vis_w and an M-split would double that stream.
            dimension_semantics=("arbitrary",),
            vmem_limit_bytes=vmem_limit,
        ),
        cost_estimate=pl.CostEstimate(flops=int(flops), transcendentals=0,
                                      bytes_accessed=int(bytes_accessed)),
    )(x, vis_w, txt, w1, b1, w2, b2, w3, b3)

    return out[:B, :OUTPUT_DIM]


# ---------------- pure-JAX reference for the correctness check ----------------

def reference_forward(params, imgs, texts):
    B, F, V, C, H, W = imgs.shape
    hp = jax.lax.Precision.HIGHEST
    f32 = jnp.float32
    x = imgs.reshape(B * F * V, C * H * W).astype(jnp.bfloat16).astype(f32)
    img = jnp.dot(x, params["vis_w"].astype(f32), precision=hp) + params["vis_b"]
    img = img.reshape(B, F * V * VISUAL_DIM)
    inp = jnp.concatenate([img, texts.astype(f32)], axis=-1)
    h = jnp.maximum(jnp.dot(inp, params["w1"].astype(f32), precision=hp)
                    + params["b1"], 0.0)
    h = jnp.maximum(jnp.dot(h, params["w2"].astype(f32), precision=hp)
                    + params["b2"], 0.0)
    out = jnp.dot(h, params["w3"].astype(f32), precision=hp) + params["b3"]
    return out[:, :OUTPUT_DIM]


if __name__ == "__main__":
    key = jax.random.PRNGKey(0)
    k_params, k_img, k_txt = jax.random.split(key, 3)

    B, F, V, C, H, W = 2, 1, 2, 3, 16, 16  # small example consistent with the module
    imgs = jax.random.normal(k_img, (B, F, V, C, H, W), jnp.float32)
    texts = jax.random.normal(k_txt, (B, LANG_DIM), jnp.float32)

    params = init_params(k_params, C * H * W, view_num=V, frames=F)

    out = mini_bc_pretrain_forward(params, imgs, texts)
    out = jax.block_until_ready(out)
    assert out.shape == (B, OUTPUT_DIM), out.shape

    ref = reference_forward(params, imgs, texts)
    assert jnp.allclose(out, ref, atol=2e-2, rtol=2e-2), (
        float(jnp.max(jnp.abs(out - ref))))

    print("KERNEL_OK")
</pallas_src>

<mosaic_0001>
module attributes {stable_mosaic.version = 11 : i64} {
  func.func @kernel(%arg0: i32, %arg1: memref<16x256xbf16, #tpu.memory_space<vmem>>, %arg2: memref<256x1024xbf16, #tpu.memory_space<vmem>>, %arg3: memref<8x1024xbf16, #tpu.memory_space<vmem>>, %arg4: memref<3072x256xbf16, #tpu.memory_space<vmem>>, %arg5: memref<1x256xf32, #tpu.memory_space<vmem>>, %arg6: memref<256x256xbf16, #tpu.memory_space<vmem>>, %arg7: memref<1x256xf32, #tpu.memory_space<vmem>>, %arg8: memref<256x128xbf16, #tpu.memory_space<vmem>>, %arg9: memref<1x128xf32, #tpu.memory_space<vmem>>, %arg10: memref<8x128xf32, #tpu.memory_space<vmem>>, %arg11: memref<16x1024xf32, #tpu.memory_space<vmem>>) attributes {dimension_semantics = [#tpu.dimension_semantics<arbitrary>], iteration_bounds = array<i64: 3>, scalar_prefetch = 0 : i64, scratch_operands = 1 : i64, tpu.core_type = #tpu.core_type<tc>, window_params = [{transform_indices = @transform_0, window_bounds = array<i64: 16, 256>}, {transform_indices = @transform_1, window_bounds = array<i64: 256, 1024>}, {pipeline_mode = #tpu.pipeline_mode<synchronous>, transform_indices = @transform_2, window_bounds = array<i64: 8, 1024>}, {pipeline_mode = #tpu.pipeline_mode<synchronous>, transform_indices = @transform_3, window_bounds = array<i64: 3072, 256>}, {pipeline_mode = #tpu.pipeline_mode<synchronous>, transform_indices = @transform_4, window_bounds = array<i64: 1, 256>}, {pipeline_mode = #tpu.pipeline_mode<synchronous>, transform_indices = @transform_5, window_bounds = array<i64: 256, 256>}, {pipeline_mode = #tpu.pipeline_mode<synchronous>, transform_indices = @transform_6, window_bounds = array<i64: 1, 256>}, {pipeline_mode = #tpu.pipeline_mode<synchronous>, transform_indices = @transform_7, window_bounds = array<i64: 256, 128>}, {pipeline_mode = #tpu.pipeline_mode<synchronous>, transform_indices = @transform_8, window_bounds = array<i64: 1, 128>}, {pipeline_mode = #tpu.pipeline_mode<synchronous>, transform_indices = @transform_9, window_bounds = array<i64: 8, 128>}]} {
    %c0_i32 = arith.constant 0 : i32
    %0 = arith.cmpi eq, %arg0, %c0_i32 : i32
    %1 = arith.extui %0 : i1 to i32
    %c0_i32_0 = arith.constant 0 : i32
    %2 = arith.cmpi ne, %1, %c0_i32_0 : i32
    scf.if %2 {
      %cst_9 = arith.constant 0.000000e+00 : f32
      %12 = vector.broadcast %cst_9 : f32 to vector<16x1024xf32>
      %c0_10 = arith.constant 0 : index
      %c0_11 = arith.constant 0 : index
      %13 = vector.load %arg11[%c0_10, %c0_11] : memref<16x1024xf32, #tpu.memory_space<vmem>>, vector<16x1024xf32>
      tpu.vector_store %arg11[%c0_10, %c0_11], %12 {strides = array<i32>} : memref<16x1024xf32, #tpu.memory_space<vmem>>, vector<16x1024xf32>,
    } else {
    }
    %c0 = arith.constant 0 : index
    %c0_1 = arith.constant 0 : index
    %3 = vector.load %arg11[%c0, %c0_1] : memref<16x1024xf32, #tpu.memory_space<vmem>>, vector<16x1024xf32>
    %c0_2 = arith.constant 0 : index
    %c0_3 = arith.constant 0 : index
    %4 = vector.load %arg1[%c0_2, %c0_3] : memref<16x256xbf16, #tpu.memory_space<vmem>>, vector<16x256xbf16>
    %c0_4 = arith.constant 0 : index
    %c0_5 = arith.constant 0 : index
    %5 = vector.load %arg2[%c0_4, %c0_5] : memref<256x1024xbf16, #tpu.memory_space<vmem>>, vector<256x1024xbf16>
    %cst = arith.constant dense<0.000000e+00> : vector<16x1024xf32>
    %6 = tpu.matmul %4, %5, %cst {dimension_numbers = #tpu.dot_dimension_numbers<[1], [0], [0], [1], [0, 0, 1, 1], [], []>} : vector<16x256xbf16>, vector<256x1024xbf16>, vector<16x1024xf32> -> vector<16x1024xf32>
    %7 = arith.addf %3, %6 : vector<16x1024xf32>
    %c0_6 = arith.constant 0 : index
    %c0_7 = arith.constant 0 : index
    %8 = vector.load %arg11[%c0_6, %c0_7] : memref<16x1024xf32, #tpu.memory_space<vmem>>, vector<16x1024xf32>
    tpu.vector_store %arg11[%c0_6, %c0_7], %7 {strides = array<i32>} : memref<16x1024xf32, #tpu.memory_space<vmem>>, vector<16x1024xf32>,
    %c2_i32 = arith.constant 2 : i32
    %9 = arith.cmpi eq, %arg0, %c2_i32 : i32
    %10 = arith.extui %9 : i1 to i32
    %c0_i32_8 = arith.constant 0 : i32
    %11 = arith.cmpi ne, %10, %c0_i32_8 : i32
    scf.if %11 {
      %c0_9 = arith.constant 0 : index
      %c0_10 = arith.constant 0 : index
      %12 = vector.load %arg3[%c0_9, %c0_10] : memref<8x1024xbf16, #tpu.memory_space<vmem>>, vector<8x1024xbf16>
      %c2048 = arith.constant 2048 : index
      %c0_11 = arith.constant 0 : index
      %13 = vector.load %arg4[%c2048, %c0_11] : memref<3072x256xbf16, #tpu.memory_space<vmem>>, vector<1024x256xbf16>
      %cst_12 = arith.constant dense<0.000000e+00> : vector<8x256xf32>
      %14 = tpu.matmul %12, %13, %cst_12 {dimension_numbers = #tpu.dot_dimension_numbers<[1], [0], [0], [1], [0, 0, 1, 1], [], []>} : vector<8x1024xbf16>, vector<1024x256xbf16>, vector<8x256xf32> -> vector<8x256xf32>
      %c0_13 = arith.constant 0 : index
      %c0_14 = arith.constant 0 : index
      %15 = vector.load %arg5[%c0_13, %c0_14] : memref<1x256xf32, #tpu.memory_space<vmem>>, vector<1x256xf32>
      %16 = vector.broadcast %15 : vector<1x256xf32> to vector<8x256xf32>
      %17 = arith.addf %14, %16 : vector<8x256xf32>
      %c0_15 = arith.constant 0 : index
      %c0_16 = arith.constant 0 : index
      %18 = vector.load %arg11[%c0_15, %c0_16] : memref<16x1024xf32, #tpu.memory_space<vmem>>, vector<8x1024xf32>
      %19 = arith.truncf %18 : vector<8x1024xf32> to vector<8x1024xbf16>
      %c0_17 = arith.constant 0 : index
      %c0_18 = arith.constant 0 : index
      %20 = vector.load %arg4[%c0_17, %c0_18] : memref<3072x256xbf16, #tpu.memory_space<vmem>>, vector<1024x256xbf16>
      %cst_19 = arith.constant dense<0.000000e+00> : vector<8x256xf32>
      %21 = tpu.matmul %19, %20, %cst_19 {dimension_numbers = #tpu.dot_dimension_numbers<[1], [0], [0], [1], [0, 0, 1, 1], [], []>} : vector<8x1024xbf16>, vector<1024x256xbf16>, vector<8x256xf32> -> vector<8x256xf32>
      %22 = arith.addf %17, %21 : vector<8x256xf32>
      %c8 = arith.constant 8 : index
      %c0_20 = arith.constant 0 : index
      %23 = vector.load %arg11[%c8, %c0_20] : memref<16x1024xf32, #tpu.memory_space<vmem>>, vector<8x1024xf32>
      %24 = arith.truncf %23 : vector<8x1024xf32> to vector<8x1024xbf16>
      %c1024 = arith.constant 1024 : index
      %c0_21 = arith.constant 0 : index
      %25 = vector.load %arg4[%c1024, %c0_21] : memref<3072x256xbf16, #tpu.memory_space<vmem>>, vector<1024x256xbf16>
      %cst_22 = arith.constant dense<0.000000e+00> : vector<8x256xf32>
      %26 = tpu.matmul %24, %25, %cst_22 {dimension_numbers = #tpu.dot_dimension_numbers<[1], [0], [0], [1], [0, 0, 1, 1], [], []>} : vector<8x1024xbf16>, vector<1024x256xbf16>, vector<8x256xf32> -> vector<8x256xf32>
      %27 = arith.addf %22, %26 : vector<8x256xf32>
      %cst_23 = arith.constant 0.000000e+00 : f32
      %28 = vector.broadcast %cst_23 : f32 to vector<8x256xf32>
      %29 = arith.maximumf %27, %28 : vector<8x256xf32>
      %30 = arith.truncf %29 : vector<8x256xf32> to vector<8x256xbf16>
      %c0_24 = arith.constant 0 : index
      %c0_25 = arith.constant 0 : index
      %31 = vector.load %arg6[%c0_24, %c0_25] : memref<256x256xbf16, #tpu.memory_space<vmem>>, vector<256x256xbf16>
      %cst_26 = arith.constant dense<0.000000e+00> : vector<8x256xf32>
      %32 = tpu.matmul %30, %31, %cst_26 {dimension_numbers = #tpu.dot_dimension_numbers<[1], [0], [0], [1], [0, 0, 1, 1], [], []>} : vector<8x256xbf16>, vector<256x256xbf16>, vector<8x256xf32> -> vector<8x256xf32>
      %c0_27 = arith.constant 0 : index
      %c0_28 = arith.constant 0 : index
      %33 = vector.load %arg7[%c0_27, %c0_28] : memref<1x256xf32, #tpu.memory_space<vmem>>, vector<1x256xf32>
      %34 = vector.broadcast %33 : vector<1x256xf32> to vector<8x256xf32>
      %35 = arith.addf %32, %34 : vector<8x256xf32>
      %cst_29 = arith.constant 0.000000e+00 : f32
      %36 = vector.broadcast %cst_29 : f32 to vector<8x256xf32>
      %37 = arith.maximumf %35, %36 : vector<8x256xf32>
      %38 = arith.truncf %37 : vector<8x256xf32> to vector<8x256xbf16>
      %c0_30 = arith.constant 0 : index
      %c0_31 = arith.constant 0 : index
      %39 = vector.load %arg8[%c0_30, %c0_31] : memref<256x128xbf16, #tpu.memory_space<vmem>>, vector<256x128xbf16>
      %cst_32 = arith.constant dense<0.000000e+00> : vector<8x128xf32>
      %40 = tpu.matmul %38, %39, %cst_32 {dimension_numbers = #tpu.dot_dimension_numbers<[1], [0], [0], [1], [0, 0, 1, 1], [], []>} : vector<8x256xbf16>, vector<256x128xbf16>, vector<8x128xf32> -> vector<8x128xf32>
      %c0_33 = arith.constant 0 : index
      %c0_34 = arith.constant 0 : index
      %41 = vector.load %arg9[%c0_33, %c0_34] : memref<1x128xf32, #tpu.memory_space<vmem>>, vector<1x128xf32>
      %42 = vector.broadcast %41 : vector<1x128xf32> to vector<8x128xf32>
      %43 = arith.addf %40, %42 : vector<8x128xf32>
      %c0_35 = arith.constant 0 : index
      %c0_36 = arith.constant 0 : index
      %44 = vector.load %arg10[%c0_35, %c0_36] : memref<8x128xf32, #tpu.memory_space<vmem>>, vector<8x128xf32>
      tpu.vector_store %arg10[%c0_35, %c0_36], %43 {strides = array<i32>} : memref<8x128xf32, #tpu.memory_space<vmem>>, vector<8x128xf32>,
    } else {
    }
    return
  }
  func.func @transform_0(%arg0: i32) -> (i32, i32) {
    %c0_i32 = arith.constant 0 : i32
    %c0_i32_0 = arith.constant 0 : i32
    return %c0_i32, %arg0 : i32, i32
  }
  func.func @transform_1(%arg0: i32) -> (i32, i32) {
    %c0_i32 = arith.constant 0 : i32
    %c0_i32_0 = arith.constant 0 : i32
    return %arg0, %c0_i32 : i32, i32
  }
  func.func @transform_2(%arg0: i32) -> (i32, i32) {
    %c0_i32 = arith.constant 0 : i32
    %c0_i32_0 = arith.constant 0 : i32
    %c0_i32_1 = arith.constant 0 : i32
    return %c0_i32, %c0_i32_0 : i32, i32
  }
  func.func @transform_3(%arg0: i32) -> (i32, i32) {
    %c0_i32 = arith.constant 0 : i32
    %c0_i32_0 = arith.constant 0 : i32
    %c0_i32_1 = arith.constant 0 : i32
    return %c0_i32, %c0_i32_0 : i32, i32
  }
  func.func @transform_4(%arg0: i32) -> (i32, i32) {
    %c0_i32 = arith.constant 0 : i32
    %c0_i32_0 = arith.constant 0 : i32
    %c0_i32_1 = arith.constant 0 : i32
    return %c0_i32, %c0_i32_0 : i32, i32
  }
  func.func @transform_5(%arg0: i32) -> (i32, i32) {
    %c0_i32 = arith.constant 0 : i32
    %c0_i32_0 = arith.constant 0 : i32
    %c0_i32_1 = arith.constant 0 : i32
    return %c0_i32, %c0_i32_0 : i32, i32
  }
  func.func @transform_6(%arg0: i32) -> (i32, i32) {
    %c0_i32 = arith.constant 0 : i32
    %c0_i32_0 = arith.constant 0 : i32
    %c0_i32_1 = arith.constant 0 : i32
    return %c0_i32, %c0_i32_0 : i32, i32
  }
  func.func @transform_7(%arg0: i32) -> (i32, i32) {
    %c0_i32 = arith.constant 0 : i32
    %c0_i32_0 = arith.constant 0 : i32
    %c0_i32_1 = arith.constant 0 : i32
    return %c0_i32, %c0_i32_0 : i32, i32
  }
  func.func @transform_8(%arg0: i32) -> (i32, i32) {
    %c0_i32 = arith.constant 0 : i32
    %c0_i32_0 = arith.constant 0 : i32
    %c0_i32_1 = arith.constant 0 : i32
    return %c0_i32, %c0_i32_0 : i32, i32
  }
  func.func @transform_9(%arg0: i32) -> (i32, i32) {
    %c0_i32 = arith.constant 0 : i32
    %c0_i32_0 = arith.constant 0 : i32
    %c0_i32_1 = arith.constant 0 : i32
    return %c0_i32, %c0_i32_0 : i32, i32
  }
}

</mosaic_0001>

<llo_original>
// kernel: tpu_custom_call.1
$region0: #{tpu_custom_call.1}
  #allocation0 [shape = 'u32[]', space=smem, size = 0x4, offset = 0x4, fixed_abs, tag = 'smem constant byte address 0x4 - core index']
  #allocation1 [shape = 'u32[72,128]{1,0:T(1,128)}', space=vmem, size = 0x9000, scoped, tag = 'internal scratch']
  #allocation2 [shape = 'f32[16,1024]{1,0:T(8,128)}', space=vmem, size = 0x10000, scoped, tag = 'scratch operand']
  %s0 = inlined_call_operand.hbm [shape: bf16[16,768], index: 0, kind: input, shape index: {}]
  %s1 = inlined_call_operand.hbm [shape: bf16[768,1024], index: 1, kind: input, shape index: {}]
  %s2 = inlined_call_operand.hbm [shape: bf16[8,1024], index: 2, kind: input, shape index: {}]
  %s3 = inlined_call_operand.hbm [shape: bf16[3072,256], index: 3, kind: input, shape index: {}]
  %s4 = inlined_call_operand.hbm [shape: f32[1,256], index: 4, kind: input, shape index: {}]
  %s5 = inlined_call_operand.hbm [shape: bf16[256,256], index: 5, kind: input, shape index: {}]
  %s6 = inlined_call_operand.hbm [shape: f32[1,256], index: 6, kind: input, shape index: {}]
  %s7 = inlined_call_operand.hbm [shape: bf16[256,128], index: 7, kind: input, shape index: {}]
  %s8 = inlined_call_operand.hbm [shape: f32[1,128], index: 8, kind: input, shape index: {}]
  %s9 = inlined_call_operand.hbm [shape: f32[8,128], index: 9, kind: output, shape index: {}]
  %s10 = sld [smem:[#allocation0]]
  $region113: #{tpu_custom_call.1} parent=0
    _
  %s12 = ssub.s32 1, %s10
  %s13 = scalar_select 0, %s12, %s10
  $region1: #{tpu_custom_call.1} parent=0
    #allocation3 [shape = 'u8[16384]{0}', space=vmem, size = 0x4000, scoped, tag = 'input window, operand 0']
    #allocation4 [shape = 's32[2]{0}', space=sflag, size = 0x8, scoped, tag = 'scoped memory for tpu_custom_call.1']
    #allocation5 [shape = 's32[2]{0}', space=sflag, size = 0x8, scoped, tag = 'scoped memory for tpu_custom_call.1']
    #allocation6 [shape = 'u8[1048576]{0}', space=vmem, size = 0x100000, scoped, tag = 'input window, operand 1']
    #allocation7 [shape = 's32[2]{0}', space=sflag, size = 0x8, scoped, tag = 'scoped memory for tpu_custom_call.1']
    #allocation8 [shape = 'u8[16384]{0}', space=vmem, size = 0x4000, scoped, tag = 'input window, operand 2, single buffered']
    #allocation9 [shape = 'u8[1572864]{0}', space=vmem, size = 0x180000, scoped, tag = 'input window, operand 3, single buffered']
    #allocation10 [shape = 's32[1]{0}', space=sflag, size = 0x4, scoped, tag = 'scoped memory for tpu_custom_call.1']
    #allocation11 [shape = 'u8[1024]{0}', space=vmem, size = 0x400, scoped, tag = 'input window, operand 4, single buffered']
    #allocation12 [shape = 'u8[131072]{0}', space=vmem, size = 0x20000, scoped, tag = 'input window, operand 5, single buffered']
    #allocation13 [shape = 's32[1]{0}', space=sflag, size = 0x4, scoped, tag = 'scoped memory for tpu_custom_call.1']
    #allocation14 [shape = 'u8[1024]{0}', space=vmem, size = 0x400, scoped, tag = 'input window, operand 6, single buffered']
    #allocation15 [shape = 'u8[65536]{0}', space=vmem, size = 0x10000, scoped, tag = 'input window, operand 7, single buffered']
    #allocation16 [shape = 's32[1]{0}', space=sflag, size = 0x4, scoped, tag = 'scoped memory for tpu_custom_call.1']
    #allocation17 [shape = 'u8[512]{0}', space=vmem, size = 0x400, scoped, tag = 'input window, operand 8, single buffered']
    #allocation18 [shape = 'u8[4096]{0}', space=vmem, size = 0x1000, scoped, tag = 'output window, operand 0, single buffered']
    %14 = vsyncpa [#allocation4], 0
    %s15 = scalar_lea.sflag [#allocation4], 1
    %16 = vsyncpa %s15, 0
    %17 = vsyncpa [#allocation7], 0
    %s18 = scalar_lea.sflag [#allocation7], 1
    %19 = vsyncpa %s18, 0
    %20 = vsyncpa [#allocation10], 0
    %21 = vsyncpa [#allocation13], 0
    %22 = vsyncpa [#allocation16], 0
    %23 = vsyncpa [#allocation5], 0
    loop: start=0, step=1, limit=5
    $region2: #{tpu_custom_call.1} parent=1 // loop_pre_header
      _
    $region3: #{tpu_custom_call.1} parent=1 // loop_header
      %s25 = sphi 0, %s29
      %p26 = scmp.ge.s32.totalorder %s25, 5
      %s35 = sphi 0, %s37
      %s38 = sphi 0, %s35
      %s39 = sphi 0, %s38
      %s55 = sphi 0, %s39
      %s61 = sphi 0, %s63
      %s64 = sphi 0, %s61
      %s65 = sphi 0, %s64
      %s81 = sphi 0, %s65
      %s85 = sphi 0, %s85
      %s87 = sphi 0, %s85
      %s88 = sphi 0, %s87
      %s102 = sphi 0, %s88
      %s106 = sphi 0, %s106
      %s108 = sphi 0, %s106
      %s109 = sphi 0, %s108
      %s123 = sphi 0, %s109
      %s127 = sphi 0, %s127
      %s129 = sphi 0, %s127
      %s130 = sphi 0, %s129
      %s144 = sphi 0, %s130
      %s148 = sphi 0, %s148
      %s150 = sphi 0, %s148
      %s151 = sphi 0, %s150
      %s165 = sphi 0, %s151
      %s169 = sphi 0, %s169
      %s171 = sphi 0, %s169
      %s172 = sphi 0, %s171
      %s186 = sphi 0, %s172
      %s190 = sphi 0, %s190
      %s192 = sphi 0, %s190
      %s193 = sphi 0, %s192
      %s207 = sphi 0, %s193
      %s211 = sphi 0, %s211
      %s213 = sphi 0, %s211
      %s214 = sphi 0, %s213
      %s228 = sphi 0, %s214
      %s232 = sphi 0, %s232
      %s234 = sphi 0, %s232
      %s235 = sphi 0, %s234
      %s249 = sphi 0, %s235
    $region4: #{tpu_custom_call.1} parent=1 // loop_header_branch
      %28 = sbr.rel (%p26) target = $region8
    $region5: #{tpu_custom_call.1} parent=1 // loop_body
      %s30 = ssub.s32 %s25, 1
      %s31 = ssub.s32 %s25, 2
      %s32 = sadd.s32 %s25, 1
      %s33 = ssub.s32 %s25, %s32
      %p34 = scmp.eq.s32.totalorder %s33, 0
      %s36 = sadd.s32 %s35, 1
      %s37 = scalar_select %p34, %s35, %s36
      %p40 = pneg %p34
      %p41 = scmp.eq.s32.totalorder %s25, 2
      %p42 = por %p40, %p41
      %p43 = scmp.ne.s32.totalorder %s35, %s38
      %p44 = scmp.eq.s32.totalorder %s25, 0
      %p45 = por %p43, %p44
      %p46 = scmp.ne.s32.totalorder %s35, %s38
      %p47 = scmp.eq.s32.totalorder %s30, 2
      %p48 = por %p46, %p47
      %p49 = scmp.ne.s32.totalorder %s38, %s39
      %p50 = scmp.eq.s32.totalorder %s30, 0
      %p51 = por %p49, %p50
      %p52 = scmp.ne.s32.totalorder %s38, %s39
      %p53 = scmp.eq.s32.totalorder %s31, 2
      %p54 = por %p52, %p53
      %p56 = scmp.ne.s32.totalorder %s39, %s55
      %p57 = scmp.eq.s32.totalorder %s31, 0
      %p58 = por %p56, %p57
      %s59 = ssub.s32 %s25, %s32
      %p60 = scmp.eq.s32.totalorder %s59, 0
      %s62 = sadd.s32 %s61, 1
      %s63 = scalar_select %p60, %s61, %s62
      %p66 = pneg %p60
      %p67 = scmp.eq.s32.totalorder %s25, 2
      %p68 = por %p66, %p67
      %p69 = scmp.ne.s32.totalorder %s61, %s64
      %p70 = scmp.eq.s32.totalorder %s25, 0
      %p71 = por %p69, %p70
      %p72 = scmp.ne.s32.totalorder %s61, %s64
      %p73 = scmp.eq.s32.totalorder %s30, 2
      %p74 = por %p72, %p73
      %p75 = scmp.ne.s32.totalorder %s64, %s65
      %p76 = scmp.eq.s32.totalorder %s30, 0
      %p77 = por %p75, %p76
      %p78 = scmp.ne.s32.totalorder %s64, %s65
      %p79 = scmp.eq.s32.totalorder %s31, 2
      %p80 = por %p78, %p79
      %p82 = scmp.ne.s32.totalorder %s65, %s81
      %p83 = scmp.eq.s32.totalorder %s31, 0
      %p84 = por %p82, %p83
      %s86 = sadd.s32 %s85, 1
      %p89 = scmp.eq.s32.totalorder %s25, 2
      %p90 = scmp.ne.s32.totalorder %s85, %s87
      %p91 = scmp.eq.s32.totalorder %s25, 0
      %p92 = por %p90, %p91
      %p93 = scmp.ne.s32.totalorder %s85, %s87
      %p94 = scmp.eq.s32.totalorder %s30, 2
      %p95 = por %p93, %p94
      %p96 = scmp.ne.s32.totalorder %s87, %s88
      %p97 = scmp.eq.s32.totalorder %s30, 0
      %p98 = por %p96, %p97
      %p99 = scmp.ne.s32.totalorder %s87, %s88
      %p100 = scmp.eq.s32.totalorder %s31, 2
      %p101 = por %p99, %p100
      %p103 = scmp.ne.s32.totalorder %s88, %s102
      %p104 = scmp.eq.s32.totalorder %s31, 0
      %p105 = por %p103, %p104
      %s107 = sadd.s32 %s106, 1
      %p110 = scmp.eq.s32.totalorder %s25, 2
      %p111 = scmp.ne.s32.totalorder %s106, %s108
      %p112 = scmp.eq.s32.totalorder %s25, 0
      %p113 = por %p111, %p112
      %p114 = scmp.ne.s32.totalorder %s106, %s108
      %p115 = scmp.eq.s32.totalorder %s30, 2
      %p116 = por %p114, %p115
      %p117 = scmp.ne.s32.totalorder %s108, %s109
      %p118 = scmp.eq.s32.totalorder %s30, 0
      %p119 = por %p117, %p118
      %p120 = scmp.ne.s32.totalorder %s108, %s109
      %p121 = scmp.eq.s32.totalorder %s31, 2
      %p122 = por %p120, %p121
      %p124 = scmp.ne.s32.totalorder %s109, %s123
      %p125 = scmp.eq.s32.totalorder %s31, 0
      %p126 = por %p124, %p125
      %s128 = sadd.s32 %s127, 1
      %p131 = scmp.eq.s32.totalorder %s25, 2
      %p132 = scmp.ne.s32.totalorder %s127, %s129
      %p133 = scmp.eq.s32.totalorder %s25, 0
      %p134 = por %p132, %p133
      %p135 = scmp.ne.s32.totalorder %s127, %s129
      %p136 = scmp.eq.s32.totalorder %s30, 2
      %p137 = por %p135, %p136
      %p138 = scmp.ne.s32.totalorder %s129, %s130
      %p139 = scmp.eq.s32.totalorder %s30, 0
      %p140 = por %p138, %p139
      %p141 = scmp.ne.s32.totalorder %s129, %s130
      %p142 = scmp.eq.s32.totalorder %s31, 2
      %p143 = por %p141, %p142
      %p145 = scmp.ne.s32.totalorder %s130, %s144
      %p146 = scmp.eq.s32.totalorder %s31, 0
      %p147 = por %p145, %p146
      %s149 = sadd.s32 %s148, 1
      %p152 = scmp.eq.s32.totalorder %s25, 2
      %p153 = scmp.ne.s32.totalorder %s148, %s150
      %p154 = scmp.eq.s32.totalorder %s25, 0
      %p155 = por %p153, %p154
      %p156 = scmp.ne.s32.totalorder %s148, %s150
      %p157 = scmp.eq.s32.totalorder %s30, 2
      %p158 = por %p156, %p157
      %p159 = scmp.ne.s32.totalorder %s150, %s151
      %p160 = scmp.eq.s32.totalorder %s30, 0
      %p161 = por %p159, %p160
      %p162 = scmp.ne.s32.totalorder %s150, %s151
      %p163 = scmp.eq.s32.totalorder %s31, 2
      %p164 = por %p162, %p163
      %p166 = scmp.ne.s32.totalorder %s151, %s165
      %p167 = scmp.eq.s32.totalorder %s31, 0
      %p168 = por %p166, %p167
      %s170 = sadd.s32 %s169, 1
      %p173 = scmp.eq.s32.totalorder %s25, 2
      %p174 = scmp.ne.s32.totalorder %s169, %s171
      %p175 = scmp.eq.s32.totalorder %s25, 0
      %p176 = por %p174, %p175
      %p177 = scmp.ne.s32.totalorder %s169, %s171
      %p178 = scmp.eq.s32.totalorder %s30, 2
      %p179 = por %p177, %p178
      %p180 = scmp.ne.s32.totalorder %s171, %s172
      %p181 = scmp.eq.s32.totalorder %s30, 0
      %p182 = por %p180, %p181
      %p183 = scmp.ne.s32.totalorder %s171, %s172
      %p184 = scmp.eq.s32.totalorder %s31, 2
      %p185 = por %p183, %p184
      %p187 = scmp.ne.s32.totalorder %s172, %s186
      %p188 = scmp.eq.s32.totalorder %s31, 0
      %p189 = por %p187, %p188
      %s191 = sadd.s32 %s190, 1
      %p194 = scmp.eq.s32.totalorder %s25, 2
      %p195 = scmp.ne.s32.totalorder %s190, %s192
      %p196 = scmp.eq.s32.totalorder %s25, 0
      %p197 = por %p195, %p196
      %p198 = scmp.ne.s32.totalorder %s190, %s192
      %p199 = scmp.eq.s32.totalorder %s30, 2
      %p200 = por %p198, %p199
      %p201 = scmp.ne.s32.totalorder %s192, %s193
      %p202 = scmp.eq.s32.totalorder %s30, 0
      %p203 = por %p201, %p202
      %p204 = scmp.ne.s32.totalorder %s192, %s193
      %p205 = scmp.eq.s32.totalorder %s31, 2
      %p206 = por %p204, %p205
      %p208 = scmp.ne.s32.totalorder %s193, %s207
      %p209 = scmp.eq.s32.totalorder %s31, 0
      %p210 = por %p208, %p209
      %s212 = sadd.s32 %s211, 1
      %p215 = scmp.eq.s32.totalorder %s25, 2
      %p216 = scmp.ne.s32.totalorder %s211, %s213
      %p217 = scmp.eq.s32.totalorder %s25, 0
      %p218 = por %p216, %p217
      %p219 = scmp.ne.s32.totalorder %s211, %s213
      %p220 = scmp.eq.s32.totalorder %s30, 2
      %p221 = por %p219, %p220
      %p222 = scmp.ne.s32.totalorder %s213, %s214
      %p223 = scmp.eq.s32.totalorder %s30, 0
      %p224 = por %p222, %p223
      %p225 = scmp.ne.s32.totalorder %s213, %s214
      %p226 = scmp.eq.s32.totalorder %s31, 2
      %p227 = por %p225, %p226
      %p229 = scmp.ne.s32.totalorder %s214, %s228
      %p230 = scmp.eq.s32.totalorder %s31, 0
      %p231 = por %p229, %p230
      %s233 = sadd.s32 %s232, 1
      %p236 = scmp.eq.s32.totalorder %s25, 2
      %p237 = scmp.ne.s32.totalorder %s232, %s234
      %p238 = scmp.eq.s32.totalorder %s25, 0
      %p239 = por %p237, %p238
      %p240 = scmp.ne.s32.totalorder %s232, %s234
      %p241 = scmp.eq.s32.totalorder %s30, 2
      %p242 = por %p240, %p241
      %p243 = scmp.ne.s32.totalorder %s234, %s235
      %p244 = scmp.eq.s32.totalorder %s30, 0
      %p245 = por %p243, %p244
      %p246 = scmp.ne.s32.totalorder %s234, %s235
      %p247 = scmp.eq.s32.totalorder %s31, 2
      %p248 = por %p246, %p247
      %p250 = scmp.ne.s32.totalorder %s235, %s249
      %p251 = scmp.eq.s32.totalorder %s31, 0
      %p252 = por %p250, %p251
      %p253 = scmp.le.s32.totalorder 1, %s25
      %p254 = scmp.lt.s32.totalorder %s25, 4
      %p255 = pnand %p253, %p254
      %p256 = pneg %p255
      // Predicated region
      $region9: #{tpu_custom_call.1} parent=5 // pred_check
        _
      $region10: #{tpu_custom_call.1} parent=5 // pred_check_branch
        %258 = sbr.rel (%p255) target = $region12
      $region11: #{tpu_custom_call.1} parent=5 // pred_region
        %s259 = ssub.s32 %s25, 1
        // Predicated region
        $region13: #{tpu_custom_call.1} parent=11 // pred_check
          %p260 = pneg %p98
        $region14: #{tpu_custom_call.1} parent=11 // pred_check_branch
          %262 = sbr.rel (%p260) target = $region16
        $region15: #{tpu_custom_call.1} parent=11 // pred_region
          %264 = vsyncadd [#allocation7], 0
          %s266 = sshll.u32 %s2, 4
          %s267 = int_to_ptr.hbm [resolvable:$true] %s266
          %s268 = sshll.u32 [#allocation8], 4
          %s269 = int_to_ptr.vmem [resolvable:$true] %s268
          %271 = dma.hbm_to_vmem [thread:$0]  %s267, 512, %s269, [#allocation7]
        $region16: #{tpu_custom_call.1} parent=11 // pred_fallthru
          _
        // Predicated region
        $region17: #{tpu_custom_call.1} parent=11 // pred_check
          %p272 = pneg %p119
        $region18: #{tpu_custom_call.1} parent=11 // pred_check_branch
          %274 = sbr.rel (%p272) target = $region20
        $region19: #{tpu_custom_call.1} parent=11 // pred_region
          %276 = vsyncadd [#allocation10], 0
          %s277 = sshll.u32 %s3, 4
          %s278 = int_to_ptr.hbm [resolvable:$true] %s277
          %s279 = sshll.u32 [#allocation9], 4
          %s280 = int_to_ptr.vmem [resolvable:$true] %s279
          %285 = dma.hbm_to_vmem [thread:$0]  %s278, 49152, %s280, [#allocation10], 128, 128, 8
        $region20: #{tpu_custom_call.1} parent=11 // pred_fallthru
          _
        // Predicated region
        $region21: #{tpu_custom_call.1} parent=11 // pred_check
          %p286 = pneg %p140
        $region22: #{tpu_custom_call.1} parent=11 // pred_check_branch
          %288 = sbr.rel (%p286) target = $region24
        $region23: #{tpu_custom_call.1} parent=11 // pred_region
          %290 = vsyncadd [#allocation10], 0
          %s292 = sshll.u32 %s4, 4
          %s293 = int_to_ptr.hbm [resolvable:$true] %s292
          %s294 = sshll.u32 [#allocation11], 4
          %s295 = int_to_ptr.vmem [resolvable:$true] %s294
          %297 = dma.hbm_to_vmem [thread:$0]  %s293, 32, %s295, [#allocation10]
        $region24: #{tpu_custom_call.1} parent=11 // pred_fallthru
          _
        // Predicated region
        $region25: #{tpu_custom_call.1} parent=11 // pred_check
          %p298 = pneg %p161
        $region26: #{tpu_custom_call.1} parent=11 // pred_check_branch
          %300 = sbr.rel (%p298) target = $region28
        $region27: #{tpu_custom_call.1} parent=11 // pred_region
          %302 = vsyncadd [#allocation13], 0
          %s303 = sshll.u32 %s5, 4
          %s304 = int_to_ptr.hbm [resolvable:$true] %s303
          %s305 = sshll.u32 [#allocation12], 4
          %s306 = int_to_ptr.vmem [resolvable:$true] %s305
          %311 = dma.hbm_to_vmem [thread:$0]  %s304, 4096, %s306, [#allocation13], 128, 128, 8
        $region28: #{tpu_custom_call.1} parent=11 // pred_fallthru
          _
        // Predicated region
        $region29: #{tpu_custom_call.1} parent=11 // pred_check
          %p312 = pneg %p182
        $region30: #{tpu_custom_call.1} parent=11 // pred_check_branch
          %314 = sbr.rel (%p312) target = $region32
        $region31: #{tpu_custom_call.1} parent=11 // pred_region
          %316 = vsyncadd [#allocation13], 0
          %s318 = sshll.u32 %s6, 4
          %s319 = int_to_ptr.hbm [resolvable:$true] %s318
          %s320 = sshll.u32 [#allocation14], 4
          %s321 = int_to_ptr.vmem [resolvable:$true] %s320
          %323 = dma.hbm_to_vmem [thread:$0]  %s319, 32, %s321, [#allocation13]
        $region32: #{tpu_custom_call.1} parent=11 // pred_fallthru
          _
        // Predicated region
        $region33: #{tpu_custom_call.1} parent=11 // pred_check
          %p324 = pneg %p203
        $region34: #{tpu_custom_call.1} parent=11 // pred_check_branch
          %326 = sbr.rel (%p324) target = $region36
        $region35: #{tpu_custom_call.1} parent=11 // pred_region
          %328 = vsyncadd [#allocation16], 0
          %s329 = sshll.u32 %s7, 4
          %s330 = int_to_ptr.hbm [resolvable:$true] %s329
          %s331 = sshll.u32 [#allocation15], 4
          %s332 = int_to_ptr.vmem [resolvable:$true] %s331
          %337 = dma.hbm_to_vmem [thread:$0]  %s330, 2048, %s332, [#allocation16], 64, 64, 4
        $region36: #{tpu_custom_call.1} parent=11 // pred_fallthru
          _
        // Predicated region
        $region37: #{tpu_custom_call.1} parent=11 // pred_check
          %p338 = pneg %p224
        $region38: #{tpu_custom_call.1} parent=11 // pred_check_branch
          %340 = sbr.rel (%p338) target = $region40
        $region39: #{tpu_custom_call.1} parent=11 // pred_region
          %342 = vsyncadd [#allocation16], 0
          %s344 = sshll.u32 %s8, 4
          %s345 = int_to_ptr.hbm [resolvable:$true] %s344
          %s346 = sshll.u32 [#allocation17], 4
          %s347 = int_to_ptr.vmem [resolvable:$true] %s346
          %349 = dma.hbm_to_vmem [thread:$0]  %s345, 16, %s347, [#allocation16]
        $region40: #{tpu_custom_call.1} parent=11 // pred_fallthru
          _
      $region12: #{tpu_custom_call.1} parent=5 // pred_fallthru
        _
      %p350 = scmp.lt.s32.totalorder %s25, 3
      // Predicated region
      $region41: #{tpu_custom_call.1} parent=5 // pred_check
        %p351 = pneg %p350
      $region42: #{tpu_custom_call.1} parent=5 // pred_check_branch
        %353 = sbr.rel (%p351) target = $region44
      $region43: #{tpu_custom_call.1} parent=5 // pred_region
        // Predicated region
        $region45: #{tpu_custom_call.1} parent=43 // pred_check
          %p354 = pneg %p45
        $region46: #{tpu_custom_call.1} parent=43 // pred_check_branch
          %356 = sbr.rel (%p354) target = $region48
        $region47: #{tpu_custom_call.1} parent=43 // pred_region
          %s357 = sand.u32 %s35, 1
          %s358 = scalar_lea.sflag [#allocation4], %s357
          %s359 = sand.u32 %s35, 1
          %s360 = smul.addr %s359, 16
          %s361 = scalar_lea.vmem [#allocation3], %s360
          %s362 = smul.u32 2, %s25
          %364 = vsyncadd %s358, 0
          %s365 = smul.addr %s362, 4
          %s366 = scalar_lea.hbm %s0, %s365
          %s367 = sshll.u32 %s366, 4
          %s368 = int_to_ptr.hbm [resolvable:$true] %s367
          %s369 = sshll.u32 %s361, 4
          %s370 = int_to_ptr.vmem [resolvable:$true] %s369
          %375 = dma.hbm_to_vmem [thread:$0]  %s368, 256, %s370, %s358, 384, 128, 8
        $region48: #{tpu_custom_call.1} parent=43 // pred_fallthru
          _
        // Predicated region
        $region49: #{tpu_custom_call.1} parent=43 // pred_check
          %p376 = pneg %p71
        $region50: #{tpu_custom_call.1} parent=43 // pred_check_branch
          %378 = sbr.rel (%p376) target = $region52
        $region51: #{tpu_custom_call.1} parent=43 // pred_region
          %s379 = sand.u32 %s25, 1
          %s380 = scalar_lea.sflag [#allocation7], %s379
          %s381 = sand.u32 %s61, 1
          %s382 = smul.addr %s381, 1024
          %s383 = scalar_lea.vmem [#allocation6], %s382
          %s384 = smul.u32 32, %s25
          %386 = vsyncadd %s380, 0
          %s387 = smul.addr %s384, 8
          %s388 = smul.addr %s387, 4
          %s389 = scalar_lea.hbm %s1, %s388
          %s390 = sshll.u32 %s389, 4
          %s391 = int_to_ptr.hbm [resolvable:$true] %s390
          %s392 = sshll.u32 %s383, 4
          %s393 = int_to_ptr.vmem [resolvable:$true] %s392
          %398 = dma.hbm_to_vmem [thread:$0]  %s391, 16384, %s393, %s380, 512, 512, 32
        $region52: #{tpu_custom_call.1} parent=43 // pred_fallthru
          _
      $region44: #{tpu_custom_call.1} parent=5 // pred_fallthru
        _
      %p399 = scmp.le.s32.totalorder 1, %s25
      %p400 = scmp.lt.s32.totalorder %s25, 4
      %p401 = pnand %p399, %p400
      %p402 = pneg %p401
      // Predicated region
      $region53: #{tpu_custom_call.1} parent=5 // pred_check
        _
      $region54: #{tpu_custom_call.1} parent=5 // pred_check_branch
        %404 = sbr.rel (%p401) target = $region56
      $region55: #{tpu_custom_call.1} parent=5 // pred_region
        %s405 = ssub.s32 %s25, 1
        %s406 = sand.u32 %s38, 1
        %s407 = scalar_lea.sflag [#allocation4], %s406
        %s408 = sand.u32 %s38, 1
        %s409 = smul.addr %s408, 16
        %s410 = scalar_lea.vmem [#allocation3], %s409
        // Predicated region
        $region57: #{tpu_custom_call.1} parent=55 // pred_check
          %p411 = pneg %p51
        $region58: #{tpu_custom_call.1} parent=55 // pred_check_branch
          %413 = sbr.rel (%p411) target = $region60
        $region59: #{tpu_custom_call.1} parent=55 // pred_region
          %415 = dma.done %s407, 256
        $region60: #{tpu_custom_call.1} parent=55 // pred_fallthru
          _
        %s416 = sand.u32 %s30, 1
        %s417 = scalar_lea.sflag [#allocation7], %s416
        %s418 = sand.u32 %s64, 1
        %s419 = smul.addr %s418, 1024
        %s420 = scalar_lea.vmem [#allocation6], %s419
        // Predicated region
        $region61: #{tpu_custom_call.1} parent=55 // pred_check
          %p421 = pneg %p77
        $region62: #{tpu_custom_call.1} parent=55 // pred_check_branch
          %423 = sbr.rel (%p421) target = $region64
        $region63: #{tpu_custom_call.1} parent=55 // pred_region
          %425 = dma.done %s417, 16384
        $region64: #{tpu_custom_call.1} parent=55 // pred_fallthru
          _
        // Predicated region
        $region65: #{tpu_custom_call.1} parent=55 // pred_check
          %p426 = pneg %p98
        $region66: #{tpu_custom_call.1} parent=55 // pred_check_branch
          %428 = sbr.rel (%p426) target = $region68
        $region67: #{tpu_custom_call.1} parent=55 // pred_region
          %430 = dma.done [#allocation7], 512
        $region68: #{tpu_custom_call.1} parent=55 // pred_fallthru
          _
        // Predicated region
        $region69: #{tpu_custom_call.1} parent=55 // pred_check
          %p431 = pneg %p119
        $region70: #{tpu_custom_call.1} parent=55 // pred_check_branch
          %433 = sbr.rel (%p431) target = $region72
        $region71: #{tpu_custom_call.1} parent=55 // pred_region
          %435 = dma.done [#allocation10], 49152
        $region72: #{tpu_custom_call.1} parent=55 // pred_fallthru
          _
        // Predicated region
        $region73: #{tpu_custom_call.1} parent=55 // pred_check
          %p436 = pneg %p140
        $region74: #{tpu_custom_call.1} parent=55 // pred_check_branch
          %438 = sbr.rel (%p436) target = $region76
        $region75: #{tpu_custom_call.1} parent=55 // pred_region
          %440 = dma.done [#allocation10], 32
        $region76: #{tpu_custom_call.1} parent=55 // pred_fallthru
          _
        // Predicated region
        $region77: #{tpu_custom_call.1} parent=55 // pred_check
          %p441 = pneg %p161
        $region78: #{tpu_custom_call.1} parent=55 // pred_check_branch
          %443 = sbr.rel (%p441) target = $region80
        $region79: #{tpu_custom_call.1} parent=55 // pred_region
          %445 = dma.done [#allocation13], 4096
        $region80: #{tpu_custom_call.1} parent=55 // pred_fallthru
          _
        // Predicated region
        $region81: #{tpu_custom_call.1} parent=55 // pred_check
          %p446 = pneg %p182
        $region82: #{tpu_custom_call.1} parent=55 // pred_check_branch
          %448 = sbr.rel (%p446) target = $region84
        $region83: #{tpu_custom_call.1} parent=55 // pred_region
          %450 = dma.done [#allocation13], 32
        $region84: #{tpu_custom_call.1} parent=55 // pred_fallthru
          _
        // Predicated region
        $region85: #{tpu_custom_call.1} parent=55 // pred_check
          %p451 = pneg %p203
        $region86: #{tpu_custom_call.1} parent=55 // pred_check_branch
          %453 = sbr.rel (%p451) target = $region88
        $region87: #{tpu_custom_call.1} parent=55 // pred_region
          %455 = dma.done [#allocation16], 2048
        $region88: #{tpu_custom_call.1} parent=55 // pred_fallthru
          _
        // Predicated region
        $region89: #{tpu_custom_call.1} parent=55 // pred_check
          %p456 = pneg %p224
        $region90: #{tpu_custom_call.1} parent=55 // pred_check_branch
          %458 = sbr.rel (%p456) target = $region92
        $region91: #{tpu_custom_call.1} parent=55 // pred_region
          %460 = dma.done [#allocation16], 16
        $region92: #{tpu_custom_call.1} parent=55 // pred_fallthru
          _
        %s461 = sand.u32 %s38, 1
        %s462 = scalar_lea.sflag [#allocation4], %s461
        %s463 = sand.u32 %s38, 1
        %s464 = smul.addr %s463, 16
        %s465 = scalar_lea.vmem [#allocation3], %s464
        %p466 = pneg %p51
        %p467 = pneg %p48
        %s468 = sand.u32 %s30, 1
        %s469 = scalar_lea.sflag [#allocation7], %s468
        %s470 = sand.u32 %s64, 1
        %s471 = smul.addr %s470, 1024
        %s472 = scalar_lea.vmem [#allocation6], %s471
        %p473 = pneg %p77
        %p474 = pneg %p74
        %p475 = pneg %p98
        %p476 = pneg %p95
        %p477 = pneg %p119
        %p478 = pneg %p116
        %p479 = pneg %p140
        %p480 = pneg %p137
        %p481 = pneg %p161
        %p482 = pneg %p158
        %p483 = pneg %p182
        %p484 = pneg %p179
        %p485 = pneg %p203
        %p486 = pneg %p200
        %p487 = pneg %p224
        %p488 = pneg %p221
        %p489 = pneg %p245
        %p490 = pneg %p242
        %s491 = smul.u32 2, %s30
        %s492 = smul.u32 32, %s30
        %p493 = scmp.eq.s32.totalorder %s30, 0
        // Predicated region
        $region93: #{tpu_custom_call.1} parent=55 // pred_check
          %p494 = pneg %p493
        $region94: #{tpu_custom_call.1} parent=55 // pred_check_branch
          %496 = sbr.rel (%p494) target = $region96
        $region95: #{tpu_custom_call.1} parent=55 // pred_region
          %497 = vst [vmem:[#allocation2] sm:$0xff] 0.0
          %498 = vst [vmem:[#allocation2 + $0x8] sm:$0xff] 0.0
          %499 = vst [vmem:[#allocation2 + $0x10] sm:$0xff] 0.0
          %500 = vst [vmem:[#allocation2 + $0x18] sm:$0xff] 0.0
          %501 = vst [vmem:[#allocation2 + $0x20] sm:$0xff] 0.0
          %502 = vst [vmem:[#allocation2 + $0x28] sm:$0xff] 0.0
          %503 = vst [vmem:[#allocation2 + $0x30] sm:$0xff] 0.0
          %504 = vst [vmem:[#allocation2 + $0x38] sm:$0xff] 0.0
          %505 = vst [vmem:[#allocation2 + $0x40] sm:$0xff] 0.0
          %506 = vst [vmem:[#allocation2 + $0x48] sm:$0xff] 0.0
          %507 = vst [vmem:[#allocation2 + $0x50] sm:$0xff] 0.0
          %508 = vst [vmem:[#allocation2 + $0x58] sm:$0xff] 0.0
          %509 = vst [vmem:[#allocation2 + $0x60] sm:$0xff] 0.0
          %510 = vst [vmem:[#allocation2 + $0x68] sm:$0xff] 0.0
          %511 = vst [vmem:[#allocation2 + $0x70] sm:$0xff] 0.0
          %512 = vst [vmem:[#allocation2 + $0x78] sm:$0xff] 0.0
        $region96: #{tpu_custom_call.1} parent=55 // pred_fallthru
          _
        %v513 = vld [vmem:[#allocation2] sm:$0xff]
        %v514 = vld [vmem:[#allocation2 + $0x8] sm:$0xff]
        %v515 = vld [vmem:[#allocation2 + $0x10] sm:$0xff]
        %v516 = vld [vmem:[#allocation2 + $0x18] sm:$0xff]
        %v517 = vld [vmem:[#allocation2 + $0x20] sm:$0xff]
        %v518 = vld [vmem:[#allocation2 + $0x28] sm:$0xff]
        %v519 = vld [vmem:[#allocation2 + $0x30] sm:$0xff]
        %v520 = vld [vmem:[#allocation2 + $0x38] sm:$0xff]
        %v521 = vld [vmem:[#allocation2 + $0x40] sm:$0xff]
        %v522 = vld [vmem:[#allocation2 + $0x48] sm:$0xff]
        %v523 = vld [vmem:[#allocation2 + $0x50] sm:$0xff]
        %v524 = vld [vmem:[#allocation2 + $0x58] sm:$0xff]
        %v525 = vld [vmem:[#allocation2 + $0x60] sm:$0xff]
        %v526 = vld [vmem:[#allocation2 + $0x68] sm:$0xff]
        %v527 = vld [vmem:[#allocation2 + $0x70] sm:$0xff]
        %v528 = vld [vmem:[#allocation2 + $0x78] sm:$0xff]
        %v529 = vld [vmem:[%s410] sm:$0xff]
        %v530 = vld [vmem:[%s410 + $0x8] sm:$0xff]
        %v531 = vld [vmem:[%s420] sm:$0xff]
        %v532 = vld [vmem:[%s420 + $0x8] sm:$0xff]
        %v533 = vld [vmem:[%s420 + $0x10] sm:$0xff]
        %v534 = vld [vmem:[%s420 + $0x18] sm:$0xff]
        %v535 = vld [vmem:[%s420 + $0x20] sm:$0xff]
        %v536 = vld [vmem:[%s420 + $0x28] sm:$0xff]
        %v537 = vld [vmem:[%s420 + $0x30] sm:$0xff]
        %v538 = vld [vmem:[%s420 + $0x38] sm:$0xff]
        %v539 = vld [vmem:[%s420 + $0x40] sm:$0xff]
        %v540 = vld [vmem:[%s420 + $0x48] sm:$0xff]
        %v541 = vld [vmem:[%s420 + $0x50] sm:$0xff]
        %v542 = vld [vmem:[%s420 + $0x58] sm:$0xff]
        %v543 = vld [vmem:[%s420 + $0x60] sm:$0xff]
        %v544 = vld [vmem:[%s420 + $0x68] sm:$0xff]
        %v545 = vld [vmem:[%s420 + $0x70] sm:$0xff]
        %v546 = vld [vmem:[%s420 + $0x78] sm:$0xff]
        %v547 = vld [vmem:[%s420 + $0x80] sm:$0xff]
        %v548 = vld [vmem:[%s420 + $0x88] sm:$0xff]
        %v549 = vld [vmem:[%s420 + $0x90] sm:$0xff]
        %v550 = vld [vmem:[%s420 + $0x98] sm:$0xff]
        %v551 = vld [vmem:[%s420 + $0xa0] sm:$0xff]
        %v552 = vld [vmem:[%s420 + $0xa8] sm:$0xff]
        %v553 = vld [vmem:[%s420 + $0xb0] sm:$0xff]
        %v554 = vld [vmem:[%s420 + $0xb8] sm:$0xff]
        %v555 = vld [vmem:[%s420 + $0xc0] sm:$0xff]
        %v556 = vld [vmem:[%s420 + $0xc8] sm:$0xff]
        %v557 = vld [vmem:[%s420 + $0xd0] sm:$0xff]
        %v558 = vld [vmem:[%s420 + $0xd8] sm:$0xff]
        %v559 = vld [vmem:[%s420 + $0xe0] sm:$0xff]
        %v560 = vld [vmem:[%s420 + $0xe8] sm:$0xff]
        %v561 = vld [vmem:[%s420 + $0xf0] sm:$0xff]
        %v562 = vld [vmem:[%s420 + $0xf8] sm:$0xff]
        %v563 = vld [vmem:[%s420 + $0x100] sm:$0xff]
        %v564 = vld [vmem:[%s420 + $0x108] sm:$0xff]
        %v565 = vld [vmem:[%s420 + $0x110] sm:$0xff]
        %v566 = vld [vmem:[%s420 + $0x118] sm:$0xff]
        %v567 = vld [vmem:[%s420 + $0x120] sm:$0xff]
        %v568 = vld [vmem:[%s420 + $0x128] sm:$0xff]
        %v569 = vld [vmem:[%s420 + $0x130] sm:$0xff]
        %v570 = vld [vmem:[%s420 + $0x138] sm:$0xff]
        %v571 = vld [vmem:[%s420 + $0x140] sm:$0xff]
        %v572 = vld [vmem:[%s420 + $0x148] sm:$0xff]
        %v573 = vld [vmem:[%s420 + $0x150] sm:$0xff]
        %v574 = vld [vmem:[%s420 + $0x158] sm:$0xff]
        %v575 = vld [vmem:[%s420 + $0x160] sm:$0xff]
        %v576 = vld [vmem:[%s420 + $0x168] sm:$0xff]
        %v577 = vld [vmem:[%s420 + $0x170] sm:$0xff]
        %v578 = vld [vmem:[%s420 + $0x178] sm:$0xff]
        %v579 = vld [vmem:[%s420 + $0x180] sm:$0xff]
        %v580 = vld [vmem:[%s420 + $0x188] sm:$0xff]
        %v581 = vld [vmem:[%s420 + $0x190] sm:$0xff]
        %v582 = vld [vmem:[%s420 + $0x198] sm:$0xff]
        %v583 = vld [vmem:[%s420 + $0x1a0] sm:$0xff]
        %v584 = vld [vmem:[%s420 + $0x1a8] sm:$0xff]
        %v585 = vld [vmem:[%s420 + $0x1b0] sm:$0xff]
        %v586 = vld [vmem:[%s420 + $0x1b8] sm:$0xff]
        %v587 = vld [vmem:[%s420 + $0x1c0] sm:$0xff]
        %v588 = vld [vmem:[%s420 + $0x1c8] sm:$0xff]
        %v589 = vld [vmem:[%s420 + $0x1d0] sm:$0xff]
        %v590 = vld [vmem:[%s420 + $0x1d8] sm:$0xff]
        %v591 = vld [vmem:[%s420 + $0x1e0] sm:$0xff]
        %v592 = vld [vmem:[%s420 + $0x1e8] sm:$0xff]
        %v593 = vld [vmem:[%s420 + $0x1f0] sm:$0xff]
        %v594 = vld [vmem:[%s420 + $0x1f8] sm:$0xff]
        %v595 = vld [vmem:[%s420 + $0x200] sm:$0xff]
        %v596 = vld [vmem:[%s420 + $0x208] sm:$0xff]
        %v597 = vld [vmem:[%s420 + $0x210] sm:$0xff]
        %v598 = vld [vmem:[%s420 + $0x218] sm:$0xff]
        %v599 = vld [vmem:[%s420 + $0x220] sm:$0xff]
        %v600 = vld [vmem:[%s420 + $0x228] sm:$0xff]
        %v601 = vld [vmem:[%s420 + $0x230] sm:$0xff]
        %v602 = vld [vmem:[%s420 + $0x238] sm:$0xff]
        %v603 = vld [vmem:[%s420 + $0x240] sm:$0xff]
        %v604 = vld [vmem:[%s420 + $0x248] sm:$0xff]
        %v605 = vld [vmem:[%s420 + $0x250] sm:$0xff]
        %v606 = vld [vmem:[%s420 + $0x258] sm:$0xff]
        %v607 = vld [vmem:[%s420 + $0x260] sm:$0xff]
        %v608 = vld [vmem:[%s420 + $0x268] sm:$0xff]
        %v609 = vld [vmem:[%s420 + $0x270] sm:$0xff]
        %v610 = vld [vmem:[%s420 + $0x278] sm:$0xff]
        %v611 = vld [vmem:[%s420 + $0x280] sm:$0xff]
        %v612 = vld [vmem:[%s420 + $0x288] sm:$0xff]
        %v613 = vld [vmem:[%s420 + $0x290] sm:$0xff]
        %v614 = vld [vmem:[%s420 + $0x298] sm:$0xff]
        %v615 = vld [vmem:[%s420 + $0x2a0] sm:$0xff]
        %v616 = vld [vmem:[%s420 + $0x2a8] sm:$0xff]
        %v617 = vld [vmem:[%s420 + $0x2b0] sm:$0xff]
        %v618 = vld [vmem:[%s420 + $0x2b8] sm:$0xff]
        %v619 = vld [vmem:[%s420 + $0x2c0] sm:$0xff]
        %v620 = vld [vmem:[%s420 + $0x2c8] sm:$0xff]
        %v621 = vld [vmem:[%s420 + $0x2d0] sm:$0xff]
        %v622 = vld [vmem:[%s420 + $0x2d8] sm:$0xff]
        %v623 = vld [vmem:[%s420 + $0x2e0] sm:$0xff]
        %v624 = vld [vmem:[%s420 + $0x2e8] sm:$0xff]
        %v625 = vld [vmem:[%s420 + $0x2f0] sm:$0xff]
        %v626 = vld [vmem:[%s420 + $0x2f8] sm:$0xff]
        %v627 = vld [vmem:[%s420 + $0x300] sm:$0xff]
        %v628 = vld [vmem:[%s420 + $0x308] sm:$0xff]
        %v629 = vld [vmem:[%s420 + $0x310] sm:$0xff]
        %v630 = vld [vmem:[%s420 + $0x318] sm:$0xff]
        %v631 = vld [vmem:[%s420 + $0x320] sm:$0xff]
        %v632 = vld [vmem:[%s420 + $0x328] sm:$0xff]
        %v633 = vld [vmem:[%s420 + $0x330] sm:$0xff]
        %v634 = vld [vmem:[%s420 + $0x338] sm:$0xff]
        %v635 = vld [vmem:[%s420 + $0x340] sm:$0xff]
        %v636 = vld [vmem:[%s420 + $0x348] sm:$0xff]
        %v637 = vld [vmem:[%s420 + $0x350] sm:$0xff]
        %v638 = vld [vmem:[%s420 + $0x358] sm:$0xff]
        %v639 = vld [vmem:[%s420 + $0x360] sm:$0xff]
        %v640 = vld [vmem:[%s420 + $0x368] sm:$0xff]
        %v641 = vld [vmem:[%s420 + $0x370] sm:$0xff]
        %v642 = vld [vmem:[%s420 + $0x378] sm:$0xff]
        %v643 = vld [vmem:[%s420 + $0x380] sm:$0xff]
        %v644 = vld [vmem:[%s420 + $0x388] sm:$0xff]
        %v645 = vld [vmem:[%s420 + $0x390] sm:$0xff]
        %v646 = vld [vmem:[%s420 + $0x398] sm:$0xff]
        %v647 = vld [vmem:[%s420 + $0x3a0] sm:$0xff]
        %v648 = vld [vmem:[%s420 + $0x3a8] sm:$0xff]
        %v649 = vld [vmem:[%s420 + $0x3b0] sm:$0xff]
        %v650 = vld [vmem:[%s420 + $0x3b8] sm:$0xff]
        %v651 = vld [vmem:[%s420 + $0x3c0] sm:$0xff]
        %v652 = vld [vmem:[%s420 + $0x3c8] sm:$0xff]
        %v653 = vld [vmem:[%s420 + $0x3d0] sm:$0xff]
        %v654 = vld [vmem:[%s420 + $0x3d8] sm:$0xff]
        %v655 = vld [vmem:[%s420 + $0x3e0] sm:$0xff]
        %v656 = vld [vmem:[%s420 + $0x3e8] sm:$0xff]
        %v657 = vld [vmem:[%s420 + $0x3f0] sm:$0xff]
        %v658 = vld [vmem:[%s420 + $0x3f8] sm:$0xff]
        %v661 = vunpack.c.l.b16 %v529
        %v662 = vunpack.c.h.b16 %v529
        %v663 = vunpack.c.l.b16 %v530
        %v664 = vunpack.c.h.b16 %v530
        %v665 = vpack.c.b16 %v663, %v661
        %v666 = vpack.c.b16 %v664, %v662
        %v797 = vunpack.c.l.b16 %v531
        %v798 = vunpack.c.h.b16 %v531
        %v799 = vunpack.c.l.b16 %v532
        %v800 = vunpack.c.h.b16 %v532
        %v801 = vunpack.c.l.b16 %v533
        %v802 = vunpack.c.h.b16 %v533
        %v803 = vunpack.c.l.b16 %v534
        %v804 = vunpack.c.h.b16 %v534
        %v805 = vunpack.c.l.b16 %v535
        %v806 = vunpack.c.h.b16 %v535
        %v807 = vunpack.c.l.b16 %v536
        %v808 = vunpack.c.h.b16 %v536
        %v809 = vunpack.c.l.b16 %v537
        %v810 = vunpack.c.h.b16 %v537
        %v811 = vunpack.c.l.b16 %v538
        %v812 = vunpack.c.h.b16 %v538
        %v813 = vunpack.c.l.b16 %v539
        %v814 = vunpack.c.h.b16 %v539
        %v815 = vunpack.c.l.b16 %v540
        %v816 = vunpack.c.h.b16 %v540
        %v817 = vunpack.c.l.b16 %v541
        %v818 = vunpack.c.h.b16 %v541
        %v819 = vunpack.c.l.b16 %v542
        %v820 = vunpack.c.h.b16 %v542
        %v821 = vunpack.c.l.b16 %v543
        %v822 = vunpack.c.h.b16 %v543
        %v823 = vunpack.c.l.b16 %v544
        %v824 = vunpack.c.h.b16 %v544
        %v825 = vunpack.c.l.b16 %v545
        %v826 = vunpack.c.h.b16 %v545
        %v827 = vunpack.c.l.b16 %v546
        %v828 = vunpack.c.h.b16 %v546
        %v829 = vunpack.c.l.b16 %v547
        %v830 = vunpack.c.h.b16 %v547
        %v831 = vunpack.c.l.b16 %v548
        %v832 = vunpack.c.h.b16 %v548
        %v833 = vunpack.c.l.b16 %v549
        %v834 = vunpack.c.h.b16 %v549
        %v835 = vunpack.c.l.b16 %v550
        %v836 = vunpack.c.h.b16 %v550
        %v837 = vunpack.c.l.b16 %v551
        %v838 = vunpack.c.h.b16 %v551
        %v839 = vunpack.c.l.b16 %v552
        %v840 = vunpack.c.h.b16 %v552
        %v841 = vunpack.c.l.b16 %v553
        %v842 = vunpack.c.h.b16 %v553
        %v843 = vunpack.c.l.b16 %v554
        %v844 = vunpack.c.h.b16 %v554
        %v845 = vunpack.c.l.b16 %v555
        %v846 = vunpack.c.h.b16 %v555
        %v847 = vunpack.c.l.b16 %v556
        %v848 = vunpack.c.h.b16 %v556
        %v849 = vunpack.c.l.b16 %v557
        %v850 = vunpack.c.h.b16 %v557
        %v851 = vunpack.c.l.b16 %v558
        %v852 = vunpack.c.h.b16 %v558
        %v853 = vunpack.c.l.b16 %v559
        %v854 = vunpack.c.h.b16 %v559
        %v855 = vunpack.c.l.b16 %v560
        %v856 = vunpack.c.h.b16 %v560
        %v857 = vunpack.c.l.b16 %v561
        %v858 = vunpack.c.h.b16 %v561
        %v859 = vunpack.c.l.b16 %v562
        %v860 = vunpack.c.h.b16 %v562
        %v861 = vunpack.c.l.b16 %v563
        %v862 = vunpack.c.h.b16 %v563
        %v863 = vunpack.c.l.b16 %v564
        %v864 = vunpack.c.h.b16 %v564
        %v865 = vunpack.c.l.b16 %v565
        %v866 = vunpack.c.h.b16 %v565
        %v867 = vunpack.c.l.b16 %v566
        %v868 = vunpack.c.h.b16 %v566
        %v869 = vunpack.c.l.b16 %v567
        %v870 = vunpack.c.h.b16 %v567
        %v871 = vunpack.c.l.b16 %v568
        %v872 = vunpack.c.h.b16 %v568
        %v873 = vunpack.c.l.b16 %v569
        %v874 = vunpack.c.h.b16 %v569
        %v875 = vunpack.c.l.b16 %v570
        %v876 = vunpack.c.h.b16 %v570
        %v877 = vunpack.c.l.b16 %v571
        %v878 = vunpack.c.h.b16 %v571
        %v879 = vunpack.c.l.b16 %v572
        %v880 = vunpack.c.h.b16 %v572
        %v881 = vunpack.c.l.b16 %v573
        %v882 = vunpack.c.h.b16 %v573
        %v883 = vunpack.c.l.b16 %v574
        %v884 = vunpack.c.h.b16 %v574
        %v885 = vunpack.c.l.b16 %v575
        %v886 = vunpack.c.h.b16 %v575
        %v887 = vunpack.c.l.b16 %v576
        %v888 = vunpack.c.h.b16 %v576
        %v889 = vunpack.c.l.b16 %v577
        %v890 = vunpack.c.h.b16 %v577
        %v891 = vunpack.c.l.b16 %v578
        %v892 = vunpack.c.h.b16 %v578
        %v893 = vunpack.c.l.b16 %v579
        %v894 = vunpack.c.h.b16 %v579
        %v895 = vunpack.c.l.b16 %v580
        %v896 = vunpack.c.h.b16 %v580
        %v897 = vunpack.c.l.b16 %v581
        %v898 = vunpack.c.h.b16 %v581
        %v899 = vunpack.c.l.b16 %v582
        %v900 = vunpack.c.h.b16 %v582
        %v901 = vunpack.c.l.b16 %v583
        %v902 = vunpack.c.h.b16 %v583
        %v903 = vunpack.c.l.b16 %v584
        %v904 = vunpack.c.h.b16 %v584
        %v905 = vunpack.c.l.b16 %v585
        %v906 = vunpack.c.h.b16 %v585
        %v907 = vunpack.c.l.b16 %v586
        %v908 = vunpack.c.h.b16 %v586
        %v909 = vunpack.c.l.b16 %v587
        %v910 = vunpack.c.h.b16 %v587
        %v911 = vunpack.c.l.b16 %v588
        %v912 = vunpack.c.h.b16 %v588
        %v913 = vunpack.c.l.b16 %v589
        %v914 = vunpack.c.h.b16 %v589
        %v915 = vunpack.c.l.b16 %v590
        %v916 = vunpack.c.h.b16 %v590
        %v917 = vunpack.c.l.b16 %v591
        %v918 = vunpack.c.h.b16 %v591
        %v919 = vunpack.c.l.b16 %v592
        %v920 = vunpack.c.h.b16 %v592
        %v921 = vunpack.c.l.b16 %v593
        %v922 = vunpack.c.h.b16 %v593
        %v923 = vunpack.c.l.b16 %v594
        %v924 = vunpack.c.h.b16 %v594
        %v925 = vunpack.c.l.b16 %v595
        %v926 = vunpack.c.h.b16 %v595
        %v927 = vunpack.c.l.b16 %v596
        %v928 = vunpack.c.h.b16 %v596
        %v929 = vunpack.c.l.b16 %v597
        %v930 = vunpack.c.h.b16 %v597
        %v931 = vunpack.c.l.b16 %v598
        %v932 = vunpack.c.h.b16 %v598
        %v933 = vunpack.c.l.b16 %v599
        %v934 = vunpack.c.h.b16 %v599
        %v935 = vunpack.c.l.b16 %v600
        %v936 = vunpack.c.h.b16 %v600
        %v937 = vunpack.c.l.b16 %v601
        %v938 = vunpack.c.h.b16 %v601
        %v939 = vunpack.c.l.b16 %v602
        %v940 = vunpack.c.h.b16 %v602
        %v941 = vunpack.c.l.b16 %v603
        %v942 = vunpack.c.h.b16 %v603
        %v943 = vunpack.c.l.b16 %v604
        %v944 = vunpack.c.h.b16 %v604
        %v945 = vunpack.c.l.b16 %v605
        %v946 = vunpack.c.h.b16 %v605
        %v947 = vunpack.c.l.b16 %v606
        %v948 = vunpack.c.h.b16 %v606
        %v949 = vunpack.c.l.b16 %v607
        %v950 = vunpack.c.h.b16 %v607
        %v951 = vunpack.c.l.b16 %v608
        %v952 = vunpack.c.h.b16 %v608
        %v953 = vunpack.c.l.b16 %v609
        %v954 = vunpack.c.h.b16 %v609
        %v955 = vunpack.c.l.b16 %v610
        %v956 = vunpack.c.h.b16 %v610
        %v957 = vunpack.c.l.b16 %v611
        %v958 = vunpack.c.h.b16 %v611
        %v959 = vunpack.c.l.b16 %v612
        %v960 = vunpack.c.h.b16 %v612
        %v961 = vunpack.c.l.b16 %v613
        %v962 = vunpack.c.h.b16 %v613
        %v963 = vunpack.c.l.b16 %v614
        %v964 = vunpack.c.h.b16 %v614
        %v965 = vunpack.c.l.b16 %v615
        %v966 = vunpack.c.h.b16 %v615
        %v967 = vunpack.c.l.b16 %v616
        %v968 = vunpack.c.h.b16 %v616
        %v969 = vunpack.c.l.b16 %v617
        %v970 = vunpack.c.h.b16 %v617
        %v971 = vunpack.c.l.b16 %v618
        %v972 = vunpack.c.h.b16 %v618
        %v973 = vunpack.c.l.b16 %v619
        %v974 = vunpack.c.h.b16 %v619
        %v975 = vunpack.c.l.b16 %v620
        %v976 = vunpack.c.h.b16 %v620
        %v977 = vunpack.c.l.b16 %v621
        %v978 = vunpack.c.h.b16 %v621
        %v979 = vunpack.c.l.b16 %v622
        %v980 = vunpack.c.h.b16 %v622
        %v981 = vunpack.c.l.b16 %v623
        %v982 = vunpack.c.h.b16 %v623
        %v983 = vunpack.c.l.b16 %v624
        %v984 = vunpack.c.h.b16 %v624
        %v985 = vunpack.c.l.b16 %v625
        %v986 = vunpack.c.h.b16 %v625
        %v987 = vunpack.c.l.b16 %v626
        %v988 = vunpack.c.h.b16 %v626
        %v989 = vunpack.c.l.b16 %v627
        %v990 = vunpack.c.h.b16 %v627
        %v991 = vunpack.c.l.b16 %v628
        %v992 = vunpack.c.h.b16 %v628
        %v993 = vunpack.c.l.b16 %v629
        %v994 = vunpack.c.h.b16 %v629
        %v995 = vunpack.c.l.b16 %v630
        %v996 = vunpack.c.h.b16 %v630
        %v997 = vunpack.c.l.b16 %v631
        %v998 = vunpack.c.h.b16 %v631
        %v999 = vunpack.c.l.b16 %v632
        %v1000 = vunpack.c.h.b16 %v632
        %v1001 = vunpack.c.l.b16 %v633
        %v1002 = vunpack.c.h.b16 %v633
        %v1003 = vunpack.c.l.b16 %v634
        %v1004 = vunpack.c.h.b16 %v634
        %v1005 = vunpack.c.l.b16 %v635
        %v1006 = vunpack.c.h.b16 %v635
        %v1007 = vunpack.c.l.b16 %v636
        %v1008 = vunpack.c.h.b16 %v636
        %v1009 = vunpack.c.l.b16 %v637
        %v1010 = vunpack.c.h.b16 %v637
        %v1011 = vunpack.c.l.b16 %v638
        %v1012 = vunpack.c.h.b16 %v638
        %v1013 = vunpack.c.l.b16 %v639
        %v1014 = vunpack.c.h.b16 %v639
        %v1015 = vunpack.c.l.b16 %v640
        %v1016 = vunpack.c.h.b16 %v640
        %v1017 = vunpack.c.l.b16 %v641
        %v1018 = vunpack.c.h.b16 %v641
        %v1019 = vunpack.c.l.b16 %v642
        %v1020 = vunpack.c.h.b16 %v642
        %v1021 = vunpack.c.l.b16 %v643
        %v1022 = vunpack.c.h.b16 %v643
        %v1023 = vunpack.c.l.b16 %v644
        %v1024 = vunpack.c.h.b16 %v644
        %v1025 = vunpack.c.l.b16 %v645
        %v1026 = vunpack.c.h.b16 %v645
        %v1027 = vunpack.c.l.b16 %v646
        %v1028 = vunpack.c.h.b16 %v646
        %v1029 = vunpack.c.l.b16 %v647
        %v1030 = vunpack.c.h.b16 %v647
        %v1031 = vunpack.c.l.b16 %v648
        %v1032 = vunpack.c.h.b16 %v648
        %v1033 = vunpack.c.l.b16 %v649
        %v1034 = vunpack.c.h.b16 %v649
        %v1035 = vunpack.c.l.b16 %v650
        %v1036 = vunpack.c.h.b16 %v650
        %v1037 = vunpack.c.l.b16 %v651
        %v1038 = vunpack.c.h.b16 %v651
        %v1039 = vunpack.c.l.b16 %v652
        %v1040 = vunpack.c.h.b16 %v652
        %v1041 = vunpack.c.l.b16 %v653
        %v1042 = vunpack.c.h.b16 %v653
        %v1043 = vunpack.c.l.b16 %v654
        %v1044 = vunpack.c.h.b16 %v654
        %v1045 = vunpack.c.l.b16 %v655
        %v1046 = vunpack.c.h.b16 %v655
        %v1047 = vunpack.c.l.b16 %v656
        %v1048 = vunpack.c.h.b16 %v656
        %v1049 = vunpack.c.l.b16 %v657
        %v1050 = vunpack.c.h.b16 %v657
        %v1051 = vunpack.c.l.b16 %v658
        %v1052 = vunpack.c.h.b16 %v658
        %v1053 = vpack.c.b16 %v805, %v797
        %v1054 = vpack.c.b16 %v806, %v798
        %v1055 = vpack.c.b16 %v807, %v799
        %v1056 = vpack.c.b16 %v808, %v800
        %v1057 = vpack.c.b16 %v809, %v801
        %v1058 = vpack.c.b16 %v810, %v802
        %v1059 = vpack.c.b16 %v811, %v803
        %v1060 = vpack.c.b16 %v812, %v804
        %v1061 = vpack.c.b16 %v821, %v813
        %v1062 = vpack.c.b16 %v822, %v814
        %v1063 = vpack.c.b16 %v823, %v815
        %v1064 = vpack.c.b16 %v824, %v816
        %v1065 = vpack.c.b16 %v825, %v817
        %v1066 = vpack.c.b16 %v826, %v818
        %v1067 = vpack.c.b16 %v827, %v819
        %v1068 = vpack.c.b16 %v828, %v820
        %v1069 = vpack.c.b16 %v837, %v829
        %v1070 = vpack.c.b16 %v838, %v830
        %v1071 = vpack.c.b16 %v839, %v831
        %v1072 = vpack.c.b16 %v840, %v832
        %v1073 = vpack.c.b16 %v841, %v833
        %v1074 = vpack.c.b16 %v842, %v834
        %v1075 = vpack.c.b16 %v843, %v835
        %v1076 = vpack.c.b16 %v844, %v836
        %v1077 = vpack.c.b16 %v853, %v845
        %v1078 = vpack.c.b16 %v854, %v846
        %v1079 = vpack.c.b16 %v855, %v847
        %v1080 = vpack.c.b16 %v856, %v848
        %v1081 = vpack.c.b16 %v857, %v849
        %v1082 = vpack.c.b16 %v858, %v850
        %v1083 = vpack.c.b16 %v859, %v851
        %v1084 = vpack.c.b16 %v860, %v852
        %v1085 = vpack.c.b16 %v869, %v861
        %v1086 = vpack.c.b16 %v870, %v862
        %v1087 = vpack.c.b16 %v871, %v863
        %v1088 = vpack.c.b16 %v872, %v864
        %v1089 = vpack.c.b16 %v873, %v865
        %v1090 = vpack.c.b16 %v874, %v866
        %v1091 = vpack.c.b16 %v875, %v867
        %v1092 = vpack.c.b16 %v876, %v868
        %v1093 = vpack.c.b16 %v885, %v877
        %v1094 = vpack.c.b16 %v886, %v878
        %v1095 = vpack.c.b16 %v887, %v879
        %v1096 = vpack.c.b16 %v888, %v880
        %v1097 = vpack.c.b16 %v889, %v881
        %v1098 = vpack.c.b16 %v890, %v882
        %v1099 = vpack.c.b16 %v891, %v883
        %v1100 = vpack.c.b16 %v892, %v884
        %v1101 = vpack.c.b16 %v901, %v893
        %v1102 = vpack.c.b16 %v902, %v894
        %v1103 = vpack.c.b16 %v903, %v895
        %v1104 = vpack.c.b16 %v904, %v896
        %v1105 = vpack.c.b16 %v905, %v897
        %v1106 = vpack.c.b16 %v906, %v898
        %v1107 = vpack.c.b16 %v907, %v899
        %v1108 = vpack.c.b16 %v908, %v900
        %v1109 = vpack.c.b16 %v917, %v909
        %v1110 = vpack.c.b16 %v918, %v910
        %v1111 = vpack.c.b16 %v919, %v911
        %v1112 = vpack.c.b16 %v920, %v912
        %v1113 = vpack.c.b16 %v921, %v913
        %v1114 = vpack.c.b16 %v922, %v914
        %v1115 = vpack.c.b16 %v923, %v915
        %v1116 = vpack.c.b16 %v924, %v916
        %v1117 = vpack.c.b16 %v933, %v925
        %v1118 = vpack.c.b16 %v934, %v926
        %v1119 = vpack.c.b16 %v935, %v927
        %v1120 = vpack.c.b16 %v936, %v928
        %v1121 = vpack.c.b16 %v937, %v929
        %v1122 = vpack.c.b16 %v938, %v930
        %v1123 = vpack.c.b16 %v939, %v931
        %v1124 = vpack.c.b16 %v940, %v932
        %v1125 = vpack.c.b16 %v949, %v941
        %v1126 = vpack.c.b16 %v950, %v942
        %v1127 = vpack.c.b16 %v951, %v943
        %v1128 = vpack.c.b16 %v952, %v944
        %v1129 = vpack.c.b16 %v953, %v945
        %v1130 = vpack.c.b16 %v954, %v946
        %v1131 = vpack.c.b16 %v955, %v947
        %v1132 = vpack.c.b16 %v956, %v948
        %v1133 = vpack.c.b16 %v965, %v957
        %v1134 = vpack.c.b16 %v966, %v958
        %v1135 = vpack.c.b16 %v967, %v959
        %v1136 = vpack.c.b16 %v968, %v960
        %v1137 = vpack.c.b16 %v969, %v961
        %v1138 = vpack.c.b16 %v970, %v962
        %v1139 = vpack.c.b16 %v971, %v963
        %v1140 = vpack.c.b16 %v972, %v964
        %v1141 = vpack.c.b16 %v981, %v973
        %v1142 = vpack.c.b16 %v982, %v974
        %v1143 = vpack.c.b16 %v983, %v975
        %v1144 = vpack.c.b16 %v984, %v976
        %v1145 = vpack.c.b16 %v985, %v977
        %v1146 = vpack.c.b16 %v986, %v978
        %v1147 = vpack.c.b16 %v987, %v979
        %v1148 = vpack.c.b16 %v988, %v980
        %v1149 = vpack.c.b16 %v997, %v989
        %v1150 = vpack.c.b16 %v998, %v990
        %v1151 = vpack.c.b16 %v999, %v991
        %v1152 = vpack.c.b16 %v1000, %v992
        %v1153 = vpack.c.b16 %v1001, %v993
        %v1154 = vpack.c.b16 %v1002, %v994
        %v1155 = vpack.c.b16 %v1003, %v995
        %v1156 = vpack.c.b16 %v1004, %v996
        %v1157 = vpack.c.b16 %v1013, %v1005
        %v1158 = vpack.c.b16 %v1014, %v1006
        %v1159 = vpack.c.b16 %v1015, %v1007
        %v1160 = vpack.c.b16 %v1016, %v1008
        %v1161 = vpack.c.b16 %v1017, %v1009
        %v1162 = vpack.c.b16 %v1018, %v1010
        %v1163 = vpack.c.b16 %v1019, %v1011
        %v1164 = vpack.c.b16 %v1020, %v1012
        %v1165 = vpack.c.b16 %v1029, %v1021
        %v1166 = vpack.c.b16 %v1030, %v1022
        %v1167 = vpack.c.b16 %v1031, %v1023
        %v1168 = vpack.c.b16 %v1032, %v1024
        %v1169 = vpack.c.b16 %v1033, %v1025
        %v1170 = vpack.c.b16 %v1034, %v1026
        %v1171 = vpack.c.b16 %v1035, %v1027
        %v1172 = vpack.c.b16 %v1036, %v1028
        %v1173 = vpack.c.b16 %v1045, %v1037
        %v1174 = vpack.c.b16 %v1046, %v1038
        %v1175 = vpack.c.b16 %v1047, %v1039
        %v1176 = vpack.c.b16 %v1048, %v1040
        %v1177 = vpack.c.b16 %v1049, %v1041
        %v1178 = vpack.c.b16 %v1050, %v1042
        %v1179 = vpack.c.b16 %v1051, %v1043
        %v1180 = vpack.c.b16 %v1052, %v1044
        %1309 = vmatpush.bf16.msra.mxu0 %v1109
        %1310 = vmatpush.bf16.msra.mxu0 %v1101
        %1311 = vmatpush.bf16.msra.mxu0 %v1093
        %1312 = vmatpush.bf16.msra.mxu0 %v1085
        %1313 = vmatpush.bf16.msra.mxu0 %v1077
        %1314 = vmatpush.bf16.msra.mxu0 %v1069
        %1315 = vmatpush.bf16.msra.mxu0 %v1061
        %1316 = vmatpush.bf16.msra.mxu0 %v1053
        %1317 = vmatmul.bf16.gmra.mxu0 %v665
        %v1318 = vpop.f32.mrf.mxu0
        %v1319 = vadd.f32 0.0, %v1318
        %v1320 = vpop.f32.mrf.mxu0
        %v1321 = vadd.f32 0.0, %v1320
        %1322 = vdwg.mxu0
        %1323 = vmatpush.bf16.msra.mxu0 %v1173
        %1324 = vmatpush.bf16.msra.mxu0 %v1165
        %1325 = vmatpush.bf16.msra.mxu0 %v1157
        %1326 = vmatpush.bf16.msra.mxu0 %v1149
        %1327 = vmatpush.bf16.msra.mxu0 %v1141
        %1328 = vmatpush.bf16.msra.mxu0 %v1133
        %1329 = vmatpush.bf16.msra.mxu0 %v1125
        %1330 = vmatpush.bf16.msra.mxu0 %v1117
        %1331 = vmatmul.bf16.gmra.mxu0 %v666
        %v1332 = vpop.f32.mrf.mxu0
        %v1333 = vadd.f32 %v1319, %v1332
        %v1334 = vpop.f32.mrf.mxu0
        %v1335 = vadd.f32 %v1321, %v1334
        %1336 = vdwg.mxu0
        %1337 = vmatpush.bf16.msra.mxu0 %v1110
        %1338 = vmatpush.bf16.msra.mxu0 %v1102
        %1339 = vmatpush.bf16.msra.mxu0 %v1094
        %1340 = vmatpush.bf16.msra.mxu0 %v1086
        %1341 = vmatpush.bf16.msra.mxu0 %v1078
        %1342 = vmatpush.bf16.msra.mxu0 %v1070
        %1343 = vmatpush.bf16.msra.mxu0 %v1062
        %1344 = vmatpush.bf16.msra.mxu0 %v1054
        %1345 = vmatmul.bf16.gmra.mxu0 %v665
        %v1346 = vpop.f32.mrf.mxu0
        %v1347 = vadd.f32 0.0, %v1346
        %v1348 = vpop.f32.mrf.mxu0
        %v1349 = vadd.f32 0.0, %v1348
        %1350 = vdwg.mxu0
        %1351 = vmatpush.bf16.msra.mxu0 %v1174
        %1352 = vmatpush.bf16.msra.mxu0 %v1166
        %1353 = vmatpush.bf16.msra.mxu0 %v1158
        %1354 = vmatpush.bf16.msra.mxu0 %v1150
        %1355 = vmatpush.bf16.msra.mxu0 %v1142
        %1356 = vmatpush.bf16.msra.mxu0 %v1134
        %1357 = vmatpush.bf16.msra.mxu0 %v1126
        %1358 = vmatpush.bf16.msra.mxu0 %v1118
        %1359 = vmatmul.bf16.gmra.mxu0 %v666
        %v1360 = vpop.f32.mrf.mxu0
        %v1361 = vadd.f32 %v1347, %v1360
        %v1362 = vpop.f32.mrf.mxu0
        %v1363 = vadd.f32 %v1349, %v1362
        %1364 = vdwg.mxu0
        %1365 = vmatpush.bf16.msra.mxu0 %v1111
        %1366 = vmatpush.bf16.msra.mxu0 %v1103
        %1367 = vmatpush.bf16.msra.mxu0 %v1095
        %1368 = vmatpush.bf16.msra.mxu0 %v1087
        %1369 = vmatpush.bf16.msra.mxu0 %v1079
        %1370 = vmatpush.bf16.msra.mxu0 %v1071
        %1371 = vmatpush.bf16.msra.mxu0 %v1063
        %1372 = vmatpush.bf16.msra.mxu0 %v1055
        %1373 = vmatmul.bf16.gmra.mxu0 %v665
        %v1374 = vpop.f32.mrf.mxu0
        %v1375 = vadd.f32 0.0, %v1374
        %v1376 = vpop.f32.mrf.mxu0
        %v1377 = vadd.f32 0.0, %v1376
        %1378 = vdwg.mxu0
        %1379 = vmatpush.bf16.msra.mxu0 %v1175
        %1380 = vmatpush.bf16.msra.mxu0 %v1167
        %1381 = vmatpush.bf16.msra.mxu0 %v1159
        %1382 = vmatpush.bf16.msra.mxu0 %v1151
        %1383 = vmatpush.bf16.msra.mxu0 %v1143
        %1384 = vmatpush.bf16.msra.mxu0 %v1135
        %1385 = vmatpush.bf16.msra.mxu0 %v1127
        %1386 = vmatpush.bf16.msra.mxu0 %v1119
        %1387 = vmatmul.bf16.gmra.mxu0 %v666
        %v1388 = vpop.f32.mrf.mxu0
        %v1389 = vadd.f32 %v1375, %v1388
        %v1390 = vpop.f32.mrf.mxu0
        %v1391 = vadd.f32 %v1377, %v1390
        %1392 = vdwg.mxu0
        %1393 = vmatpush.bf16.msra.mxu0 %v1112
        %1394 = vmatpush.bf16.msra.mxu0 %v1104
        %1395 = vmatpush.bf16.msra.mxu0 %v1096
        %1396 = vmatpush.bf16.msra.mxu0 %v1088
        %1397 = vmatpush.bf16.msra.mxu0 %v1080
        %1398 = vmatpush.bf16.msra.mxu0 %v1072
        %1399 = vmatpush.bf16.msra.mxu0 %v1064
        %1400 = vmatpush.bf16.msra.mxu0 %v1056
        %1401 = vmatmul.bf16.gmra.mxu0 %v665
        %v1402 = vpop.f32.mrf.mxu0
        %v1403 = vadd.f32 0.0, %v1402
        %v1404 = vpop.f32.mrf.mxu0
        %v1405 = vadd.f32 0.0, %v1404
        %1406 = vdwg.mxu0
        %1407 = vmatpush.bf16.msra.mxu0 %v1176
        %1408 = vmatpush.bf16.msra.mxu0 %v1168
        %1409 = vmatpush.bf16.msra.mxu0 %v1160
        %1410 = vmatpush.bf16.msra.mxu0 %v1152
        %1411 = vmatpush.bf16.msra.mxu0 %v1144
        %1412 = vmatpush.bf16.msra.mxu0 %v1136
        %1413 = vmatpush.bf16.msra.mxu0 %v1128
        %1414 = vmatpush.bf16.msra.mxu0 %v1120
        %1415 = vmatmul.bf16.gmra.mxu0 %v666
        %v1416 = vpop.f32.mrf.mxu0
        %v1417 = vadd.f32 %v1403, %v1416
        %v1418 = vpop.f32.mrf.mxu0
        %v1419 = vadd.f32 %v1405, %v1418
        %1420 = vdwg.mxu0
        %1421 = vmatpush.bf16.msra.mxu0 %v1113
        %1422 = vmatpush.bf16.msra.mxu0 %v1105
        %1423 = vmatpush.bf16.msra.mxu0 %v1097
        %1424 = vmatpush.bf16.msra.mxu0 %v1089
        %1425 = vmatpush.bf16.msra.mxu0 %v1081
        %1426 = vmatpush.bf16.msra.mxu0 %v1073
        %1427 = vmatpush.bf16.msra.mxu0 %v1065
        %1428 = vmatpush.bf16.msra.mxu0 %v1057
        %1429 = vmatmul.bf16.gmra.mxu0 %v665
        %v1430 = vpop.f32.mrf.mxu0
        %v1431 = vadd.f32 0.0, %v1430
        %v1432 = vpop.f32.mrf.mxu0
        %v1433 = vadd.f32 0.0, %v1432
        %1434 = vdwg.mxu0
        %1435 = vmatpush.bf16.msra.mxu0 %v1177
        %1436 = vmatpush.bf16.msra.mxu0 %v1169
        %1437 = vmatpush.bf16.msra.mxu0 %v1161
        %1438 = vmatpush.bf16.msra.mxu0 %v1153
        %1439 = vmatpush.bf16.msra.mxu0 %v1145
        %1440 = vmatpush.bf16.msra.mxu0 %v1137
        %1441 = vmatpush.bf16.msra.mxu0 %v1129
        %1442 = vmatpush.bf16.msra.mxu0 %v1121
        %1443 = vmatmul.bf16.gmra.mxu0 %v666
        %v1444 = vpop.f32.mrf.mxu0
        %v1445 = vadd.f32 %v1431, %v1444
        %v1446 = vpop.f32.mrf.mxu0
        %v1447 = vadd.f32 %v1433, %v1446
        %1448 = vdwg.mxu0
        %1449 = vmatpush.bf16.msra.mxu0 %v1114
        %1450 = vmatpush.bf16.msra.mxu0 %v1106
        %1451 = vmatpush.bf16.msra.mxu0 %v1098
        %1452 = vmatpush.bf16.msra.mxu0 %v1090
        %1453 = vmatpush.bf16.msra.mxu0 %v1082
        %1454 = vmatpush.bf16.msra.mxu0 %v1074
        %1455 = vmatpush.bf16.msra.mxu0 %v1066
        %1456 = vmatpush.bf16.msra.mxu0 %v1058
        %1457 = vmatmul.bf16.gmra.mxu0 %v665
        %v1458 = vpop.f32.mrf.mxu0
        %v1459 = vadd.f32 0.0, %v1458
        %v1460 = vpop.f32.mrf.mxu0
        %v1461 = vadd.f32 0.0, %v1460
        %1462 = vdwg.mxu0
        %1463 = vmatpush.bf16.msra.mxu0 %v1178
        %1464 = vmatpush.bf16.msra.mxu0 %v1170
        %1465 = vmatpush.bf16.msra.mxu0 %v1162
        %1466 = vmatpush.bf16.msra.mxu0 %v1154
        %1467 = vmatpush.bf16.msra.mxu0 %v1146
        %1468 = vmatpush.bf16.msra.mxu0 %v1138
        %1469 = vmatpush.bf16.msra.mxu0 %v1130
        %1470 = vmatpush.bf16.msra.mxu0 %v1122
        %1471 = vmatmul.bf16.gmra.mxu0 %v666
        %v1472 = vpop.f32.mrf.mxu0
        %v1473 = vadd.f32 %v1459, %v1472
        %v1474 = vpop.f32.mrf.mxu0
        %v1475 = vadd.f32 %v1461, %v1474
        %1476 = vdwg.mxu0
        %1477 = vmatpush.bf16.msra.mxu0 %v1115
        %1478 = vmatpush.bf16.msra.mxu0 %v1107
        %1479 = vmatpush.bf16.msra.mxu0 %v1099
        %1480 = vmatpush.bf16.msra.mxu0 %v1091
        %1481 = vmatpush.bf16.msra.mxu0 %v1083
        %1482 = vmatpush.bf16.msra.mxu0 %v1075
        %1483 = vmatpush.bf16.msra.mxu0 %v1067
        %1484 = vmatpush.bf16.msra.mxu0 %v1059
        %1485 = vmatmul.bf16.gmra.mxu0 %v665
        %v1486 = vpop.f32.mrf.mxu0
        %v1487 = vadd.f32 0.0, %v1486
        %v1488 = vpop.f32.mrf.mxu0
        %v1489 = vadd.f32 0.0, %v1488
        %1490 = vdwg.mxu0
        %1491 = vmatpush.bf16.msra.mxu0 %v1179
        %1492 = vmatpush.bf16.msra.mxu0 %v1171
        %1493 = vmatpush.bf16.msra.mxu0 %v1163
        %1494 = vmatpush.bf16.msra.mxu0 %v1155
        %1495 = vmatpush.bf16.msra.mxu0 %v1147
        %1496 = vmatpush.bf16.msra.mxu0 %v1139
        %1497 = vmatpush.bf16.msra.mxu0 %v1131
        %1498 = vmatpush.bf16.msra.mxu0 %v1123
        %1499 = vmatmul.bf16.gmra.mxu0 %v666
        %v1500 = vpop.f32.mrf.mxu0
        %v1501 = vadd.f32 %v1487, %v1500
        %v1502 = vpop.f32.mrf.mxu0
        %v1503 = vadd.f32 %v1489, %v1502
        %1504 = vdwg.mxu0
        %1505 = vmatpush.bf16.msra.mxu0 %v1116
        %1506 = vmatpush.bf16.msra.mxu0 %v1108
        %1507 = vmatpush.bf16.msra.mxu0 %v1100
        %1508 = vmatpush.bf16.msra.mxu0 %v1092
        %1509 = vmatpush.bf16.msra.mxu0 %v1084
        %1510 = vmatpush.bf16.msra.mxu0 %v1076
        %1511 = vmatpush.bf16.msra.mxu0 %v1068
        %1512 = vmatpush.bf16.msra.mxu0 %v1060
        %1513 = vmatmul.bf16.gmra.mxu0 %v665
        %v1514 = vpop.f32.mrf.mxu0
        %v1515 = vadd.f32 0.0, %v1514
        %v1516 = vpop.f32.mrf.mxu0
        %v1517 = vadd.f32 0.0, %v1516
        %1518 = vdwg.mxu0
        %1519 = vmatpush.bf16.msra.mxu0 %v1180
        %1520 = vmatpush.bf16.msra.mxu0 %v1172
        %1521 = vmatpush.bf16.msra.mxu0 %v1164
        %1522 = vmatpush.bf16.msra.mxu0 %v1156
        %1523 = vmatpush.bf16.msra.mxu0 %v1148
        %1524 = vmatpush.bf16.msra.mxu0 %v1140
        %1525 = vmatpush.bf16.msra.mxu0 %v1132
        %1526 = vmatpush.bf16.msra.mxu0 %v1124
        %1527 = vmatmul.bf16.gmra.mxu0 %v666
        %v1528 = vpop.f32.mrf.mxu0
        %v1529 = vadd.f32 %v1515, %v1528
        %v1530 = vpop.f32.mrf.mxu0
        %v1531 = vadd.f32 %v1517, %v1530
        %1532 = vdwg.mxu0
        %v1533 = vadd.f32 %v513, %v1333
        %v1534 = vadd.f32 %v514, %v1361
        %v1535 = vadd.f32 %v515, %v1389
        %v1536 = vadd.f32 %v516, %v1417
        %v1537 = vadd.f32 %v517, %v1445
        %v1538 = vadd.f32 %v518, %v1473
        %v1539 = vadd.f32 %v519, %v1501
        %v1540 = vadd.f32 %v520, %v1529
        %v1541 = vadd.f32 %v521, %v1335
        %v1542 = vadd.f32 %v522, %v1363
        %v1543 = vadd.f32 %v523, %v1391
        %v1544 = vadd.f32 %v524, %v1419
        %v1545 = vadd.f32 %v525, %v1447
        %v1546 = vadd.f32 %v526, %v1475
        %v1547 = vadd.f32 %v527, %v1503
        %v1548 = vadd.f32 %v528, %v1531
        %1549 = vst [vmem:[#allocation2] sm:$0xff] %v1533
        %1550 = vst [vmem:[#allocation2 + $0x8] sm:$0xff] %v1534
        %1551 = vst [vmem:[#allocation2 + $0x10] sm:$0xff] %v1535
        %1552 = vst [vmem:[#allocation2 + $0x18] sm:$0xff] %v1536
        %1553 = vst [vmem:[#allocation2 + $0x20] sm:$0xff] %v1537
        %1554 = vst [vmem:[#allocation2 + $0x28] sm:$0xff] %v1538
        %1555 = vst [vmem:[#allocation2 + $0x30] sm:$0xff] %v1539
        %1556 = vst [vmem:[#allocation2 + $0x38] sm:$0xff] %v1540
        %1557 = vst [vmem:[#allocation2 + $0x40] sm:$0xff] %v1541
        %1558 = vst [vmem:[#allocation2 + $0x48] sm:$0xff] %v1542
        %1559 = vst [vmem:[#allocation2 + $0x50] sm:$0xff] %v1543
        %1560 = vst [vmem:[#allocation2 + $0x58] sm:$0xff] %v1544
        %1561 = vst [vmem:[#allocation2 + $0x60] sm:$0xff] %v1545
        %1562 = vst [vmem:[#allocation2 + $0x68] sm:$0xff] %v1546
        %1563 = vst [vmem:[#allocation2 + $0x70] sm:$0xff] %v1547
        %1564 = vst [vmem:[#allocation2 + $0x78] sm:$0xff] %v1548
        %p1565 = scmp.eq.s32.totalorder %s30, 2
        // Predicated region
        $region97: #{tpu_custom_call.1} parent=55 // pred_check
          %p1566 = pneg %p1565
        $region98: #{tpu_custom_call.1} parent=55 // pred_check_branch
          %1568 = sbr.rel (%p1566) target = $region100
        $region99: #{tpu_custom_call.1} parent=55 // pred_region
          %v1569 = vld [vmem:[#allocation8] sm:$0xff]
          %v1570 = vld [vmem:[#allocation8 + $0x8] sm:$0xff]
          %v1571 = vld [vmem:[#allocation8 + $0x10] sm:$0xff]
          %v1572 = vld [vmem:[#allocation8 + $0x18] sm:$0xff]
          %v1573 = vld [vmem:[#allocation9 + $0x800] sm:$0xff]
          %v1574 = vld [vmem:[#allocation9 + $0x808] sm:$0xff]
          %v1575 = vld [vmem:[#allocation9 + $0x810] sm:$0xff]
          %v1576 = vld [vmem:[#allocation9 + $0x818] sm:$0xff]
          %v1577 = vld [vmem:[#allocation9 + $0x820] sm:$0xff]
          %v1578 = vld [vmem:[#allocation9 + $0x828] sm:$0xff]
          %v1579 = vld [vmem:[#allocation9 + $0x830] sm:$0xff]
          %v1580 = vld [vmem:[#allocation9 + $0x838] sm:$0xff]
          %v1581 = vld [vmem:[#allocation9 + $0x840] sm:$0xff]
          %v1582 = vld [vmem:[#allocation9 + $0x848] sm:$0xff]
          %v1583 = vld [vmem:[#allocation9 + $0x850] sm:$0xff]
          %v1584 = vld [vmem:[#allocation9 + $0x858] sm:$0xff]
          %v1585 = vld [vmem:[#allocation9 + $0x860] sm:$0xff]
          %v1586 = vld [vmem:[#allocation9 + $0x868] sm:$0xff]
          %v1587 = vld [vmem:[#allocation9 + $0x870] sm:$0xff]
          %v1588 = vld [vmem:[#allocation9 + $0x878] sm:$0xff]
          %v1589 = vld [vmem:[#allocation9 + $0x880] sm:$0xff]
          %v1590 = vld [vmem:[#allocation9 + $0x888] sm:$0xff]
          %v1591 = vld [vmem:[#allocation9 + $0x890] sm:$0xff]
          %v1592 = vld [vmem:[#allocation9 + $0x898] sm:$0xff]
          %v1593 = vld [vmem:[#allocation9 + $0x8a0] sm:$0xff]
          %v1594 = vld [vmem:[#allocation9 + $0x8a8] sm:$0xff]
          %v1595 = vld [vmem:[#allocation9 + $0x8b0] sm:$0xff]
          %v1596 = vld [vmem:[#allocation9 + $0x8b8] sm:$0xff]
          %v1597 = vld [vmem:[#allocation9 + $0x8c0] sm:$0xff]
          %v1598 = vld [vmem:[#allocation9 + $0x8c8] sm:$0xff]
          %v1599 = vld [vmem:[#allocation9 + $0x8d0] sm:$0xff]
          %v1600 = vld [vmem:[#allocation9 + $0x8d8] sm:$0xff]
          %v1601 = vld [vmem:[#allocation9 + $0x8e0] sm:$0xff]
          %v1602 = vld [vmem:[#allocation9 + $0x8e8] sm:$0xff]
          %v1603 = vld [vmem:[#allocation9 + $0x8f0] sm:$0xff]
          %v1604 = vld [vmem:[#allocation9 + $0x8f8] sm:$0xff]
          %v1605 = vld [vmem:[#allocation9 + $0x900] sm:$0xff]
          %v1606 = vld [vmem:[#allocation9 + $0x908] sm:$0xff]
          %v1607 = vld [vmem:[#allocation9 + $0x910] sm:$0xff]
          %v1608 = vld [vmem:[#allocation9 + $0x918] sm:$0xff]
          %v1609 = vld [vmem:[#allocation9 + $0x920] sm:$0xff]
          %v1610 = vld [vmem:[#allocation9 + $0x928] sm:$0xff]
          %v1611 = vld [vmem:[#allocation9 + $0x930] sm:$0xff]
          %v1612 = vld [vmem:[#allocation9 + $0x938] sm:$0xff]
          %v1613 = vld [vmem:[#allocation9 + $0x940] sm:$0xff]
          %v1614 = vld [vmem:[#allocation9 + $0x948] sm:$0xff]
          %v1615 = vld [vmem:[#allocation9 + $0x950] sm:$0xff]
          %v1616 = vld [vmem:[#allocation9 + $0x958] sm:$0xff]
          %v1617 = vld [vmem:[#allocation9 + $0x960] sm:$0xff]
          %v1618 = vld [vmem:[#allocation9 + $0x968] sm:$0xff]
          %v1619 = vld [vmem:[#allocation9 + $0x970] sm:$0xff]
          %v1620 = vld [vmem:[#allocation9 + $0x978] sm:$0xff]
          %v1621 = vld [vmem:[#allocation9 + $0x980] sm:$0xff]
          %v1622 = vld [vmem:[#allocation9 + $0x988] sm:$0xff]
          %v1623 = vld [vmem:[#allocation9 + $0x990] sm:$0xff]
          %v1624 = vld [vmem:[#allocation9 + $0x998] sm:$0xff]
          %v1625 = vld [vmem:[#allocation9 + $0x9a0] sm:$0xff]
          %v1626 = vld [vmem:[#allocation9 + $0x9a8] sm:$0xff]
          %v1627 = vld [vmem:[#allocation9 + $0x9b0] sm:$0xff]
          %v1628 = vld [vmem:[#allocation9 + $0x9b8] sm:$0xff]
          %v1629 = vld [vmem:[#allocation9 + $0x9c0] sm:$0xff]
          %v1630 = vld [vmem:[#allocation9 + $0x9c8] sm:$0xff]
          %v1631 = vld [vmem:[#allocation9 + $0x9d0] sm:$0xff]
          %v1632 = vld [vmem:[#allocation9 + $0x9d8] sm:$0xff]
          %v1633 = vld [vmem:[#allocation9 + $0x9e0] sm:$0xff]
          %v1634 = vld [vmem:[#allocation9 + $0x9e8] sm:$0xff]
          %v1635 = vld [vmem:[#allocation9 + $0x9f0] sm:$0xff]
          %v1636 = vld [vmem:[#allocation9 + $0x9f8] sm:$0xff]
          %v1637 = vld [vmem:[#allocation9 + $0xa00] sm:$0xff]
          %v1638 = vld [vmem:[#allocation9 + $0xa08] sm:$0xff]
          %v1639 = vld [vmem:[#allocation9 + $0xa10] sm:$0xff]
          %v1640 = vld [vmem:[#allocation9 + $0xa18] sm:$0xff]
          %v1641 = vld [vmem:[#allocation9 + $0xa20] sm:$0xff]
          %v1642 = vld [vmem:[#allocation9 + $0xa28] sm:$0xff]
          %v1643 = vld [vmem:[#allocation9 + $0xa30] sm:$0xff]
          %v1644 = vld [vmem:[#allocation9 + $0xa38] sm:$0xff]
          %v1645 = vld [vmem:[#allocation9 + $0xa40] sm:$0xff]
          %v1646 = vld [vmem:[#allocation9 + $0xa48] sm:$0xff]
          %v1647 = vld [vmem:[#allocation9 + $0xa50] sm:$0xff]
          %v1648 = vld [vmem:[#allocation9 + $0xa58] sm:$0xff]
          %v1649 = vld [vmem:[#allocation9 + $0xa60] sm:$0xff]
          %v1650 = vld [vmem:[#allocation9 + $0xa68] sm:$0xff]
          %v1651 = vld [vmem:[#allocation9 + $0xa70] sm:$0xff]
          %v1652 = vld [vmem:[#allocation9 + $0xa78] sm:$0xff]
          %v1653 = vld [vmem:[#allocation9 + $0xa80] sm:$0xff]
          %v1654 = vld [vmem:[#allocation9 + $0xa88] sm:$0xff]
          %v1655 = vld [vmem:[#allocation9 + $0xa90] sm:$0xff]
          %v1656 = vld [vmem:[#allocation9 + $0xa98] sm:$0xff]
          %v1657 = vld [vmem:[#allocation9 + $0xaa0] sm:$0xff]
          %v1658 = vld [vmem:[#allocation9 + $0xaa8] sm:$0xff]
          %v1659 = vld [vmem:[#allocation9 + $0xab0] sm:$0xff]
          %v1660 = vld [vmem:[#allocation9 + $0xab8] sm:$0xff]
          %v1661 = vld [vmem:[#allocation9 + $0xac0] sm:$0xff]
          %v1662 = vld [vmem:[#allocation9 + $0xac8] sm:$0xff]
          %v1663 = vld [vmem:[#allocation9 + $0xad0] sm:$0xff]
          %v1664 = vld [vmem:[#allocation9 + $0xad8] sm:$0xff]
          %v1665 = vld [vmem:[#allocation9 + $0xae0] sm:$0xff]
          %v1666 = vld [vmem:[#allocation9 + $0xae8] sm:$0xff]
          %v1667 = vld [vmem:[#allocation9 + $0xaf0] sm:$0xff]
          %v1668 = vld [vmem:[#allocation9 + $0xaf8] sm:$0xff]
          %v1669 = vld [vmem:[#allocation9 + $0xb00] sm:$0xff]
          %v1670 = vld [vmem:[#allocation9 + $0xb08] sm:$0xff]
          %v1671 = vld [vmem:[#allocation9 + $0xb10] sm:$0xff]
          %v1672 = vld [vmem:[#allocation9 + $0xb18] sm:$0xff]
          %v1673 = vld [vmem:[#allocation9 + $0xb20] sm:$0xff]
          %v1674 = vld [vmem:[#allocation9 + $0xb28] sm:$0xff]
          %v1675 = vld [vmem:[#allocation9 + $0xb30] sm:$0xff]
          %v1676 = vld [vmem:[#allocation9 + $0xb38] sm:$0xff]
          %v1677 = vld [vmem:[#allocation9 + $0xb40] sm:$0xff]
          %v1678 = vld [vmem:[#allocation9 + $0xb48] sm:$0xff]
          %v1679 = vld [vmem:[#allocation9 + $0xb50] sm:$0xff]
          %v1680 = vld [vmem:[#allocation9 + $0xb58] sm:$0xff]
          %v1681 = vld [vmem:[#allocation9 + $0xb60] sm:$0xff]
          %v1682 = vld [vmem:[#allocation9 + $0xb68] sm:$0xff]
          %v1683 = vld [vmem:[#allocation9 + $0xb70] sm:$0xff]
          %v1684 = vld [vmem:[#allocation9 + $0xb78] sm:$0xff]
          %v1685 = vld [vmem:[#allocation9 + $0xb80] sm:$0xff]
          %v1686 = vld [vmem:[#allocation9 + $0xb88] sm:$0xff]
          %v1687 = vld [vmem:[#allocation9 + $0xb90] sm:$0xff]
          %v1688 = vld [vmem:[#allocation9 + $0xb98] sm:$0xff]
          %v1689 = vld [vmem:[#allocation9 + $0xba0] sm:$0xff]
          %v1690 = vld [vmem:[#allocation9 + $0xba8] sm:$0xff]
          %v1691 = vld [vmem:[#allocation9 + $0xbb0] sm:$0xff]
          %v1692 = vld [vmem:[#allocation9 + $0xbb8] sm:$0xff]
          %v1693 = vld [vmem:[#allocation9 + $0xbc0] sm:$0xff]
          %v1694 = vld [vmem:[#allocation9 + $0xbc8] sm:$0xff]
          %v1695 = vld [vmem:[#allocation9 + $0xbd0] sm:$0xff]
          %v1696 = vld [vmem:[#allocation9 + $0xbd8] sm:$0xff]
          %v1697 = vld [vmem:[#allocation9 + $0xbe0] sm:$0xff]
          %v1698 = vld [vmem:[#allocation9 + $0xbe8] sm:$0xff]
          %v1699 = vld [vmem:[#allocation9 + $0xbf0] sm:$0xff]
          %v1700 = vld [vmem:[#allocation9 + $0xbf8] sm:$0xff]
          %v1701 = vld [vmem:[#allocation11] sm:$0x3]
          %v1703 = vperm.slane %v1701, 0
          %v1704 = vperm.slane %v1701, 1
          %v1711 = vunpack.c.l.b16 %v1569
          %v1712 = vunpack.c.h.b16 %v1569
          %v1713 = vunpack.c.l.b16 %v1570
          %v1714 = vunpack.c.h.b16 %v1570
          %v1715 = vunpack.c.l.b16 %v1571
          %v1716 = vunpack.c.h.b16 %v1571
          %v1717 = vunpack.c.l.b16 %v1572
          %v1718 = vunpack.c.h.b16 %v1572
          %v1719 = vpack.c.b16 %v1711, %v1711
          %v1720 = vpack.c.b16 %v1712, %v1712
          %v1721 = vpack.c.b16 %v1713, %v1713
          %v1722 = vpack.c.b16 %v1714, %v1714
          %v1723 = vpack.c.b16 %v1715, %v1715
          %v1724 = vpack.c.b16 %v1716, %v1716
          %v1725 = vpack.c.b16 %v1717, %v1717
          %v1726 = vpack.c.b16 %v1718, %v1718
          %v1863 = vunpack.c.l.b16 %v1573
          %v1864 = vunpack.c.h.b16 %v1573
          %v1865 = vunpack.c.l.b16 %v1574
          %v1866 = vunpack.c.h.b16 %v1574
          %v1867 = vunpack.c.l.b16 %v1575
          %v1868 = vunpack.c.h.b16 %v1575
          %v1869 = vunpack.c.l.b16 %v1576
          %v1870 = vunpack.c.h.b16 %v1576
          %v1871 = vunpack.c.l.b16 %v1577
          %v1872 = vunpack.c.h.b16 %v1577
          %v1873 = vunpack.c.l.b16 %v1578
          %v1874 = vunpack.c.h.b16 %v1578
          %v1875 = vunpack.c.l.b16 %v1579
          %v1876 = vunpack.c.h.b16 %v1579
          %v1877 = vunpack.c.l.b16 %v1580
          %v1878 = vunpack.c.h.b16 %v1580
          %v1879 = vunpack.c.l.b16 %v1581
          %v1880 = vunpack.c.h.b16 %v1581
          %v1881 = vunpack.c.l.b16 %v1582
          %v1882 = vunpack.c.h.b16 %v1582
          %v1883 = vunpack.c.l.b16 %v1583
          %v1884 = vunpack.c.h.b16 %v1583
          %v1885 = vunpack.c.l.b16 %v1584
          %v1886 = vunpack.c.h.b16 %v1584
          %v1887 = vunpack.c.l.b16 %v1585
          %v1888 = vunpack.c.h.b16 %v1585
          %v1889 = vunpack.c.l.b16 %v1586
          %v1890 = vunpack.c.h.b16 %v1586
          %v1891 = vunpack.c.l.b16 %v1587
          %v1892 = vunpack.c.h.b16 %v1587
          %v1893 = vunpack.c.l.b16 %v1588
          %v1894 = vunpack.c.h.b16 %v1588
          %v1895 = vunpack.c.l.b16 %v1589
          %v1896 = vunpack.c.h.b16 %v1589
          %v1897 = vunpack.c.l.b16 %v1590
          %v1898 = vunpack.c.h.b16 %v1590
          %v1899 = vunpack.c.l.b16 %v1591
          %v1900 = vunpack.c.h.b16 %v1591
          %v1901 = vunpack.c.l.b16 %v1592
          %v1902 = vunpack.c.h.b16 %v1592
          %v1903 = vunpack.c.l.b16 %v1593
          %v1904 = vunpack.c.h.b16 %v1593
          %v1905 = vunpack.c.l.b16 %v1594
          %v1906 = vunpack.c.h.b16 %v1594
          %v1907 = vunpack.c.l.b16 %v1595
          %v1908 = vunpack.c.h.b16 %v1595
          %v1909 = vunpack.c.l.b16 %v1596
          %v1910 = vunpack.c.h.b16 %v1596
          %v1911 = vunpack.c.l.b16 %v1597
          %v1912 = vunpack.c.h.b16 %v1597
          %v1913 = vunpack.c.l.b16 %v1598
          %v1914 = vunpack.c.h.b16 %v1598
          %v1915 = vunpack.c.l.b16 %v1599
          %v1916 = vunpack.c.h.b16 %v1599
          %v1917 = vunpack.c.l.b16 %v1600
          %v1918 = vunpack.c.h.b16 %v1600
          %v1919 = vunpack.c.l.b16 %v1601
          %v1920 = vunpack.c.h.b16 %v1601
          %v1921 = vunpack.c.l.b16 %v1602
          %v1922 = vunpack.c.h.b16 %v1602
          %v1923 = vunpack.c.l.b16 %v1603
          %v1924 = vunpack.c.h.b16 %v1603
          %v1925 = vunpack.c.l.b16 %v1604
          %v1926 = vunpack.c.h.b16 %v1604
          %v1927 = vunpack.c.l.b16 %v1605
          %v1928 = vunpack.c.h.b16 %v1605
          %v1929 = vunpack.c.l.b16 %v1606
          %v1930 = vunpack.c.h.b16 %v1606
          %v1931 = vunpack.c.l.b16 %v1607
          %v1932 = vunpack.c.h.b16 %v1607
          %v1933 = vunpack.c.l.b16 %v1608
          %v1934 = vunpack.c.h.b16 %v1608
          %v1935 = vunpack.c.l.b16 %v1609
          %v1936 = vunpack.c.h.b16 %v1609
          %v1937 = vunpack.c.l.b16 %v1610
          %v1938 = vunpack.c.h.b16 %v1610
          %v1939 = vunpack.c.l.b16 %v1611
          %v1940 = vunpack.c.h.b16 %v1611
          %v1941 = vunpack.c.l.b16 %v1612
          %v1942 = vunpack.c.h.b16 %v1612
          %v1943 = vunpack.c.l.b16 %v1613
          %v1944 = vunpack.c.h.b16 %v1613
          %v1945 = vunpack.c.l.b16 %v1614
          %v1946 = vunpack.c.h.b16 %v1614
          %v1947 = vunpack.c.l.b16 %v1615
          %v1948 = vunpack.c.h.b16 %v1615
          %v1949 = vunpack.c.l.b16 %v1616
          %v1950 = vunpack.c.h.b16 %v1616
          %v1951 = vunpack.c.l.b16 %v1617
          %v1952 = vunpack.c.h.b16 %v1617
          %v1953 = vunpack.c.l.b16 %v1618
          %v1954 = vunpack.c.h.b16 %v1618
          %v1955 = vunpack.c.l.b16 %v1619
          %v1956 = vunpack.c.h.b16 %v1619
          %v1957 = vunpack.c.l.b16 %v1620
          %v1958 = vunpack.c.h.b16 %v1620
          %v1959 = vunpack.c.l.b16 %v1621
          %v1960 = vunpack.c.h.b16 %v1621
          %v1961 = vunpack.c.l.b16 %v1622
          %v1962 = vunpack.c.h.b16 %v1622
          %v1963 = vunpack.c.l.b16 %v1623
          %v1964 = vunpack.c.h.b16 %v1623
          %v1965 = vunpack.c.l.b16 %v1624
          %v1966 = vunpack.c.h.b16 %v1624
          %v1967 = vunpack.c.l.b16 %v1625
          %v1968 = vunpack.c.h.b16 %v1625
          %v1969 = vunpack.c.l.b16 %v1626
          %v1970 = vunpack.c.h.b16 %v1626
          %v1971 = vunpack.c.l.b16 %v1627
          %v1972 = vunpack.c.h.b16 %v1627
          %v1973 = vunpack.c.l.b16 %v1628
          %v1974 = vunpack.c.h.b16 %v1628
          %v1975 = vunpack.c.l.b16 %v1629
          %v1976 = vunpack.c.h.b16 %v1629
          %v1977 = vunpack.c.l.b16 %v1630
          %v1978 = vunpack.c.h.b16 %v1630
          %v1979 = vunpack.c.l.b16 %v1631
          %v1980 = vunpack.c.h.b16 %v1631
          %v1981 = vunpack.c.l.b16 %v1632
          %v1982 = vunpack.c.h.b16 %v1632
          %v1983 = vunpack.c.l.b16 %v1633
          %v1984 = vunpack.c.h.b16 %v1633
          %v1985 = vunpack.c.l.b16 %v1634
          %v1986 = vunpack.c.h.b16 %v1634
          %v1987 = vunpack.c.l.b16 %v1635
          %v1988 = vunpack.c.h.b16 %v1635
          %v1989 = vunpack.c.l.b16 %v1636
          %v1990 = vunpack.c.h.b16 %v1636
          %v1991 = vunpack.c.l.b16 %v1637
          %v1992 = vunpack.c.h.b16 %v1637
          %v1993 = vunpack.c.l.b16 %v1638
          %v1994 = vunpack.c.h.b16 %v1638
          %v1995 = vunpack.c.l.b16 %v1639
          %v1996 = vunpack.c.h.b16 %v1639
          %v1997 = vunpack.c.l.b16 %v1640
          %v1998 = vunpack.c.h.b16 %v1640
          %v1999 = vunpack.c.l.b16 %v1641
          %v2000 = vunpack.c.h.b16 %v1641
          %v2001 = vunpack.c.l.b16 %v1642
          %v2002 = vunpack.c.h.b16 %v1642
          %v2003 = vunpack.c.l.b16 %v1643
          %v2004 = vunpack.c.h.b16 %v1643
          %v2005 = vunpack.c.l.b16 %v1644
          %v2006 = vunpack.c.h.b16 %v1644
          %v2007 = vunpack.c.l.b16 %v1645
          %v2008 = vunpack.c.h.b16 %v1645
          %v2009 = vunpack.c.l.b16 %v1646
          %v2010 = vunpack.c.h.b16 %v1646
          %v2011 = vunpack.c.l.b16 %v1647
          %v2012 = vunpack.c.h.b16 %v1647
          %v2013 = vunpack.c.l.b16 %v1648
          %v2014 = vunpack.c.h.b16 %v1648
          %v2015 = vunpack.c.l.b16 %v1649
          %v2016 = vunpack.c.h.b16 %v1649
          %v2017 = vunpack.c.l.b16 %v1650
          %v2018 = vunpack.c.h.b16 %v1650
          %v2019 = vunpack.c.l.b16 %v1651
          %v2020 = vunpack.c.h.b16 %v1651
          %v2021 = vunpack.c.l.b16 %v1652
          %v2022 = vunpack.c.h.b16 %v1652
          %v2023 = vunpack.c.l.b16 %v1653
          %v2024 = vunpack.c.h.b16 %v1653
          %v2025 = vunpack.c.l.b16 %v1654
          %v2026 = vunpack.c.h.b16 %v1654
          %v2027 = vunpack.c.l.b16 %v1655
          %v2028 = vunpack.c.h.b16 %v1655
          %v2029 = vunpack.c.l.b16 %v1656
          %v2030 = vunpack.c.h.b16 %v1656
          %v2031 = vunpack.c.l.b16 %v1657
          %v2032 = vunpack.c.h.b16 %v1657
          %v2033 = vunpack.c.l.b16 %v1658
          %v2034 = vunpack.c.h.b16 %v1658
          %v2035 = vunpack.c.l.b16 %v1659
          %v2036 = vunpack.c.h.b16 %v1659
          %v2037 = vunpack.c.l.b16 %v1660
          %v2038 = vunpack.c.h.b16 %v1660
          %v2039 = vunpack.c.l.b16 %v1661
          %v2040 = vunpack.c.h.b16 %v1661
          %v2041 = vunpack.c.l.b16 %v1662
          %v2042 = vunpack.c.h.b16 %v1662
          %v2043 = vunpack.c.l.b16 %v1663
          %v2044 = vunpack.c.h.b16 %v1663
          %v2045 = vunpack.c.l.b16 %v1664
          %v2046 = vunpack.c.h.b16 %v1664
          %v2047 = vunpack.c.l.b16 %v1665
          %v2048 = vunpack.c.h.b16 %v1665
          %v2049 = vunpack.c.l.b16 %v1666
          %v2050 = vunpack.c.h.b16 %v1666
          %v2051 = vunpack.c.l.b16 %v1667
          %v2052 = vunpack.c.h.b16 %v1667
          %v2053 = vunpack.c.l.b16 %v1668
          %v2054 = vunpack.c.h.b16 %v1668
          %v2055 = vunpack.c.l.b16 %v1669
          %v2056 = vunpack.c.h.b16 %v1669
          %v2057 = vunpack.c.l.b16 %v1670
          %v2058 = vunpack.c.h.b16 %v1670
          %v2059 = vunpack.c.l.b16 %v1671
          %v2060 = vunpack.c.h.b16 %v1671
          %v2061 = vunpack.c.l.b16 %v1672
          %v2062 = vunpack.c.h.b16 %v1672
          %v2063 = vunpack.c.l.b16 %v1673
          %v2064 = vunpack.c.h.b16 %v1673
          %v2065 = vunpack.c.l.b16 %v1674
          %v2066 = vunpack.c.h.b16 %v1674
          %v2067 = vunpack.c.l.b16 %v1675
          %v2068 = vunpack.c.h.b16 %v1675
          %v2069 = vunpack.c.l.b16 %v1676
          %v2070 = vunpack.c.h.b16 %v1676
          %v2071 = vunpack.c.l.b16 %v1677
          %v2072 = vunpack.c.h.b16 %v1677
          %v2073 = vunpack.c.l.b16 %v1678
          %v2074 = vunpack.c.h.b16 %v1678
          %v2075 = vunpack.c.l.b16 %v1679
          %v2076 = vunpack.c.h.b16 %v1679
          %v2077 = vunpack.c.l.b16 %v1680
          %v2078 = vunpack.c.h.b16 %v1680
          %v2079 = vunpack.c.l.b16 %v1681
          %v2080 = vunpack.c.h.b16 %v1681
          %v2081 = vunpack.c.l.b16 %v1682
          %v2082 = vunpack.c.h.b16 %v1682
          %v2083 = vunpack.c.l.b16 %v1683
          %v2084 = vunpack.c.h.b16 %v1683
          %v2085 = vunpack.c.l.b16 %v1684
          %v2086 = vunpack.c.h.b16 %v1684
          %v2087 = vunpack.c.l.b16 %v1685
          %v2088 = vunpack.c.h.b16 %v1685
          %v2089 = vunpack.c.l.b16 %v1686
          %v2090 = vunpack.c.h.b16 %v1686
          %v2091 = vunpack.c.l.b16 %v1687
          %v2092 = vunpack.c.h.b16 %v1687
          %v2093 = vunpack.c.l.b16 %v1688
          %v2094 = vunpack.c.h.b16 %v1688
          %v2095 = vunpack.c.l.b16 %v1689
          %v2096 = vunpack.c.h.b16 %v1689
          %v2097 = vunpack.c.l.b16 %v1690
          %v2098 = vunpack.c.h.b16 %v1690
          %v2099 = vunpack.c.l.b16 %v1691
          %v2100 = vunpack.c.h.b16 %v1691
          %v2101 = vunpack.c.l.b16 %v1692
          %v2102 = vunpack.c.h.b16 %v1692
          %v2103 = vunpack.c.l.b16 %v1693
          %v2104 = vunpack.c.h.b16 %v1693
          %v2105 = vunpack.c.l.b16 %v1694
          %v2106 = vunpack.c.h.b16 %v1694
          %v2107 = vunpack.c.l.b16 %v1695
          %v2108 = vunpack.c.h.b16 %v1695
          %v2109 = vunpack.c.l.b16 %v1696
          %v2110 = vunpack.c.h.b16 %v1696
          %v2111 = vunpack.c.l.b16 %v1697
          %v2112 = vunpack.c.h.b16 %v1697
          %v2113 = vunpack.c.l.b16 %v1698
          %v2114 = vunpack.c.h.b16 %v1698
          %v2115 = vunpack.c.l.b16 %v1699
          %v2116 = vunpack.c.h.b16 %v1699
          %v2117 = vunpack.c.l.b16 %v1700
          %v2118 = vunpack.c.h.b16 %v1700
          %v2119 = vpack.c.b16 %v1865, %v1863
          %v2120 = vpack.c.b16 %v1866, %v1864
          %v2121 = vpack.c.b16 %v1869, %v1867
          %v2122 = vpack.c.b16 %v1870, %v1868
          %v2123 = vpack.c.b16 %v1873, %v1871
          %v2124 = vpack.c.b16 %v1874, %v1872
          %v2125 = vpack.c.b16 %v1877, %v1875
          %v2126 = vpack.c.b16 %v1878, %v1876
          %v2127 = vpack.c.b16 %v1881, %v1879
          %v2128 = vpack.c.b16 %v1882, %v1880
          %v2129 = vpack.c.b16 %v1885, %v1883
          %v2130 = vpack.c.b16 %v1886, %v1884
          %v2131 = vpack.c.b16 %v1889, %v1887
          %v2132 = vpack.c.b16 %v1890, %v1888
          %v2133 = vpack.c.b16 %v1893, %v1891
          %v2134 = vpack.c.b16 %v1894, %v1892
          %v2135 = vpack.c.b16 %v1897, %v1895
          %v2136 = vpack.c.b16 %v1898, %v1896
          %v2137 = vpack.c.b16 %v1901, %v1899
          %v2138 = vpack.c.b16 %v1902, %v1900
          %v2139 = vpack.c.b16 %v1905, %v1903
          %v2140 = vpack.c.b16 %v1906, %v1904
          %v2141 = vpack.c.b16 %v1909, %v1907
          %v2142 = vpack.c.b16 %v1910, %v1908
          %v2143 = vpack.c.b16 %v1913, %v1911
          %v2144 = vpack.c.b16 %v1914, %v1912
          %v2145 = vpack.c.b16 %v1917, %v1915
          %v2146 = vpack.c.b16 %v1918, %v1916
          %v2147 = vpack.c.b16 %v1921, %v1919
          %v2148 = vpack.c.b16 %v1922, %v1920
          %v2149 = vpack.c.b16 %v1925, %v1923
          %v2150 = vpack.c.b16 %v1926, %v1924
          %v2151 = vpack.c.b16 %v1929, %v1927
          %v2152 = vpack.c.b16 %v1930, %v1928
          %v2153 = vpack.c.b16 %v1933, %v1931
          %v2154 = vpack.c.b16 %v1934, %v1932
          %v2155 = vpack.c.b16 %v1937, %v1935
          %v2156 = vpack.c.b16 %v1938, %v1936
          %v2157 = vpack.c.b16 %v1941, %v1939
          %v2158 = vpack.c.b16 %v1942, %v1940
          %v2159 = vpack.c.b16 %v1945, %v1943
          %v2160 = vpack.c.b16 %v1946, %v1944
          %v2161 = vpack.c.b16 %v1949, %v1947
          %v2162 = vpack.c.b16 %v1950, %v1948
          %v2163 = vpack.c.b16 %v1953, %v1951
          %v2164 = vpack.c.b16 %v1954, %v1952
          %v2165 = vpack.c.b16 %v1957, %v1955
          %v2166 = vpack.c.b16 %v1958, %v1956
          %v2167 = vpack.c.b16 %v1961, %v1959
          %v2168 = vpack.c.b16 %v1962, %v1960
          %v2169 = vpack.c.b16 %v1965, %v1963
          %v2170 = vpack.c.b16 %v1966, %v1964
          %v2171 = vpack.c.b16 %v1969, %v1967
          %v2172 = vpack.c.b16 %v1970, %v1968
          %v2173 = vpack.c.b16 %v1973, %v1971
          %v2174 = vpack.c.b16 %v1974, %v1972
          %v2175 = vpack.c.b16 %v1977, %v1975
          %v2176 = vpack.c.b16 %v1978, %v1976
          %v2177 = vpack.c.b16 %v1981, %v1979
          %v2178 = vpack.c.b16 %v1982, %v1980
          %v2179 = vpack.c.b16 %v1985, %v1983
          %v2180 = vpack.c.b16 %v1986, %v1984
          %v2181 = vpack.c.b16 %v1989, %v1987
          %v2182 = vpack.c.b16 %v1990, %v1988
          %v2183 = vpack.c.b16 %v1993, %v1991
          %v2184 = vpack.c.b16 %v1994, %v1992
          %v2185 = vpack.c.b16 %v1997, %v1995
          %v2186 = vpack.c.b16 %v1998, %v1996
          %v2187 = vpack.c.b16 %v2001, %v1999
          %v2188 = vpack.c.b16 %v2002, %v2000
          %v2189 = vpack.c.b16 %v2005, %v2003
          %v2190 = vpack.c.b16 %v2006, %v2004
          %v2191 = vpack.c.b16 %v2009, %v2007
          %v2192 = vpack.c.b16 %v2010, %v2008
          %v2193 = vpack.c.b16 %v2013, %v2011
          %v2194 = vpack.c.b16 %v2014, %v2012
          %v2195 = vpack.c.b16 %v2017, %v2015
          %v2196 = vpack.c.b16 %v2018, %v2016
          %v2197 = vpack.c.b16 %v2021, %v2019
          %v2198 = vpack.c.b16 %v2022, %v2020
          %v2199 = vpack.c.b16 %v2025, %v2023
          %v2200 = vpack.c.b16 %v2026, %v2024
          %v2201 = vpack.c.b16 %v2029, %v2027
          %v2202 = vpack.c.b16 %v2030, %v2028
          %v2203 = vpack.c.b16 %v2033, %v2031
          %v2204 = vpack.c.b16 %v2034, %v2032
          %v2205 = vpack.c.b16 %v2037, %v2035
          %v2206 = vpack.c.b16 %v2038, %v2036
          %v2207 = vpack.c.b16 %v2041, %v2039
          %v2208 = vpack.c.b16 %v2042, %v2040
          %v2209 = vpack.c.b16 %v2045, %v2043
          %v2210 = vpack.c.b16 %v2046, %v2044
          %v2211 = vpack.c.b16 %v2049, %v2047
          %v2212 = vpack.c.b16 %v2050, %v2048
          %v2213 = vpack.c.b16 %v2053, %v2051
          %v2214 = vpack.c.b16 %v2054, %v2052
          %v2215 = vpack.c.b16 %v2057, %v2055
          %v2216 = vpack.c.b16 %v2058, %v2056
          %v2217 = vpack.c.b16 %v2061, %v2059
          %v2218 = vpack.c.b16 %v2062, %v2060
          %v2219 = vpack.c.b16 %v2065, %v2063
          %v2220 = vpack.c.b16 %v2066, %v2064
          %v2221 = vpack.c.b16 %v2069, %v2067
          %v2222 = vpack.c.b16 %v2070, %v2068
          %v2223 = vpack.c.b16 %v2073, %v2071
          %v2224 = vpack.c.b16 %v2074, %v2072
          %v2225 = vpack.c.b16 %v2077, %v2075
          %v2226 = vpack.c.b16 %v2078, %v2076
          %v2227 = vpack.c.b16 %v2081, %v2079
          %v2228 = vpack.c.b16 %v2082, %v2080
          %v2229 = vpack.c.b16 %v2085, %v2083
          %v2230 = vpack.c.b16 %v2086, %v2084
          %v2231 = vpack.c.b16 %v2089, %v2087
          %v2232 = vpack.c.b16 %v2090, %v2088
          %v2233 = vpack.c.b16 %v2093, %v2091
          %v2234 = vpack.c.b16 %v2094, %v2092
          %v2235 = vpack.c.b16 %v2097, %v2095
          %v2236 = vpack.c.b16 %v2098, %v2096
          %v2237 = vpack.c.b16 %v2101, %v2099
          %v2238 = vpack.c.b16 %v2102, %v2100
          %v2239 = vpack.c.b16 %v2105, %v2103
          %v2240 = vpack.c.b16 %v2106, %v2104
          %v2241 = vpack.c.b16 %v2109, %v2107
          %v2242 = vpack.c.b16 %v2110, %v2108
          %v2243 = vpack.c.b16 %v2113, %v2111
          %v2244 = vpack.c.b16 %v2114, %v2112
          %v2245 = vpack.c.b16 %v2117, %v2115
          %v2246 = vpack.c.b16 %v2118, %v2116
          %2375 = vmatpush.bf16.msra.mxu0 %v2133
          %2376 = vmatpush.bf16.msra.mxu0 %v2131
          %2377 = vmatpush.bf16.msra.mxu0 %v2129
          %2378 = vmatpush.bf16.msra.mxu0 %v2127
          %2379 = vmatpush.bf16.msra.mxu0 %v2125
          %2380 = vmatpush.bf16.msra.mxu0 %v2123
          %2381 = vmatpush.bf16.msra.mxu0 %v2121
          %2382 = vmatpush.bf16.msra.mxu0 %v2119
          %2383 = vmatmul.bf16.gmra.mxu0 %v1719
          %v2384 = vpop.f32.mrf.mxu0
          %v2385 = vadd.f32 %v1703, %v2384
          %v2386 = vpop.f32.mrf.mxu0
          %2387 = vdwg.mxu0
          %2388 = vmatpush.bf16.msra.mxu0 %v2149
          %2389 = vmatpush.bf16.msra.mxu0 %v2147
          %2390 = vmatpush.bf16.msra.mxu0 %v2145
          %2391 = vmatpush.bf16.msra.mxu0 %v2143
          %2392 = vmatpush.bf16.msra.mxu0 %v2141
          %2393 = vmatpush.bf16.msra.mxu0 %v2139
          %2394 = vmatpush.bf16.msra.mxu0 %v2137
          %2395 = vmatpush.bf16.msra.mxu0 %v2135
          %2396 = vmatmul.bf16.gmra.mxu0 %v1720
          %v2397 = vpop.f32.mrf.mxu0
          %v2398 = vadd.f32 %v2385, %v2397
          %v2399 = vpop.f32.mrf.mxu0
          %2400 = vdwg.mxu0
          %2401 = vmatpush.bf16.msra.mxu0 %v2165
          %2402 = vmatpush.bf16.msra.mxu0 %v2163
          %2403 = vmatpush.bf16.msra.mxu0 %v2161
          %2404 = vmatpush.bf16.msra.mxu0 %v2159
          %2405 = vmatpush.bf16.msra.mxu0 %v2157
          %2406 = vmatpush.bf16.msra.mxu0 %v2155
          %2407 = vmatpush.bf16.msra.mxu0 %v2153
          %2408 = vmatpush.bf16.msra.mxu0 %v2151
          %2409 = vmatmul.bf16.gmra.mxu0 %v1721
          %v2410 = vpop.f32.mrf.mxu0
          %v2411 = vadd.f32 %v2398, %v2410
          %v2412 = vpop.f32.mrf.mxu0
          %2413 = vdwg.mxu0
          %2414 = vmatpush.bf16.msra.mxu0 %v2181
          %2415 = vmatpush.bf16.msra.mxu0 %v2179
          %2416 = vmatpush.bf16.msra.mxu0 %v2177
          %2417 = vmatpush.bf16.msra.mxu0 %v2175
          %2418 = vmatpush.bf16.msra.mxu0 %v2173
          %2419 = vmatpush.bf16.msra.mxu0 %v2171
          %2420 = vmatpush.bf16.msra.mxu0 %v2169
          %2421 = vmatpush.bf16.msra.mxu0 %v2167
          %2422 = vmatmul.bf16.gmra.mxu0 %v1722
          %v2423 = vpop.f32.mrf.mxu0
          %v2424 = vadd.f32 %v2411, %v2423
          %v2425 = vpop.f32.mrf.mxu0
          %2426 = vdwg.mxu0
          %2427 = vmatpush.bf16.msra.mxu0 %v2197
          %2428 = vmatpush.bf16.msra.mxu0 %v2195
          %2429 = vmatpush.bf16.msra.mxu0 %v2193
          %2430 = vmatpush.bf16.msra.mxu0 %v2191
          %2431 = vmatpush.bf16.msra.mxu0 %v2189
          %2432 = vmatpush.bf16.msra.mxu0 %v2187
          %2433 = vmatpush.bf16.msra.mxu0 %v2185
          %2434 = vmatpush.bf16.msra.mxu0 %v2183
          %2435 = vmatmul.bf16.gmra.mxu0 %v1723
          %v2436 = vpop.f32.mrf.mxu0
          %v2437 = vadd.f32 %v2424, %v2436
          %v2438 = vpop.f32.mrf.mxu0
          %2439 = vdwg.mxu0
          %2440 = vmatpush.bf16.msra.mxu0 %v2213
          %2441 = vmatpush.bf16.msra.mxu0 %v2211
          %2442 = vmatpush.bf16.msra.mxu0 %v2209
          %2443 = vmatpush.bf16.msra.mxu0 %v2207
          %2444 = vmatpush.bf16.msra.mxu0 %v2205
          %2445 = vmatpush.bf16.msra.mxu0 %v2203
          %2446 = vmatpush.bf16.msra.mxu0 %v2201
          %2447 = vmatpush.bf16.msra.mxu0 %v2199
          %2448 = vmatmul.bf16.gmra.mxu0 %v1724
          %v2449 = vpop.f32.mrf.mxu0
          %v2450 = vadd.f32 %v2437, %v2449
          %v2451 = vpop.f32.mrf.mxu0
          %2452 = vdwg.mxu0
          %2453 = vmatpush.bf16.msra.mxu0 %v2229
          %2454 = vmatpush.bf16.msra.mxu0 %v2227
          %2455 = vmatpush.bf16.msra.mxu0 %v2225
          %2456 = vmatpush.bf16.msra.mxu0 %v2223
          %2457 = vmatpush.bf16.msra.mxu0 %v2221
          %2458 = vmatpush.bf16.msra.mxu0 %v2219
          %2459 = vmatpush.bf16.msra.mxu0 %v2217
          %2460 = vmatpush.bf16.msra.mxu0 %v2215
          %2461 = vmatmul.bf16.gmra.mxu0 %v1725
          %v2462 = vpop.f32.mrf.mxu0
          %v2463 = vadd.f32 %v2450, %v2462
          %v2464 = vpop.f32.mrf.mxu0
          %2465 = vdwg.mxu0
          %2466 = vmatpush.bf16.msra.mxu0 %v2245
          %2467 = vmatpush.bf16.msra.mxu0 %v2243
          %2468 = vmatpush.bf16.msra.mxu0 %v2241
          %2469 = vmatpush.bf16.msra.mxu0 %v2239
          %2470 = vmatpush.bf16.msra.mxu0 %v2237
          %2471 = vmatpush.bf16.msra.mxu0 %v2235
          %2472 = vmatpush.bf16.msra.mxu0 %v2233
          %2473 = vmatpush.bf16.msra.mxu0 %v2231
          %2474 = vmatmul.bf16.gmra.mxu0 %v1726
          %v2475 = vpop.f32.mrf.mxu0
          %v2476 = vadd.f32 %v2463, %v2475
          %v2477 = vpop.f32.mrf.mxu0
          %2478 = vdwg.mxu0
          %2479 = vmatpush.bf16.msra.mxu0 %v2134
          %2480 = vmatpush.bf16.msra.mxu0 %v2132
          %2481 = vmatpush.bf16.msra.mxu0 %v2130
          %2482 = vmatpush.bf16.msra.mxu0 %v2128
          %2483 = vmatpush.bf16.msra.mxu0 %v2126
          %2484 = vmatpush.bf16.msra.mxu0 %v2124
          %2485 = vmatpush.bf16.msra.mxu0 %v2122
          %2486 = vmatpush.bf16.msra.mxu0 %v2120
          %2487 = vmatmul.bf16.gmra.mxu0 %v1719
          %v2488 = vpop.f32.mrf.mxu0
          %v2489 = vadd.f32 %v1704, %v2488
          %v2490 = vpop.f32.mrf.mxu0
          %2491 = vdwg.mxu0
          %2492 = vmatpush.bf16.msra.mxu0 %v2150
          %2493 = vmatpush.bf16.msra.mxu0 %v2148
          %2494 = vmatpush.bf16.msra.mxu0 %v2146
          %2495 = vmatpush.bf16.msra.mxu0 %v2144
          %2496 = vmatpush.bf16.msra.mxu0 %v2142
          %2497 = vmatpush.bf16.msra.mxu0 %v2140
          %2498 = vmatpush.bf16.msra.mxu0 %v2138
          %2499 = vmatpush.bf16.msra.mxu0 %v2136
          %2500 = vmatmul.bf16.gmra.mxu0 %v1720
          %v2501 = vpop.f32.mrf.mxu0
          %v2502 = vadd.f32 %v2489, %v2501
          %v2503 = vpop.f32.mrf.mxu0
          %2504 = vdwg.mxu0
          %2505 = vmatpush.bf16.msra.mxu0 %v2166
          %2506 = vmatpush.bf16.msra.mxu0 %v2164
          %2507 = vmatpush.bf16.msra.mxu0 %v2162
          %2508 = vmatpush.bf16.msra.mxu0 %v2160
          %2509 = vmatpush.bf16.msra.mxu0 %v2158
          %2510 = vmatpush.bf16.msra.mxu0 %v2156
          %2511 = vmatpush.bf16.msra.mxu0 %v2154
          %2512 = vmatpush.bf16.msra.mxu0 %v2152
          %2513 = vmatmul.bf16.gmra.mxu0 %v1721
          %v2514 = vpop.f32.mrf.mxu0
          %v2515 = vadd.f32 %v2502, %v2514
          %v2516 = vpop.f32.mrf.mxu0
          %2517 = vdwg.mxu0
          %2518 = vmatpush.bf16.msra.mxu0 %v2182
          %2519 = vmatpush.bf16.msra.mxu0 %v2180
          %2520 = vmatpush.bf16.msra.mxu0 %v2178
          %2521 = vmatpush.bf16.msra.mxu0 %v2176
          %2522 = vmatpush.bf16.msra.mxu0 %v2174
          %2523 = vmatpush.bf16.msra.mxu0 %v2172
          %2524 = vmatpush.bf16.msra.mxu0 %v2170
          %2525 = vmatpush.bf16.msra.mxu0 %v2168
          %2526 = vmatmul.bf16.gmra.mxu0 %v1722
          %v2527 = vpop.f32.mrf.mxu0
          %v2528 = vadd.f32 %v2515, %v2527
          %v2529 = vpop.f32.mrf.mxu0
          %2530 = vdwg.mxu0
          %2531 = vmatpush.bf16.msra.mxu0 %v2198
          %2532 = vmatpush.bf16.msra.mxu0 %v2196
          %2533 = vmatpush.bf16.msra.mxu0 %v2194
          %2534 = vmatpush.bf16.msra.mxu0 %v2192
          %2535 = vmatpush.bf16.msra.mxu0 %v2190
          %2536 = vmatpush.bf16.msra.mxu0 %v2188
          %2537 = vmatpush.bf16.msra.mxu0 %v2186
          %2538 = vmatpush.bf16.msra.mxu0 %v2184
          %2539 = vmatmul.bf16.gmra.mxu0 %v1723
          %v2540 = vpop.f32.mrf.mxu0
          %v2541 = vadd.f32 %v2528, %v2540
          %v2542 = vpop.f32.mrf.mxu0
          %2543 = vdwg.mxu0
          %2544 = vmatpush.bf16.msra.mxu0 %v2214
          %2545 = vmatpush.bf16.msra.mxu0 %v2212
          %2546 = vmatpush.bf16.msra.mxu0 %v2210
          %2547 = vmatpush.bf16.msra.mxu0 %v2208
          %2548 = vmatpush.bf16.msra.mxu0 %v2206
          %2549 = vmatpush.bf16.msra.mxu0 %v2204
          %2550 = vmatpush.bf16.msra.mxu0 %v2202
          %2551 = vmatpush.bf16.msra.mxu0 %v2200
          %2552 = vmatmul.bf16.gmra.mxu0 %v1724
          %v2553 = vpop.f32.mrf.mxu0
          %v2554 = vadd.f32 %v2541, %v2553
          %v2555 = vpop.f32.mrf.mxu0
          %2556 = vdwg.mxu0
          %2557 = vmatpush.bf16.msra.mxu0 %v2230
          %2558 = vmatpush.bf16.msra.mxu0 %v2228
          %2559 = vmatpush.bf16.msra.mxu0 %v2226
          %2560 = vmatpush.bf16.msra.mxu0 %v2224
          %2561 = vmatpush.bf16.msra.mxu0 %v2222
          %2562 = vmatpush.bf16.msra.mxu0 %v2220
          %2563 = vmatpush.bf16.msra.mxu0 %v2218
          %2564 = vmatpush.bf16.msra.mxu0 %v2216
          %2565 = vmatmul.bf16.gmra.mxu0 %v1725
          %v2566 = vpop.f32.mrf.mxu0
          %v2567 = vadd.f32 %v2554, %v2566
          %v2568 = vpop.f32.mrf.mxu0
          %2569 = vdwg.mxu0
          %2570 = vmatpush.bf16.msra.mxu0 %v2246
          %2571 = vmatpush.bf16.msra.mxu0 %v2244
          %2572 = vmatpush.bf16.msra.mxu0 %v2242
          %2573 = vmatpush.bf16.msra.mxu0 %v2240
          %2574 = vmatpush.bf16.msra.mxu0 %v2238
          %2575 = vmatpush.bf16.msra.mxu0 %v2236
          %2576 = vmatpush.bf16.msra.mxu0 %v2234
          %2577 = vmatpush.bf16.msra.mxu0 %v2232
          %2578 = vmatmul.bf16.gmra.mxu0 %v1726
          %v2579 = vpop.f32.mrf.mxu0
          %v2580 = vadd.f32 %v2567, %v2579
          %v2581 = vpop.f32.mrf.mxu0
          %2582 = vdwg.mxu0
          %v2583 = vld [vmem:[#allocation2] sm:$0xff]
          %v2584 = vld [vmem:[#allocation2 + $0x8] sm:$0xff]
          %v2585 = vld [vmem:[#allocation2 + $0x10] sm:$0xff]
          %v2586 = vld [vmem:[#allocation2 + $0x18] sm:$0xff]
          %v2587 = vld [vmem:[#allocation2 + $0x20] sm:$0xff]
          %v2588 = vld [vmem:[#allocation2 + $0x28] sm:$0xff]
          %v2589 = vld [vmem:[#allocation2 + $0x30] sm:$0xff]
          %v2590 = vld [vmem:[#allocation2 + $0x38] sm:$0xff]
          %v2591 = vpack.c.bf16 %v2583, %v2583
          %v2592 = vpack.c.bf16 %v2584, %v2584
          %v2593 = vpack.c.bf16 %v2585, %v2585
          %v2594 = vpack.c.bf16 %v2586, %v2586
          %v2595 = vpack.c.bf16 %v2587, %v2587
          %v2596 = vpack.c.bf16 %v2588, %v2588
          %v2597 = vpack.c.bf16 %v2589, %v2589
          %v2598 = vpack.c.bf16 %v2590, %v2590
          %v2599 = vld [vmem:[#allocation9] sm:$0xff]
          %v2600 = vld [vmem:[#allocation9 + $0x8] sm:$0xff]
          %v2601 = vld [vmem:[#allocation9 + $0x10] sm:$0xff]
          %v2602 = vld [vmem:[#allocation9 + $0x18] sm:$0xff]
          %v2603 = vld [vmem:[#allocation9 + $0x20] sm:$0xff]
          %v2604 = vld [vmem:[#allocation9 + $0x28] sm:$0xff]
          %v2605 = vld [vmem:[#allocation9 + $0x30] sm:$0xff]
          %v2606 = vld [vmem:[#allocation9 + $0x38] sm:$0xff]
          %v2607 = vld [vmem:[#allocation9 + $0x40] sm:$0xff]
          %v2608 = vld [vmem:[#allocation9 + $0x48] sm:$0xff]
          %v2609 = vld [vmem:[#allocation9 + $0x50] sm:$0xff]
          %v2610 = vld [vmem:[#allocation9 + $0x58] sm:$0xff]
          %v2611 = vld [vmem:[#allocation9 + $0x60] sm:$0xff]
          %v2612 = vld [vmem:[#allocation9 + $0x68] sm:$0xff]
          %v2613 = vld [vmem:[#allocation9 + $0x70] sm:$0xff]
          %v2614 = vld [vmem:[#allocation9 + $0x78] sm:$0xff]
          %v2615 = vld [vmem:[#allocation9 + $0x80] sm:$0xff]
          %v2616 = vld [vmem:[#allocation9 + $0x88] sm:$0xff]
          %v2617 = vld [vmem:[#allocation9 + $0x90] sm:$0xff]
          %v2618 = vld [vmem:[#allocation9 + $0x98] sm:$0xff]
          %v2619 = vld [vmem:[#allocation9 + $0xa0] sm:$0xff]
          %v2620 = vld [vmem:[#allocation9 + $0xa8] sm:$0xff]
          %v2621 = vld [vmem:[#allocation9 + $0xb0] sm:$0xff]
          %v2622 = vld [vmem:[#allocation9 + $0xb8] sm:$0xff]
          %v2623 = vld [vmem:[#allocation9 + $0xc0] sm:$0xff]
          %v2624 = vld [vmem:[#allocation9 + $0xc8] sm:$0xff]
          %v2625 = vld [vmem:[#allocation9 + $0xd0] sm:$0xff]
          %v2626 = vld [vmem:[#allocation9 + $0xd8] sm:$0xff]
          %v2627 = vld [vmem:[#allocation9 + $0xe0] sm:$0xff]
          %v2628 = vld [vmem:[#allocation9 + $0xe8] sm:$0xff]
          %v2629 = vld [vmem:[#allocation9 + $0xf0] sm:$0xff]
          %v2630 = vld [vmem:[#allocation9 + $0xf8] sm:$0xff]
          %v2631 = vld [vmem:[#allocation9 + $0x100] sm:$0xff]
          %v2632 = vld [vmem:[#allocation9 + $0x108] sm:$0xff]
          %v2633 = vld [vmem:[#allocation9 + $0x110] sm:$0xff]
          %v2634 = vld [vmem:[#allocation9 + $0x118] sm:$0xff]
          %v2635 = vld [vmem:[#allocation9 + $0x120] sm:$0xff]
          %v2636 = vld [vmem:[#allocation9 + $0x128] sm:$0xff]
          %v2637 = vld [vmem:[#allocation9 + $0x130] sm:$0xff]
          %v2638 = vld [vmem:[#allocation9 + $0x138] sm:$0xff]
          %v2639 = vld [vmem:[#allocation9 + $0x140] sm:$0xff]
          %v2640 = vld [vmem:[#allocation9 + $0x148] sm:$0xff]
          %v2641 = vld [vmem:[#allocation9 + $0x150] sm:$0xff]
          %v2642 = vld [vmem:[#allocation9 + $0x158] sm:$0xff]
          %v2643 = vld [vmem:[#allocation9 + $0x160] sm:$0xff]
          %v2644 = vld [vmem:[#allocation9 + $0x168] sm:$0xff]
          %v2645 = vld [vmem:[#allocation9 + $0x170] sm:$0xff]
          %v2646 = vld [vmem:[#allocation9 + $0x178] sm:$0xff]
          %v2647 = vld [vmem:[#allocation9 + $0x180] sm:$0xff]
          %v2648 = vld [vmem:[#allocation9 + $0x188] sm:$0xff]
          %v2649 = vld [vmem:[#allocation9 + $0x190] sm:$0xff]
          %v2650 = vld [vmem:[#allocation9 + $0x198] sm:$0xff]
          %v2651 = vld [vmem:[#allocation9 + $0x1a0] sm:$0xff]
          %v2652 = vld [vmem:[#allocation9 + $0x1a8] sm:$0xff]
          %v2653 = vld [vmem:[#allocation9 + $0x1b0] sm:$0xff]
          %v2654 = vld [vmem:[#allocation9 + $0x1b8] sm:$0xff]
          %v2655 = vld [vmem:[#allocation9 + $0x1c0] sm:$0xff]
          %v2656 = vld [vmem:[#allocation9 + $0x1c8] sm:$0xff]
          %v2657 = vld [vmem:[#allocation9 + $0x1d0] sm:$0xff]
          %v2658 = vld [vmem:[#allocation9 + $0x1d8] sm:$0xff]
          %v2659 = vld [vmem:[#allocation9 + $0x1e0] sm:$0xff]
          %v2660 = vld [vmem:[#allocation9 + $0x1e8] sm:$0xff]
          %v2661 = vld [vmem:[#allocation9 + $0x1f0] sm:$0xff]
          %v2662 = vld [vmem:[#allocation9 + $0x1f8] sm:$0xff]
          %v2663 = vld [vmem:[#allocation9 + $0x200] sm:$0xff]
          %v2664 = vld [vmem:[#allocation9 + $0x208] sm:$0xff]
          %v2665 = vld [vmem:[#allocation9 + $0x210] sm:$0xff]
          %v2666 = vld [vmem:[#allocation9 + $0x218] sm:$0xff]
          %v2667 = vld [vmem:[#allocation9 + $0x220] sm:$0xff]
          %v2668 = vld [vmem:[#allocation9 + $0x228] sm:$0xff]
          %v2669 = vld [vmem:[#allocation9 + $0x230] sm:$0xff]
          %v2670 = vld [vmem:[#allocation9 + $0x238] sm:$0xff]
          %v2671 = vld [vmem:[#allocation9 + $0x240] sm:$0xff]
          %v2672 = vld [vmem:[#allocation9 + $0x248] sm:$0xff]
          %v2673 = vld [vmem:[#allocation9 + $0x250] sm:$0xff]
          %v2674 = vld [vmem:[#allocation9 + $0x258] sm:$0xff]
          %v2675 = vld [vmem:[#allocation9 + $0x260] sm:$0xff]
          %v2676 = vld [vmem:[#allocation9 + $0x268] sm:$0xff]
          %v2677 = vld [vmem:[#allocation9 + $0x270] sm:$0xff]
          %v2678 = vld [vmem:[#allocation9 + $0x278] sm:$0xff]
          %v2679 = vld [vmem:[#allocation9 + $0x280] sm:$0xff]
          %v2680 = vld [vmem:[#allocation9 + $0x288] sm:$0xff]
          %v2681 = vld [vmem:[#allocation9 + $0x290] sm:$0xff]
          %v2682 = vld [vmem:[#allocation9 + $0x298] sm:$0xff]
          %v2683 = vld [vmem:[#allocation9 + $0x2a0] sm:$0xff]
          %v2684 = vld [vmem:[#allocation9 + $0x2a8] sm:$0xff]
          %v2685 = vld [vmem:[#allocation9 + $0x2b0] sm:$0xff]
          %v2686 = vld [vmem:[#allocation9 + $0x2b8] sm:$0xff]
          %v2687 = vld [vmem:[#allocation9 + $0x2c0] sm:$0xff]
          %v2688 = vld [vmem:[#allocation9 + $0x2c8] sm:$0xff]
          %v2689 = vld [vmem:[#allocation9 + $0x2d0] sm:$0xff]
          %v2690 = vld [vmem:[#allocation9 + $0x2d8] sm:$0xff]
          %v2691 = vld [vmem:[#allocation9 + $0x2e0] sm:$0xff]
          %v2692 = vld [vmem:[#allocation9 + $0x2e8] sm:$0xff]
          %v2693 = vld [vmem:[#allocation9 + $0x2f0] sm:$0xff]
          %v2694 = vld [vmem:[#allocation9 + $0x2f8] sm:$0xff]
          %v2695 = vld [vmem:[#allocation9 + $0x300] sm:$0xff]
          %v2696 = vld [vmem:[#allocation9 + $0x308] sm:$0xff]
          %v2697 = vld [vmem:[#allocation9 + $0x310] sm:$0xff]
          %v2698 = vld [vmem:[#allocation9 + $0x318] sm:$0xff]
          %v2699 = vld [vmem:[#allocation9 + $0x320] sm:$0xff]
          %v2700 = vld [vmem:[#allocation9 + $0x328] sm:$0xff]
          %v2701 = vld [vmem:[#allocation9 + $0x330] sm:$0xff]
          %v2702 = vld [vmem:[#allocation9 + $0x338] sm:$0xff]
          %v2703 = vld [vmem:[#allocation9 + $0x340] sm:$0xff]
          %v2704 = vld [vmem:[#allocation9 + $0x348] sm:$0xff]
          %v2705 = vld [vmem:[#allocation9 + $0x350] sm:$0xff]
          %v2706 = vld [vmem:[#allocation9 + $0x358] sm:$0xff]
          %v2707 = vld [vmem:[#allocation9 + $0x360] sm:$0xff]
          %v2708 = vld [vmem:[#allocation9 + $0x368] sm:$0xff]
          %v2709 = vld [vmem:[#allocation9 + $0x370] sm:$0xff]
          %v2710 = vld [vmem:[#allocation9 + $0x378] sm:$0xff]
          %v2711 = vld [vmem:[#allocation9 + $0x380] sm:$0xff]
          %v2712 = vld [vmem:[#allocation9 + $0x388] sm:$0xff]
          %v2713 = vld [vmem:[#allocation9 + $0x390] sm:$0xff]
          %v2714 = vld [vmem:[#allocation9 + $0x398] sm:$0xff]
          %v2715 = vld [vmem:[#allocation9 + $0x3a0] sm:$0xff]
          %v2716 = vld [vmem:[#allocation9 + $0x3a8] sm:$0xff]
          %v2717 = vld [vmem:[#allocation9 + $0x3b0] sm:$0xff]
          %v2718 = vld [vmem:[#allocation9 + $0x3b8] sm:$0xff]
          %v2719 = vld [vmem:[#allocation9 + $0x3c0] sm:$0xff]
          %v2720 = vld [vmem:[#allocation9 + $0x3c8] sm:$0xff]
          %v2721 = vld [vmem:[#allocation9 + $0x3d0] sm:$0xff]
          %v2722 = vld [vmem:[#allocation9 + $0x3d8] sm:$0xff]
          %v2723 = vld [vmem:[#allocation9 + $0x3e0] sm:$0xff]
          %v2724 = vld [vmem:[#allocation9 + $0x3e8] sm:$0xff]
          %v2725 = vld [vmem:[#allocation9 + $0x3f0] sm:$0xff]
          %v2726 = vld [vmem:[#allocation9 + $0x3f8] sm:$0xff]
          %v2855 = vunpack.c.l.b16 %v2599
          %v2856 = vunpack.c.h.b16 %v2599
          %v2857 = vunpack.c.l.b16 %v2600
          %v2858 = vunpack.c.h.b16 %v2600
          %v2859 = vunpack.c.l.b16 %v2601
          %v2860 = vunpack.c.h.b16 %v2601
          %v2861 = vunpack.c.l.b16 %v2602
          %v2862 = vunpack.c.h.b16 %v2602
          %v2863 = vunpack.c.l.b16 %v2603
          %v2864 = vunpack.c.h.b16 %v2603
          %v2865 = vunpack.c.l.b16 %v2604
          %v2866 = vunpack.c.h.b16 %v2604
          %v2867 = vunpack.c.l.b16 %v2605
          %v2868 = vunpack.c.h.b16 %v2605
          %v2869 = vunpack.c.l.b16 %v2606
          %v2870 = vunpack.c.h.b16 %v2606
          %v2871 = vunpack.c.l.b16 %v2607
          %v2872 = vunpack.c.h.b16 %v2607
          %v2873 = vunpack.c.l.b16 %v2608
          %v2874 = vunpack.c.h.b16 %v2608
          %v2875 = vunpack.c.l.b16 %v2609
          %v2876 = vunpack.c.h.b16 %v2609
          %v2877 = vunpack.c.l.b16 %v2610
          %v2878 = vunpack.c.h.b16 %v2610
          %v2879 = vunpack.c.l.b16 %v2611
          %v2880 = vunpack.c.h.b16 %v2611
          %v2881 = vunpack.c.l.b16 %v2612
          %v2882 = vunpack.c.h.b16 %v2612
          %v2883 = vunpack.c.l.b16 %v2613
          %v2884 = vunpack.c.h.b16 %v2613
          %v2885 = vunpack.c.l.b16 %v2614
          %v2886 = vunpack.c.h.b16 %v2614
          %v2887 = vunpack.c.l.b16 %v2615
          %v2888 = vunpack.c.h.b16 %v2615
          %v2889 = vunpack.c.l.b16 %v2616
          %v2890 = vunpack.c.h.b16 %v2616
          %v2891 = vunpack.c.l.b16 %v2617
          %v2892 = vunpack.c.h.b16 %v2617
          %v2893 = vunpack.c.l.b16 %v2618
          %v2894 = vunpack.c.h.b16 %v2618
          %v2895 = vunpack.c.l.b16 %v2619
          %v2896 = vunpack.c.h.b16 %v2619
          %v2897 = vunpack.c.l.b16 %v2620
          %v2898 = vunpack.c.h.b16 %v2620
          %v2899 = vunpack.c.l.b16 %v2621
          %v2900 = vunpack.c.h.b16 %v2621
          %v2901 = vunpack.c.l.b16 %v2622
          %v2902 = vunpack.c.h.b16 %v2622
          %v2903 = vunpack.c.l.b16 %v2623
          %v2904 = vunpack.c.h.b16 %v2623
          %v2905 = vunpack.c.l.b16 %v2624
          %v2906 = vunpack.c.h.b16 %v2624
          %v2907 = vunpack.c.l.b16 %v2625
          %v2908 = vunpack.c.h.b16 %v2625
          %v2909 = vunpack.c.l.b16 %v2626
          %v2910 = vunpack.c.h.b16 %v2626
          %v2911 = vunpack.c.l.b16 %v2627
          %v2912 = vunpack.c.h.b16 %v2627
          %v2913 = vunpack.c.l.b16 %v2628
          %v2914 = vunpack.c.h.b16 %v2628
          %v2915 = vunpack.c.l.b16 %v2629
          %v2916 = vunpack.c.h.b16 %v2629
          %v2917 = vunpack.c.l.b16 %v2630
          %v2918 = vunpack.c.h.b16 %v2630
          %v2919 = vunpack.c.l.b16 %v2631
          %v2920 = vunpack.c.h.b16 %v2631
          %v2921 = vunpack.c.l.b16 %v2632
          %v2922 = vunpack.c.h.b16 %v2632
          %v2923 = vunpack.c.l.b16 %v2633
          %v2924 = vunpack.c.h.b16 %v2633
          %v2925 = vunpack.c.l.b16 %v2634
          %v2926 = vunpack.c.h.b16 %v2634
          %v2927 = vunpack.c.l.b16 %v2635
          %v2928 = vunpack.c.h.b16 %v2635
          %v2929 = vunpack.c.l.b16 %v2636
          %v2930 = vunpack.c.h.b16 %v2636
          %v2931 = vunpack.c.l.b16 %v2637
          %v2932 = vunpack.c.h.b16 %v2637
          %v2933 = vunpack.c.l.b16 %v2638
          %v2934 = vunpack.c.h.b16 %v2638
          %v2935 = vunpack.c.l.b16 %v2639
          %v2936 = vunpack.c.h.b16 %v2639
          %v2937 = vunpack.c.l.b16 %v2640
          %v2938 = vunpack.c.h.b16 %v2640
          %v2939 = vunpack.c.l.b16 %v2641
          %v2940 = vunpack.c.h.b16 %v2641
          %v2941 = vunpack.c.l.b16 %v2642
          %v2942 = vunpack.c.h.b16 %v2642
          %v2943 = vunpack.c.l.b16 %v2643
          %v2944 = vunpack.c.h.b16 %v2643
          %v2945 = vunpack.c.l.b16 %v2644
          %v2946 = vunpack.c.h.b16 %v2644
          %v2947 = vunpack.c.l.b16 %v2645
          %v2948 = vunpack.c.h.b16 %v2645
          %v2949 = vunpack.c.l.b16 %v2646
          %v2950 = vunpack.c.h.b16 %v2646
          %v2951 = vunpack.c.l.b16 %v2647
          %v2952 = vunpack.c.h.b16 %v2647
          %v2953 = vunpack.c.l.b16 %v2648
          %v2954 = vunpack.c.h.b16 %v2648
          %v2955 = vunpack.c.l.b16 %v2649
          %v2956 = vunpack.c.h.b16 %v2649
          %v2957 = vunpack.c.l.b16 %v2650
          %v2958 = vunpack.c.h.b16 %v2650
          %v2959 = vunpack.c.l.b16 %v2651
          %v2960 = vunpack.c.h.b16 %v2651
          %v2961 = vunpack.c.l.b16 %v2652
          %v2962 = vunpack.c.h.b16 %v2652
          %v2963 = vunpack.c.l.b16 %v2653
          %v2964 = vunpack.c.h.b16 %v2653
          %v2965 = vunpack.c.l.b16 %v2654
          %v2966 = vunpack.c.h.b16 %v2654
          %v2967 = vunpack.c.l.b16 %v2655
          %v2968 = vunpack.c.h.b16 %v2655
          %v2969 = vunpack.c.l.b16 %v2656
          %v2970 = vunpack.c.h.b16 %v2656
          %v2971 = vunpack.c.l.b16 %v2657
          %v2972 = vunpack.c.h.b16 %v2657
          %v2973 = vunpack.c.l.b16 %v2658
          %v2974 = vunpack.c.h.b16 %v2658
          %v2975 = vunpack.c.l.b16 %v2659
          %v2976 = vunpack.c.h.b16 %v2659
          %v2977 = vunpack.c.l.b16 %v2660
          %v2978 = vunpack.c.h.b16 %v2660
          %v2979 = vunpack.c.l.b16 %v2661
          %v2980 = vunpack.c.h.b16 %v2661
          %v2981 = vunpack.c.l.b16 %v2662
          %v2982 = vunpack.c.h.b16 %v2662
          %v2983 = vunpack.c.l.b16 %v2663
          %v2984 = vunpack.c.h.b16 %v2663
          %v2985 = vunpack.c.l.b16 %v2664
          %v2986 = vunpack.c.h.b16 %v2664
          %v2987 = vunpack.c.l.b16 %v2665
          %v2988 = vunpack.c.h.b16 %v2665
          %v2989 = vunpack.c.l.b16 %v2666
          %v2990 = vunpack.c.h.b16 %v2666
          %v2991 = vunpack.c.l.b16 %v2667
          %v2992 = vunpack.c.h.b16 %v2667
          %v2993 = vunpack.c.l.b16 %v2668
          %v2994 = vunpack.c.h.b16 %v2668
          %v2995 = vunpack.c.l.b16 %v2669
          %v2996 = vunpack.c.h.b16 %v2669
          %v2997 = vunpack.c.l.b16 %v2670
          %v2998 = vunpack.c.h.b16 %v2670
          %v2999 = vunpack.c.l.b16 %v2671
          %v3000 = vunpack.c.h.b16 %v2671
          %v3001 = vunpack.c.l.b16 %v2672
          %v3002 = vunpack.c.h.b16 %v2672
          %v3003 = vunpack.c.l.b16 %v2673
          %v3004 = vunpack.c.h.b16 %v2673
          %v3005 = vunpack.c.l.b16 %v2674
          %v3006 = vunpack.c.h.b16 %v2674
          %v3007 = vunpack.c.l.b16 %v2675
          %v3008 = vunpack.c.h.b16 %v2675
          %v3009 = vunpack.c.l.b16 %v2676
          %v3010 = vunpack.c.h.b16 %v2676
          %v3011 = vunpack.c.l.b16 %v2677
          %v3012 = vunpack.c.h.b16 %v2677
          %v3013 = vunpack.c.l.b16 %v2678
          %v3014 = vunpack.c.h.b16 %v2678
          %v3015 = vunpack.c.l.b16 %v2679
          %v3016 = vunpack.c.h.b16 %v2679
          %v3017 = vunpack.c.l.b16 %v2680
          %v3018 = vunpack.c.h.b16 %v2680
          %v3019 = vunpack.c.l.b16 %v2681
          %v3020 = vunpack.c.h.b16 %v2681
          %v3021 = vunpack.c.l.b16 %v2682
          %v3022 = vunpack.c.h.b16 %v2682
          %v3023 = vunpack.c.l.b16 %v2683
          %v3024 = vunpack.c.h.b16 %v2683
          %v3025 = vunpack.c.l.b16 %v2684
          %v3026 = vunpack.c.h.b16 %v2684
          %v3027 = vunpack.c.l.b16 %v2685
          %v3028 = vunpack.c.h.b16 %v2685
          %v3029 = vunpack.c.l.b16 %v2686
          %v3030 = vunpack.c.h.b16 %v2686
          %v3031 = vunpack.c.l.b16 %v2687
          %v3032 = vunpack.c.h.b16 %v2687
          %v3033 = vunpack.c.l.b16 %v2688
          %v3034 = vunpack.c.h.b16 %v2688
          %v3035 = vunpack.c.l.b16 %v2689
          %v3036 = vunpack.c.h.b16 %v2689
          %v3037 = vunpack.c.l.b16 %v2690
          %v3038 = vunpack.c.h.b16 %v2690
          %v3039 = vunpack.c.l.b16 %v2691
          %v3040 = vunpack.c.h.b16 %v2691
          %v3041 = vunpack.c.l.b16 %v2692
          %v3042 = vunpack.c.h.b16 %v2692
          %v3043 = vunpack.c.l.b16 %v2693
          %v3044 = vunpack.c.h.b16 %v2693
          %v3045 = vunpack.c.l.b16 %v2694
          %v3046 = vunpack.c.h.b16 %v2694
          %v3047 = vunpack.c.l.b16 %v2695
          %v3048 = vunpack.c.h.b16 %v2695
          %v3049 = vunpack.c.l.b16 %v2696
          %v3050 = vunpack.c.h.b16 %v2696
          %v3051 = vunpack.c.l.b16 %v2697
          %v3052 = vunpack.c.h.b16 %v2697
          %v3053 = vunpack.c.l.b16 %v2698
          %v3054 = vunpack.c.h.b16 %v2698
          %v3055 = vunpack.c.l.b16 %v2699
          %v3056 = vunpack.c.h.b16 %v2699
          %v3057 = vunpack.c.l.b16 %v2700
          %v3058 = vunpack.c.h.b16 %v2700
          %v3059 = vunpack.c.l.b16 %v2701
          %v3060 = vunpack.c.h.b16 %v2701
          %v3061 = vunpack.c.l.b16 %v2702
          %v3062 = vunpack.c.h.b16 %v2702
          %v3063 = vunpack.c.l.b16 %v2703
          %v3064 = vunpack.c.h.b16 %v2703
          %v3065 = vunpack.c.l.b16 %v2704
          %v3066 = vunpack.c.h.b16 %v2704
          %v3067 = vunpack.c.l.b16 %v2705
          %v3068 = vunpack.c.h.b16 %v2705
          %v3069 = vunpack.c.l.b16 %v2706
          %v3070 = vunpack.c.h.b16 %v2706
          %v3071 = vunpack.c.l.b16 %v2707
          %v3072 = vunpack.c.h.b16 %v2707
          %v3073 = vunpack.c.l.b16 %v2708
          %v3074 = vunpack.c.h.b16 %v2708
          %v3075 = vunpack.c.l.b16 %v2709
          %v3076 = vunpack.c.h.b16 %v2709
          %v3077 = vunpack.c.l.b16 %v2710
          %v3078 = vunpack.c.h.b16 %v2710
          %v3079 = vunpack.c.l.b16 %v2711
          %v3080 = vunpack.c.h.b16 %v2711
          %v3081 = vunpack.c.l.b16 %v2712
          %v3082 = vunpack.c.h.b16 %v2712
          %v3083 = vunpack.c.l.b16 %v2713
          %v3084 = vunpack.c.h.b16 %v2713
          %v3085 = vunpack.c.l.b16 %v2714
          %v3086 = vunpack.c.h.b16 %v2714
          %v3087 = vunpack.c.l.b16 %v2715
          %v3088 = vunpack.c.h.b16 %v2715
          %v3089 = vunpack.c.l.b16 %v2716
          %v3090 = vunpack.c.h.b16 %v2716
          %v3091 = vunpack.c.l.b16 %v2717
          %v3092 = vunpack.c.h.b16 %v2717
          %v3093 = vunpack.c.l.b16 %v2718
          %v3094 = vunpack.c.h.b16 %v2718
          %v3095 = vunpack.c.l.b16 %v2719
          %v3096 = vunpack.c.h.b16 %v2719
          %v3097 = vunpack.c.l.b16 %v2720
          %v3098 = vunpack.c.h.b16 %v2720
          %v3099 = vunpack.c.l.b16 %v2721
          %v3100 = vunpack.c.h.b16 %v2721
          %v3101 = vunpack.c.l.b16 %v2722
          %v3102 = vunpack.c.h.b16 %v2722
          %v3103 = vunpack.c.l.b16 %v2723
          %v3104 = vunpack.c.h.b16 %v2723
          %v3105 = vunpack.c.l.b16 %v2724
          %v3106 = vunpack.c.h.b16 %v2724
          %v3107 = vunpack.c.l.b16 %v2725
          %v3108 = vunpack.c.h.b16 %v2725
          %v3109 = vunpack.c.l.b16 %v2726
          %v3110 = vunpack.c.h.b16 %v2726
          %v3111 = vpack.c.b16 %v2857, %v2855
          %v3112 = vpack.c.b16 %v2858, %v2856
          %v3113 = vpack.c.b16 %v2861, %v2859
          %v3114 = vpack.c.b16 %v2862, %v2860
          %v3115 = vpack.c.b16 %v2865, %v2863
          %v3116 = vpack.c.b16 %v2866, %v2864
          %v3117 = vpack.c.b16 %v2869, %v2867
          %v3118 = vpack.c.b16 %v2870, %v2868
          %v3119 = vpack.c.b16 %v2873, %v2871
          %v3120 = vpack.c.b16 %v2874, %v2872
          %v3121 = vpack.c.b16 %v2877, %v2875
          %v3122 = vpack.c.b16 %v2878, %v2876
          %v3123 = vpack.c.b16 %v2881, %v2879
          %v3124 = vpack.c.b16 %v2882, %v2880
          %v3125 = vpack.c.b16 %v2885, %v2883
          %v3126 = vpack.c.b16 %v2886, %v2884
          %v3127 = vpack.c.b16 %v2889, %v2887
          %v3128 = vpack.c.b16 %v2890, %v2888
          %v3129 = vpack.c.b16 %v2893, %v2891
          %v3130 = vpack.c.b16 %v2894, %v2892
          %v3131 = vpack.c.b16 %v2897, %v2895
          %v3132 = vpack.c.b16 %v2898, %v2896
          %v3133 = vpack.c.b16 %v2901, %v2899
          %v3134 = vpack.c.b16 %v2902, %v2900
          %v3135 = vpack.c.b16 %v2905, %v2903
          %v3136 = vpack.c.b16 %v2906, %v2904
          %v3137 = vpack.c.b16 %v2909, %v2907
          %v3138 = vpack.c.b16 %v2910, %v2908
          %v3139 = vpack.c.b16 %v2913, %v2911
          %v3140 = vpack.c.b16 %v2914, %v2912
          %v3141 = vpack.c.b16 %v2917, %v2915
          %v3142 = vpack.c.b16 %v2918, %v2916
          %v3143 = vpack.c.b16 %v2921, %v2919
          %v3144 = vpack.c.b16 %v2922, %v2920
          %v3145 = vpack.c.b16 %v2925, %v2923
          %v3146 = vpack.c.b16 %v2926, %v2924
          %v3147 = vpack.c.b16 %v2929, %v2927
          %v3148 = vpack.c.b16 %v2930, %v2928
          %v3149 = vpack.c.b16 %v2933, %v2931
          %v3150 = vpack.c.b16 %v2934, %v2932
          %v3151 = vpack.c.b16 %v2937, %v2935
          %v3152 = vpack.c.b16 %v2938, %v2936
          %v3153 = vpack.c.b16 %v2941, %v2939
          %v3154 = vpack.c.b16 %v2942, %v2940
          %v3155 = vpack.c.b16 %v2945, %v2943
          %v3156 = vpack.c.b16 %v2946, %v2944
          %v3157 = vpack.c.b16 %v2949, %v2947
          %v3158 = vpack.c.b16 %v2950, %v2948
          %v3159 = vpack.c.b16 %v2953, %v2951
          %v3160 = vpack.c.b16 %v2954, %v2952
          %v3161 = vpack.c.b16 %v2957, %v2955
          %v3162 = vpack.c.b16 %v2958, %v2956
          %v3163 = vpack.c.b16 %v2961, %v2959
          %v3164 = vpack.c.b16 %v2962, %v2960
          %v3165 = vpack.c.b16 %v2965, %v2963
          %v3166 = vpack.c.b16 %v2966, %v2964
          %v3167 = vpack.c.b16 %v2969, %v2967
          %v3168 = vpack.c.b16 %v2970, %v2968
          %v3169 = vpack.c.b16 %v2973, %v2971
          %v3170 = vpack.c.b16 %v2974, %v2972
          %v3171 = vpack.c.b16 %v2977, %v2975
          %v3172 = vpack.c.b16 %v2978, %v2976
          %v3173 = vpack.c.b16 %v2981, %v2979
          %v3174 = vpack.c.b16 %v2982, %v2980
          %v3175 = vpack.c.b16 %v2985, %v2983
          %v3176 = vpack.c.b16 %v2986, %v2984
          %v3177 = vpack.c.b16 %v2989, %v2987
          %v3178 = vpack.c.b16 %v2990, %v2988
          %v3179 = vpack.c.b16 %v2993, %v2991
          %v3180 = vpack.c.b16 %v2994, %v2992
          %v3181 = vpack.c.b16 %v2997, %v2995
          %v3182 = vpack.c.b16 %v2998, %v2996
          %v3183 = vpack.c.b16 %v3001, %v2999
          %v3184 = vpack.c.b16 %v3002, %v3000
          %v3185 = vpack.c.b16 %v3005, %v3003
          %v3186 = vpack.c.b16 %v3006, %v3004
          %v3187 = vpack.c.b16 %v3009, %v3007
          %v3188 = vpack.c.b16 %v3010, %v3008
          %v3189 = vpack.c.b16 %v3013, %v3011
          %v3190 = vpack.c.b16 %v3014, %v3012
          %v3191 = vpack.c.b16 %v3017, %v3015
          %v3192 = vpack.c.b16 %v3018, %v3016
          %v3193 = vpack.c.b16 %v3021, %v3019
          %v3194 = vpack.c.b16 %v3022, %v3020
          %v3195 = vpack.c.b16 %v3025, %v3023
          %v3196 = vpack.c.b16 %v3026, %v3024
          %v3197 = vpack.c.b16 %v3029, %v3027
          %v3198 = vpack.c.b16 %v3030, %v3028
          %v3199 = vpack.c.b16 %v3033, %v3031
          %v3200 = vpack.c.b16 %v3034, %v3032
          %v3201 = vpack.c.b16 %v3037, %v3035
          %v3202 = vpack.c.b16 %v3038, %v3036
          %v3203 = vpack.c.b16 %v3041, %v3039
          %v3204 = vpack.c.b16 %v3042, %v3040
          %v3205 = vpack.c.b16 %v3045, %v3043
          %v3206 = vpack.c.b16 %v3046, %v3044
          %v3207 = vpack.c.b16 %v3049, %v3047
          %v3208 = vpack.c.b16 %v3050, %v3048
          %v3209 = vpack.c.b16 %v3053, %v3051
          %v3210 = vpack.c.b16 %v3054, %v3052
          %v3211 = vpack.c.b16 %v3057, %v3055
          %v3212 = vpack.c.b16 %v3058, %v3056
          %v3213 = vpack.c.b16 %v3061, %v3059
          %v3214 = vpack.c.b16 %v3062, %v3060
          %v3215 = vpack.c.b16 %v3065, %v3063
          %v3216 = vpack.c.b16 %v3066, %v3064
          %v3217 = vpack.c.b16 %v3069, %v3067
          %v3218 = vpack.c.b16 %v3070, %v3068
          %v3219 = vpack.c.b16 %v3073, %v3071
          %v3220 = vpack.c.b16 %v3074, %v3072
          %v3221 = vpack.c.b16 %v3077, %v3075
          %v3222 = vpack.c.b16 %v3078, %v3076
          %v3223 = vpack.c.b16 %v3081, %v3079
          %v3224 = vpack.c.b16 %v3082, %v3080
          %v3225 = vpack.c.b16 %v3085, %v3083
          %v3226 = vpack.c.b16 %v3086, %v3084
          %v3227 = vpack.c.b16 %v3089, %v3087
          %v3228 = vpack.c.b16 %v3090, %v3088
          %v3229 = vpack.c.b16 %v3093, %v3091
          %v3230 = vpack.c.b16 %v3094, %v3092
          %v3231 = vpack.c.b16 %v3097, %v3095
          %v3232 = vpack.c.b16 %v3098, %v3096
          %v3233 = vpack.c.b16 %v3101, %v3099
          %v3234 = vpack.c.b16 %v3102, %v3100
          %v3235 = vpack.c.b16 %v3105, %v3103
          %v3236 = vpack.c.b16 %v3106, %v3104
          %v3237 = vpack.c.b16 %v3109, %v3107
          %v3238 = vpack.c.b16 %v3110, %v3108
          %3367 = vmatpush.bf16.msra.mxu0 %v3125
          %3368 = vmatpush.bf16.msra.mxu0 %v3123
          %3369 = vmatpush.bf16.msra.mxu0 %v3121
          %3370 = vmatpush.bf16.msra.mxu0 %v3119
          %3371 = vmatpush.bf16.msra.mxu0 %v3117
          %3372 = vmatpush.bf16.msra.mxu0 %v3115
          %3373 = vmatpush.bf16.msra.mxu0 %v3113
          %3374 = vmatpush.bf16.msra.mxu0 %v3111
          %3375 = vmatmul.bf16.gmra.mxu0 %v2591
          %v3376 = vpop.f32.mrf.mxu0
          %v3377 = vadd.f32 0.0, %v3376
          %v3378 = vpop.f32.mrf.mxu0
          %3379 = vdwg.mxu0
          %3380 = vmatpush.bf16.msra.mxu0 %v3141
          %3381 = vmatpush.bf16.msra.mxu0 %v3139
          %3382 = vmatpush.bf16.msra.mxu0 %v3137
          %3383 = vmatpush.bf16.msra.mxu0 %v3135
          %3384 = vmatpush.bf16.msra.mxu0 %v3133
          %3385 = vmatpush.bf16.msra.mxu0 %v3131
          %3386 = vmatpush.bf16.msra.mxu0 %v3129
          %3387 = vmatpush.bf16.msra.mxu0 %v3127
          %3388 = vmatmul.bf16.gmra.mxu0 %v2592
          %v3389 = vpop.f32.mrf.mxu0
          %v3390 = vadd.f32 %v3377, %v3389
          %v3391 = vpop.f32.mrf.mxu0
          %3392 = vdwg.mxu0
          %3393 = vmatpush.bf16.msra.mxu0 %v3157
          %3394 = vmatpush.bf16.msra.mxu0 %v3155
          %3395 = vmatpush.bf16.msra.mxu0 %v3153
          %3396 = vmatpush.bf16.msra.mxu0 %v3151
          %3397 = vmatpush.bf16.msra.mxu0 %v3149
          %3398 = vmatpush.bf16.msra.mxu0 %v3147
          %3399 = vmatpush.bf16.msra.mxu0 %v3145
          %3400 = vmatpush.bf16.msra.mxu0 %v3143
          %3401 = vmatmul.bf16.gmra.mxu0 %v2593
          %v3402 = vpop.f32.mrf.mxu0
          %v3403 = vadd.f32 %v3390, %v3402
          %v3404 = vpop.f32.mrf.mxu0
          %3405 = vdwg.mxu0
          %3406 = vmatpush.bf16.msra.mxu0 %v3173
          %3407 = vmatpush.bf16.msra.mxu0 %v3171
          %3408 = vmatpush.bf16.msra.mxu0 %v3169
          %3409 = vmatpush.bf16.msra.mxu0 %v3167
          %3410 = vmatpush.bf16.msra.mxu0 %v3165
          %3411 = vmatpush.bf16.msra.mxu0 %v3163
          %3412 = vmatpush.bf16.msra.mxu0 %v3161
          %3413 = vmatpush.bf16.msra.mxu0 %v3159
          %3414 = vmatmul.bf16.gmra.mxu0 %v2594
          %v3415 = vpop.f32.mrf.mxu0
          %v3416 = vadd.f32 %v3403, %v3415
          %v3417 = vpop.f32.mrf.mxu0
          %3418 = vdwg.mxu0
          %3419 = vmatpush.bf16.msra.mxu0 %v3189
          %3420 = vmatpush.bf16.msra.mxu0 %v3187
          %3421 = vmatpush.bf16.msra.mxu0 %v3185
          %3422 = vmatpush.bf16.msra.mxu0 %v3183
          %3423 = vmatpush.bf16.msra.mxu0 %v3181
          %3424 = vmatpush.bf16.msra.mxu0 %v3179
          %3425 = vmatpush.bf16.msra.mxu0 %v3177
          %3426 = vmatpush.bf16.msra.mxu0 %v3175
          %3427 = vmatmul.bf16.gmra.mxu0 %v2595
          %v3428 = vpop.f32.mrf.mxu0
          %v3429 = vadd.f32 %v3416, %v3428
          %v3430 = vpop.f32.mrf.mxu0
          %3431 = vdwg.mxu0
          %3432 = vmatpush.bf16.msra.mxu0 %v3205
          %3433 = vmatpush.bf16.msra.mxu0 %v3203
          %3434 = vmatpush.bf16.msra.mxu0 %v3201
          %3435 = vmatpush.bf16.msra.mxu0 %v3199
          %3436 = vmatpush.bf16.msra.mxu0 %v3197
          %3437 = vmatpush.bf16.msra.mxu0 %v3195
          %3438 = vmatpush.bf16.msra.mxu0 %v3193
          %3439 = vmatpush.bf16.msra.mxu0 %v3191
          %3440 = vmatmul.bf16.gmra.mxu0 %v2596
          %v3441 = vpop.f32.mrf.mxu0
          %v3442 = vadd.f32 %v3429, %v3441
          %v3443 = vpop.f32.mrf.mxu0
          %3444 = vdwg.mxu0
          %3445 = vmatpush.bf16.msra.mxu0 %v3221
          %3446 = vmatpush.bf16.msra.mxu0 %v3219
          %3447 = vmatpush.bf16.msra.mxu0 %v3217
          %3448 = vmatpush.bf16.msra.mxu0 %v3215
          %3449 = vmatpush.bf16.msra.mxu0 %v3213
          %3450 = vmatpush.bf16.msra.mxu0 %v3211
          %3451 = vmatpush.bf16.msra.mxu0 %v3209
          %3452 = vmatpush.bf16.msra.mxu0 %v3207
          %3453 = vmatmul.bf16.gmra.mxu0 %v2597
          %v3454 = vpop.f32.mrf.mxu0
          %v3455 = vadd.f32 %v3442, %v3454
          %v3456 = vpop.f32.mrf.mxu0
          %3457 = vdwg.mxu0
          %3458 = vmatpush.bf16.msra.mxu0 %v3237
          %3459 = vmatpush.bf16.msra.mxu0 %v3235
          %3460 = vmatpush.bf16.msra.mxu0 %v3233
          %3461 = vmatpush.bf16.msra.mxu0 %v3231
          %3462 = vmatpush.bf16.msra.mxu0 %v3229
          %3463 = vmatpush.bf16.msra.mxu0 %v3227
          %3464 = vmatpush.bf16.msra.mxu0 %v3225
          %3465 = vmatpush.bf16.msra.mxu0 %v3223
          %3466 = vmatmul.bf16.gmra.mxu0 %v2598
          %v3467 = vpop.f32.mrf.mxu0
          %v3468 = vadd.f32 %v3455, %v3467
          %v3469 = vpop.f32.mrf.mxu0
          %3470 = vdwg.mxu0
          %3471 = vmatpush.bf16.msra.mxu0 %v3126
          %3472 = vmatpush.bf16.msra.mxu0 %v3124
          %3473 = vmatpush.bf16.msra.mxu0 %v3122
          %3474 = vmatpush.bf16.msra.mxu0 %v3120
          %3475 = vmatpush.bf16.msra.mxu0 %v3118
          %3476 = vmatpush.bf16.msra.mxu0 %v3116
          %3477 = vmatpush.bf16.msra.mxu0 %v3114
          %3478 = vmatpush.bf16.msra.mxu0 %v3112
          %3479 = vmatmul.bf16.gmra.mxu0 %v2591
          %v3480 = vpop.f32.mrf.mxu0
          %v3481 = vadd.f32 0.0, %v3480
          %v3482 = vpop.f32.mrf.mxu0
          %3483 = vdwg.mxu0
          %3484 = vmatpush.bf16.msra.mxu0 %v3142
          %3485 = vmatpush.bf16.msra.mxu0 %v3140
          %3486 = vmatpush.bf16.msra.mxu0 %v3138
          %3487 = vmatpush.bf16.msra.mxu0 %v3136
          %3488 = vmatpush.bf16.msra.mxu0 %v3134
          %3489 = vmatpush.bf16.msra.mxu0 %v3132
          %3490 = vmatpush.bf16.msra.mxu0 %v3130
          %3491 = vmatpush.bf16.msra.mxu0 %v3128
          %3492 = vmatmul.bf16.gmra.mxu0 %v2592
          %v3493 = vpop.f32.mrf.mxu0
          %v3494 = vadd.f32 %v3481, %v3493
          %v3495 = vpop.f32.mrf.mxu0
          %3496 = vdwg.mxu0
          %3497 = vmatpush.bf16.msra.mxu0 %v3158
          %3498 = vmatpush.bf16.msra.mxu0 %v3156
          %3499 = vmatpush.bf16.msra.mxu0 %v3154
          %3500 = vmatpush.bf16.msra.mxu0 %v3152
          %3501 = vmatpush.bf16.msra.mxu0 %v3150
          %3502 = vmatpush.bf16.msra.mxu0 %v3148
          %3503 = vmatpush.bf16.msra.mxu0 %v3146
          %3504 = vmatpush.bf16.msra.mxu0 %v3144
          %3505 = vmatmul.bf16.gmra.mxu0 %v2593
          %v3506 = vpop.f32.mrf.mxu0
          %v3507 = vadd.f32 %v3494, %v3506
          %v3508 = vpop.f32.mrf.mxu0
          %3509 = vdwg.mxu0
          %3510 = vmatpush.bf16.msra.mxu0 %v3174
          %3511 = vmatpush.bf16.msra.mxu0 %v3172
          %3512 = vmatpush.bf16.msra.mxu0 %v3170
          %3513 = vmatpush.bf16.msra.mxu0 %v3168
          %3514 = vmatpush.bf16.msra.mxu0 %v3166
          %3515 = vmatpush.bf16.msra.mxu0 %v3164
          %3516 = vmatpush.bf16.msra.mxu0 %v3162
          %3517 = vmatpush.bf16.msra.mxu0 %v3160
          %3518 = vmatmul.bf16.gmra.mxu0 %v2594
          %v3519 = vpop.f32.mrf.mxu0
          %v3520 = vadd.f32 %v3507, %v3519
          %v3521 = vpop.f32.mrf.mxu0
          %3522 = vdwg.mxu0
          %3523 = vmatpush.bf16.msra.mxu0 %v3190
          %3524 = vmatpush.bf16.msra.mxu0 %v3188
          %3525 = vmatpush.bf16.msra.mxu0 %v3186
          %3526 = vmatpush.bf16.msra.mxu0 %v3184
          %3527 = vmatpush.bf16.msra.mxu0 %v3182
          %3528 = vmatpush.bf16.msra.mxu0 %v3180
          %3529 = vmatpush.bf16.msra.mxu0 %v3178
          %3530 = vmatpush.bf16.msra.mxu0 %v3176
          %3531 = vmatmul.bf16.gmra.mxu0 %v2595
          %v3532 = vpop.f32.mrf.mxu0
          %v3533 = vadd.f32 %v3520, %v3532
          %v3534 = vpop.f32.mrf.mxu0
          %3535 = vdwg.mxu0
          %3536 = vmatpush.bf16.msra.mxu0 %v3206
          %3537 = vmatpush.bf16.msra.mxu0 %v3204
          %3538 = vmatpush.bf16.msra.mxu0 %v3202
          %3539 = vmatpush.bf16.msra.mxu0 %v3200
          %3540 = vmatpush.bf16.msra.mxu0 %v3198
          %3541 = vmatpush.bf16.msra.mxu0 %v3196
          %3542 = vmatpush.bf16.msra.mxu0 %v3194
          %3543 = vmatpush.bf16.msra.mxu0 %v3192
          %3544 = vmatmul.bf16.gmra.mxu0 %v2596
          %v3545 = vpop.f32.mrf.mxu0
          %v3546 = vadd.f32 %v3533, %v3545
          %v3547 = vpop.f32.mrf.mxu0
          %3548 = vdwg.mxu0
          %3549 = vmatpush.bf16.msra.mxu0 %v3222
          %3550 = vmatpush.bf16.msra.mxu0 %v3220
          %3551 = vmatpush.bf16.msra.mxu0 %v3218
          %3552 = vmatpush.bf16.msra.mxu0 %v3216
          %3553 = vmatpush.bf16.msra.mxu0 %v3214
          %3554 = vmatpush.bf16.msra.mxu0 %v3212
          %3555 = vmatpush.bf16.msra.mxu0 %v3210
          %3556 = vmatpush.bf16.msra.mxu0 %v3208
          %3557 = vmatmul.bf16.gmra.mxu0 %v2597
          %v3558 = vpop.f32.mrf.mxu0
          %v3559 = vadd.f32 %v3546, %v3558
          %v3560 = vpop.f32.mrf.mxu0
          %3561 = vdwg.mxu0
          %3562 = vmatpush.bf16.msra.mxu0 %v3238
          %3563 = vmatpush.bf16.msra.mxu0 %v3236
          %3564 = vmatpush.bf16.msra.mxu0 %v3234
          %3565 = vmatpush.bf16.msra.mxu0 %v3232
          %3566 = vmatpush.bf16.msra.mxu0 %v3230
          %3567 = vmatpush.bf16.msra.mxu0 %v3228
          %3568 = vmatpush.bf16.msra.mxu0 %v3226
          %3569 = vmatpush.bf16.msra.mxu0 %v3224
          %3570 = vmatmul.bf16.gmra.mxu0 %v2598
          %v3571 = vpop.f32.mrf.mxu0
          %v3572 = vadd.f32 %v3559, %v3571
          %v3573 = vpop.f32.mrf.mxu0
          %3574 = vdwg.mxu0
          %v3575 = vadd.f32 %v2476, %v3468
          %v3576 = vadd.f32 %v2580, %v3572
          %v3577 = vld [vmem:[#allocation2 + $0x40] sm:$0xff]
          %v3578 = vld [vmem:[#allocation2 + $0x48] sm:$0xff]
          %v3579 = vld [vmem:[#allocation2 + $0x50] sm:$0xff]
          %v3580 = vld [vmem:[#allocation2 + $0x58] sm:$0xff]
          %v3581 = vld [vmem:[#allocation2 + $0x60] sm:$0xff]
          %v3582 = vld [vmem:[#allocation2 + $0x68] sm:$0xff]
          %v3583 = vld [vmem:[#allocation2 + $0x70] sm:$0xff]
          %v3584 = vld [vmem:[#allocation2 + $0x78] sm:$0xff]
          %v3585 = vpack.c.bf16 %v3577, %v3577
          %v3586 = vpack.c.bf16 %v3578, %v3578
          %v3587 = vpack.c.bf16 %v3579, %v3579
          %v3588 = vpack.c.bf16 %v3580, %v3580
          %v3589 = vpack.c.bf16 %v3581, %v3581
          %v3590 = vpack.c.bf16 %v3582, %v3582
          %v3591 = vpack.c.bf16 %v3583, %v3583
          %v3592 = vpack.c.bf16 %v3584, %v3584
          %v3593 = vld [vmem:[#allocation9 + $0x400] sm:$0xff]
          %v3594 = vld [vmem:[#allocation9 + $0x408] sm:$0xff]
          %v3595 = vld [vmem:[#allocation9 + $0x410] sm:$0xff]
          %v3596 = vld [vmem:[#allocation9 + $0x418] sm:$0xff]
          %v3597 = vld [vmem:[#allocation9 + $0x420] sm:$0xff]
          %v3598 = vld [vmem:[#allocation9 + $0x428] sm:$0xff]
          %v3599 = vld [vmem:[#allocation9 + $0x430] sm:$0xff]
          %v3600 = vld [vmem:[#allocation9 + $0x438] sm:$0xff]
          %v3601 = vld [vmem:[#allocation9 + $0x440] sm:$0xff]
          %v3602 = vld [vmem:[#allocation9 + $0x448] sm:$0xff]
          %v3603 = vld [vmem:[#allocation9 + $0x450] sm:$0xff]
          %v3604 = vld [vmem:[#allocation9 + $0x458] sm:$0xff]
          %v3605 = vld [vmem:[#allocation9 + $0x460] sm:$0xff]
          %v3606 = vld [vmem:[#allocation9 + $0x468] sm:$0xff]
          %v3607 = vld [vmem:[#allocation9 + $0x470] sm:$0xff]
          %v3608 = vld [vmem:[#allocation9 + $0x478] sm:$0xff]
          %v3609 = vld [vmem:[#allocation9 + $0x480] sm:$0xff]
          %v3610 = vld [vmem:[#allocation9 + $0x488] sm:$0xff]
          %v3611 = vld [vmem:[#allocation9 + $0x490] sm:$0xff]
          %v3612 = vld [vmem:[#allocation9 + $0x498] sm:$0xff]
          %v3613 = vld [vmem:[#allocation9 + $0x4a0] sm:$0xff]
          %v3614 = vld [vmem:[#allocation9 + $0x4a8] sm:$0xff]
          %v3615 = vld [vmem:[#allocation9 + $0x4b0] sm:$0xff]
          %v3616 = vld [vmem:[#allocation9 + $0x4b8] sm:$0xff]
          %v3617 = vld [vmem:[#allocation9 + $0x4c0] sm:$0xff]
          %v3618 = vld [vmem:[#allocation9 + $0x4c8] sm:$0xff]
          %v3619 = vld [vmem:[#allocation9 + $0x4d0] sm:$0xff]
          %v3620 = vld [vmem:[#allocation9 + $0x4d8] sm:$0xff]
          %v3621 = vld [vmem:[#allocation9 + $0x4e0] sm:$0xff]
          %v3622 = vld [vmem:[#allocation9 + $0x4e8] sm:$0xff]
          %v3623 = vld [vmem:[#allocation9 + $0x4f0] sm:$0xff]
          %v3624 = vld [vmem:[#allocation9 + $0x4f8] sm:$0xff]
          %v3625 = vld [vmem:[#allocation9 + $0x500] sm:$0xff]
          %v3626 = vld [vmem:[#allocation9 + $0x508] sm:$0xff]
          %v3627 = vld [vmem:[#allocation9 + $0x510] sm:$0xff]
          %v3628 = vld [vmem:[#allocation9 + $0x518] sm:$0xff]
          %v3629 = vld [vmem:[#allocation9 + $0x520] sm:$0xff]
          %v3630 = vld [vmem:[#allocation9 + $0x528] sm:$0xff]
          %v3631 = vld [vmem:[#allocation9 + $0x530] sm:$0xff]
          %v3632 = vld [vmem:[#allocation9 + $0x538] sm:$0xff]
          %v3633 = vld [vmem:[#allocation9 + $0x540] sm:$0xff]
          %v3634 = vld [vmem:[#allocation9 + $0x548] sm:$0xff]
          %v3635 = vld [vmem:[#allocation9 + $0x550] sm:$0xff]
          %v3636 = vld [vmem:[#allocation9 + $0x558] sm:$0xff]
          %v3637 = vld [vmem:[#allocation9 + $0x560] sm:$0xff]
          %v3638 = vld [vmem:[#allocation9 + $0x568] sm:$0xff]
          %v3639 = vld [vmem:[#allocation9 + $0x570] sm:$0xff]
          %v3640 = vld [vmem:[#allocation9 + $0x578] sm:$0xff]
          %v3641 = vld [vmem:[#allocation9 + $0x580] sm:$0xff]
          %v3642 = vld [vmem:[#allocation9 + $0x588] sm:$0xff]
          %v3643 = vld [vmem:[#allocation9 + $0x590] sm:$0xff]
          %v3644 = vld [vmem:[#allocation9 + $0x598] sm:$0xff]
          %v3645 = vld [vmem:[#allocation9 + $0x5a0] sm:$0xff]
          %v3646 = vld [vmem:[#allocation9 + $0x5a8] sm:$0xff]
          %v3647 = vld [vmem:[#allocation9 + $0x5b0] sm:$0xff]
          %v3648 = vld [vmem:[#allocation9 + $0x5b8] sm:$0xff]
          %v3649 = vld [vmem:[#allocation9 + $0x5c0] sm:$0xff]
          %v3650 = vld [vmem:[#allocation9 + $0x5c8] sm:$0xff]
          %v3651 = vld [vmem:[#allocation9 + $0x5d0] sm:$0xff]
          %v3652 = vld [vmem:[#allocation9 + $0x5d8] sm:$0xff]
          %v3653 = vld [vmem:[#allocation9 + $0x5e0] sm:$0xff]
          %v3654 = vld [vmem:[#allocation9 + $0x5e8] sm:$0xff]
          %v3655 = vld [vmem:[#allocation9 + $0x5f0] sm:$0xff]
          %v3656 = vld [vmem:[#allocation9 + $0x5f8] sm:$0xff]
          %v3657 = vld [vmem:[#allocation9 + $0x600] sm:$0xff]
          %v3658 = vld [vmem:[#allocation9 + $0x608] sm:$0xff]
          %v3659 = vld [vmem:[#allocation9 + $0x610] sm:$0xff]
          %v3660 = vld [vmem:[#allocation9 + $0x618] sm:$0xff]
          %v3661 = vld [vmem:[#allocation9 + $0x620] sm:$0xff]
          %v3662 = vld [vmem:[#allocation9 + $0x628] sm:$0xff]
          %v3663 = vld [vmem:[#allocation9 + $0x630] sm:$0xff]
          %v3664 = vld [vmem:[#allocation9 + $0x638] sm:$0xff]
          %v3665 = vld [vmem:[#allocation9 + $0x640] sm:$0xff]
          %v3666 = vld [vmem:[#allocation9 + $0x648] sm:$0xff]
          %v3667 = vld [vmem:[#allocation9 + $0x650] sm:$0xff]
          %v3668 = vld [vmem:[#allocation9 + $0x658] sm:$0xff]
          %v3669 = vld [vmem:[#allocation9 + $0x660] sm:$0xff]
          %v3670 = vld [vmem:[#allocation9 + $0x668] sm:$0xff]
          %v3671 = vld [vmem:[#allocation9 + $0x670] sm:$0xff]
          %v3672 = vld [vmem:[#allocation9 + $0x678] sm:$0xff]
          %v3673 = vld [vmem:[#allocation9 + $0x680] sm:$0xff]
          %v3674 = vld [vmem:[#allocation9 + $0x688] sm:$0xff]
          %v3675 = vld [vmem:[#allocation9 + $0x690] sm:$0xff]
          %v3676 = vld [vmem:[#allocation9 + $0x698] sm:$0xff]
          %v3677 = vld [vmem:[#allocation9 + $0x6a0] sm:$0xff]
          %v3678 = vld [vmem:[#allocation9 + $0x6a8] sm:$0xff]
          %v3679 = vld [vmem:[#allocation9 + $0x6b0] sm:$0xff]
          %v3680 = vld [vmem:[#allocation9 + $0x6b8] sm:$0xff]
          %v3681 = vld [vmem:[#allocation9 + $0x6c0] sm:$0xff]
          %v3682 = vld [vmem:[#allocation9 + $0x6c8] sm:$0xff]
          %v3683 = vld [vmem:[#allocation9 + $0x6d0] sm:$0xff]
          %v3684 = vld [vmem:[#allocation9 + $0x6d8] sm:$0xff]
          %v3685 = vld [vmem:[#allocation9 + $0x6e0] sm:$0xff]
          %v3686 = vld [vmem:[#allocation9 + $0x6e8] sm:$0xff]
          %v3687 = vld [vmem:[#allocation9 + $0x6f0] sm:$0xff]
          %v3688 = vld [vmem:[#allocation9 + $0x6f8] sm:$0xff]
          %v3689 = vld [vmem:[#allocation9 + $0x700] sm:$0xff]
          %v3690 = vld [vmem:[#allocation9 + $0x708] sm:$0xff]
          %v3691 = vld [vmem:[#allocation9 + $0x710] sm:$0xff]
          %v3692 = vld [vmem:[#allocation9 + $0x718] sm:$0xff]
          %v3693 = vld [vmem:[#allocation9 + $0x720] sm:$0xff]
          %v3694 = vld [vmem:[#allocation9 + $0x728] sm:$0xff]
          %v3695 = vld [vmem:[#allocation9 + $0x730] sm:$0xff]
          %v3696 = vld [vmem:[#allocation9 + $0x738] sm:$0xff]
          %v3697 = vld [vmem:[#allocation9 + $0x740] sm:$0xff]
          %v3698 = vld [vmem:[#allocation9 + $0x748] sm:$0xff]
          %v3699 = vld [vmem:[#allocation9 + $0x750] sm:$0xff]
          %v3700 = vld [vmem:[#allocation9 + $0x758] sm:$0xff]
          %v3701 = vld [vmem:[#allocation9 + $0x760] sm:$0xff]
          %v3702 = vld [vmem:[#allocation9 + $0x768] sm:$0xff]
          %v3703 = vld [vmem:[#allocation9 + $0x770] sm:$0xff]
          %v3704 = vld [vmem:[#allocation9 + $0x778] sm:$0xff]
          %v3705 = vld [vmem:[#allocation9 + $0x780] sm:$0xff]
          %v3706 = vld [vmem:[#allocation9 + $0x788] sm:$0xff]
          %v3707 = vld [vmem:[#allocation9 + $0x790] sm:$0xff]
          %v3708 = vld [vmem:[#allocation9 + $0x798] sm:$0xff]
          %v3709 = vld [vmem:[#allocation9 + $0x7a0] sm:$0xff]
          %v3710 = vld [vmem:[#allocation9 + $0x7a8] sm:$0xff]
          %v3711 = vld [vmem:[#allocation9 + $0x7b0] sm:$0xff]
          %v3712 = vld [vmem:[#allocation9 + $0x7b8] sm:$0xff]
          %v3713 = vld [vmem:[#allocation9 + $0x7c0] sm:$0xff]
          %v3714 = vld [vmem:[#allocation9 + $0x7c8] sm:$0xff]
          %v3715 = vld [vmem:[#allocation9 + $0x7d0] sm:$0xff]
          %v3716 = vld [vmem:[#allocation9 + $0x7d8] sm:$0xff]
          %v3717 = vld [vmem:[#allocation9 + $0x7e0] sm:$0xff]
          %v3718 = vld [vmem:[#allocation9 + $0x7e8] sm:$0xff]
          %v3719 = vld [vmem:[#allocation9 + $0x7f0] sm:$0xff]
          %v3720 = vld [vmem:[#allocation9 + $0x7f8] sm:$0xff]
          %v3849 = vunpack.c.l.b16 %v3593
          %v3850 = vunpack.c.h.b16 %v3593
          %v3851 = vunpack.c.l.b16 %v3594
          %v3852 = vunpack.c.h.b16 %v3594
          %v3853 = vunpack.c.l.b16 %v3595
          %v3854 = vunpack.c.h.b16 %v3595
          %v3855 = vunpack.c.l.b16 %v3596
          %v3856 = vunpack.c.h.b16 %v3596
          %v3857 = vunpack.c.l.b16 %v3597
          %v3858 = vunpack.c.h.b16 %v3597
          %v3859 = vunpack.c.l.b16 %v3598
          %v3860 = vunpack.c.h.b16 %v3598
          %v3861 = vunpack.c.l.b16 %v3599
          %v3862 = vunpack.c.h.b16 %v3599
          %v3863 = vunpack.c.l.b16 %v3600
          %v3864 = vunpack.c.h.b16 %v3600
          %v3865 = vunpack.c.l.b16 %v3601
          %v3866 = vunpack.c.h.b16 %v3601
          %v3867 = vunpack.c.l.b16 %v3602
          %v3868 = vunpack.c.h.b16 %v3602
          %v3869 = vunpack.c.l.b16 %v3603
          %v3870 = vunpack.c.h.b16 %v3603
          %v3871 = vunpack.c.l.b16 %v3604
          %v3872 = vunpack.c.h.b16 %v3604
          %v3873 = vunpack.c.l.b16 %v3605
          %v3874 = vunpack.c.h.b16 %v3605
          %v3875 = vunpack.c.l.b16 %v3606
          %v3876 = vunpack.c.h.b16 %v3606
          %v3877 = vunpack.c.l.b16 %v3607
          %v3878 = vunpack.c.h.b16 %v3607
          %v3879 = vunpack.c.l.b16 %v3608
          %v3880 = vunpack.c.h.b16 %v3608
          %v3881 = vunpack.c.l.b16 %v3609
          %v3882 = vunpack.c.h.b16 %v3609
          %v3883 = vunpack.c.l.b16 %v3610
          %v3884 = vunpack.c.h.b16 %v3610
          %v3885 = vunpack.c.l.b16 %v3611
          %v3886 = vunpack.c.h.b16 %v3611
          %v3887 = vunpack.c.l.b16 %v3612
          %v3888 = vunpack.c.h.b16 %v3612
          %v3889 = vunpack.c.l.b16 %v3613
          %v3890 = vunpack.c.h.b16 %v3613
          %v3891 = vunpack.c.l.b16 %v3614
          %v3892 = vunpack.c.h.b16 %v3614
          %v3893 = vunpack.c.l.b16 %v3615
          %v3894 = vunpack.c.h.b16 %v3615
          %v3895 = vunpack.c.l.b16 %v3616
          %v3896 = vunpack.c.h.b16 %v3616
          %v3897 = vunpack.c.l.b16 %v3617
          %v3898 = vunpack.c.h.b16 %v3617
          %v3899 = vunpack.c.l.b16 %v3618
          %v3900 = vunpack.c.h.b16 %v3618
          %v3901 = vunpack.c.l.b16 %v3619
          %v3902 = vunpack.c.h.b16 %v3619
          %v3903 = vunpack.c.l.b16 %v3620
          %v3904 = vunpack.c.h.b16 %v3620
          %v3905 = vunpack.c.l.b16 %v3621
          %v3906 = vunpack.c.h.b16 %v3621
          %v3907 = vunpack.c.l.b16 %v3622
          %v3908 = vunpack.c.h.b16 %v3622
          %v3909 = vunpack.c.l.b16 %v3623
          %v3910 = vunpack.c.h.b16 %v3623
          %v3911 = vunpack.c.l.b16 %v3624
          %v3912 = vunpack.c.h.b16 %v3624
          %v3913 = vunpack.c.l.b16 %v3625
          %v3914 = vunpack.c.h.b16 %v3625
          %v3915 = vunpack.c.l.b16 %v3626
          %v3916 = vunpack.c.h.b16 %v3626
          %v3917 = vunpack.c.l.b16 %v3627
          %v3918 = vunpack.c.h.b16 %v3627
          %v3919 = vunpack.c.l.b16 %v3628
          %v3920 = vunpack.c.h.b16 %v3628
          %v3921 = vunpack.c.l.b16 %v3629
          %v3922 = vunpack.c.h.b16 %v3629
          %v3923 = vunpack.c.l.b16 %v3630
          %v3924 = vunpack.c.h.b16 %v3630
          %v3925 = vunpack.c.l.b16 %v3631
          %v3926 = vunpack.c.h.b16 %v3631
          %v3927 = vunpack.c.l.b16 %v3632
          %v3928 = vunpack.c.h.b16 %v3632
          %v3929 = vunpack.c.l.b16 %v3633
          %v3930 = vunpack.c.h.b16 %v3633
          %v3931 = vunpack.c.l.b16 %v3634
          %v3932 = vunpack.c.h.b16 %v3634
          %v3933 = vunpack.c.l.b16 %v3635
          %v3934 = vunpack.c.h.b16 %v3635
          %v3935 = vunpack.c.l.b16 %v3636
          %v3936 = vunpack.c.h.b16 %v3636
          %v3937 = vunpack.c.l.b16 %v3637
          %v3938 = vunpack.c.h.b16 %v3637
          %v3939 = vunpack.c.l.b16 %v3638
          %v3940 = vunpack.c.h.b16 %v3638
          %v3941 = vunpack.c.l.b16 %v3639
          %v3942 = vunpack.c.h.b16 %v3639
          %v3943 = vunpack.c.l.b16 %v3640
          %v3944 = vunpack.c.h.b16 %v3640
          %v3945 = vunpack.c.l.b16 %v3641
          %v3946 = vunpack.c.h.b16 %v3641
          %v3947 = vunpack.c.l.b16 %v3642
          %v3948 = vunpack.c.h.b16 %v3642
          %v3949 = vunpack.c.l.b16 %v3643
          %v3950 = vunpack.c.h.b16 %v3643
          %v3951 = vunpack.c.l.b16 %v3644
          %v3952 = vunpack.c.h.b16 %v3644
          %v3953 = vunpack.c.l.b16 %v3645
          %v3954 = vunpack.c.h.b16 %v3645
          %v3955 = vunpack.c.l.b16 %v3646
          %v3956 = vunpack.c.h.b16 %v3646
          %v3957 = vunpack.c.l.b16 %v3647
          %v3958 = vunpack.c.h.b16 %v3647
          %v3959 = vunpack.c.l.b16 %v3648
          %v3960 = vunpack.c.h.b16 %v3648
          %v3961 = vunpack.c.l.b16 %v3649
          %v3962 = vunpack.c.h.b16 %v3649
          %v3963 = vunpack.c.l.b16 %v3650
          %v3964 = vunpack.c.h.b16 %v3650
          %v3965 = vunpack.c.l.b16 %v3651
          %v3966 = vunpack.c.h.b16 %v3651
          %v3967 = vunpack.c.l.b16 %v3652
          %v3968 = vunpack.c.h.b16 %v3652
          %v3969 = vunpack.c.l.b16 %v3653
          %v3970 = vunpack.c.h.b16 %v3653
          %v3971 = vunpack.c.l.b16 %v3654
          %v3972 = vunpack.c.h.b16 %v3654
          %v3973 = vunpack.c.l.b16 %v3655
          %v3974 = vunpack.c.h.b16 %v3655
          %v3975 = vunpack.c.l.b16 %v3656
          %v3976 = vunpack.c.h.b16 %v3656
          %v3977 = vunpack.c.l.b16 %v3657
          %v3978 = vunpack.c.h.b16 %v3657
          %v3979 = vunpack.c.l.b16 %v3658
          %v3980 = vunpack.c.h.b16 %v3658
          %v3981 = vunpack.c.l.b16 %v3659
          %v3982 = vunpack.c.h.b16 %v3659
          %v3983 = vunpack.c.l.b16 %v3660
          %v3984 = vunpack.c.h.b16 %v3660
          %v3985 = vunpack.c.l.b16 %v3661
          %v3986 = vunpack.c.h.b16 %v3661
          %v3987 = vunpack.c.l.b16 %v3662
          %v3988 = vunpack.c.h.b16 %v3662
          %v3989 = vunpack.c.l.b16 %v3663
          %v3990 = vunpack.c.h.b16 %v3663
          %v3991 = vunpack.c.l.b16 %v3664
          %v3992 = vunpack.c.h.b16 %v3664
          %v3993 = vunpack.c.l.b16 %v3665
          %v3994 = vunpack.c.h.b16 %v3665
          %v3995 = vunpack.c.l.b16 %v3666
          %v3996 = vunpack.c.h.b16 %v3666
          %v3997 = vunpack.c.l.b16 %v3667
          %v3998 = vunpack.c.h.b16 %v3667
          %v3999 = vunpack.c.l.b16 %v3668
          %v4000 = vunpack.c.h.b16 %v3668
          %v4001 = vunpack.c.l.b16 %v3669
          %v4002 = vunpack.c.h.b16 %v3669
          %v4003 = vunpack.c.l.b16 %v3670
          %v4004 = vunpack.c.h.b16 %v3670
          %v4005 = vunpack.c.l.b16 %v3671
          %v4006 = vunpack.c.h.b16 %v3671
          %v4007 = vunpack.c.l.b16 %v3672
          %v4008 = vunpack.c.h.b16 %v3672
          %v4009 = vunpack.c.l.b16 %v3673
          %v4010 = vunpack.c.h.b16 %v3673
          %v4011 = vunpack.c.l.b16 %v3674
          %v4012 = vunpack.c.h.b16 %v3674
          %v4013 = vunpack.c.l.b16 %v3675
          %v4014 = vunpack.c.h.b16 %v3675
          %v4015 = vunpack.c.l.b16 %v3676
          %v4016 = vunpack.c.h.b16 %v3676
          %v4017 = vunpack.c.l.b16 %v3677
          %v4018 = vunpack.c.h.b16 %v3677
          %v4019 = vunpack.c.l.b16 %v3678
          %v4020 = vunpack.c.h.b16 %v3678
          %v4021 = vunpack.c.l.b16 %v3679
          %v4022 = vunpack.c.h.b16 %v3679
          %v4023 = vunpack.c.l.b16 %v3680
          %v4024 = vunpack.c.h.b16 %v3680
          %v4025 = vunpack.c.l.b16 %v3681
          %v4026 = vunpack.c.h.b16 %v3681
          %v4027 = vunpack.c.l.b16 %v3682
          %v4028 = vunpack.c.h.b16 %v3682
          %v4029 = vunpack.c.l.b16 %v3683
          %v4030 = vunpack.c.h.b16 %v3683
          %v4031 = vunpack.c.l.b16 %v3684
          %v4032 = vunpack.c.h.b16 %v3684
          %v4033 = vunpack.c.l.b16 %v3685
          %v4034 = vunpack.c.h.b16 %v3685
          %v4035 = vunpack.c.l.b16 %v3686
          %v4036 = vunpack.c.h.b16 %v3686
          %v4037 = vunpack.c.l.b16 %v3687
          %v4038 = vunpack.c.h.b16 %v3687
          %v4039 = vunpack.c.l.b16 %v3688
          %v4040 = vunpack.c.h.b16 %v3688
          %v4041 = vunpack.c.l.b16 %v3689
          %v4042 = vunpack.c.h.b16 %v3689
          %v4043 = vunpack.c.l.b16 %v3690
          %v4044 = vunpack.c.h.b16 %v3690
          %v4045 = vunpack.c.l.b16 %v3691
          %v4046 = vunpack.c.h.b16 %v3691
          %v4047 = vunpack.c.l.b16 %v3692
          %v4048 = vunpack.c.h.b16 %v3692
          %v4049 = vunpack.c.l.b16 %v3693
          %v4050 = vunpack.c.h.b16 %v3693
          %v4051 = vunpack.c.l.b16 %v3694
          %v4052 = vunpack.c.h.b16 %v3694
          %v4053 = vunpack.c.l.b16 %v3695
          %v4054 = vunpack.c.h.b16 %v3695
          %v4055 = vunpack.c.l.b16 %v3696
          %v4056 = vunpack.c.h.b16 %v3696
          %v4057 = vunpack.c.l.b16 %v3697
          %v4058 = vunpack.c.h.b16 %v3697
          %v4059 = vunpack.c.l.b16 %v3698
          %v4060 = vunpack.c.h.b16 %v3698
          %v4061 = vunpack.c.l.b16 %v3699
          %v4062 = vunpack.c.h.b16 %v3699
          %v4063 = vunpack.c.l.b16 %v3700
          %v4064 = vunpack.c.h.b16 %v3700
          %v4065 = vunpack.c.l.b16 %v3701
          %v4066 = vunpack.c.h.b16 %v3701
          %v4067 = vunpack.c.l.b16 %v3702
          %v4068 = vunpack.c.h.b16 %v3702
          %v4069 = vunpack.c.l.b16 %v3703
          %v4070 = vunpack.c.h.b16 %v3703
          %v4071 = vunpack.c.l.b16 %v3704
          %v4072 = vunpack.c.h.b16 %v3704
          %v4073 = vunpack.c.l.b16 %v3705
          %v4074 = vunpack.c.h.b16 %v3705
          %v4075 = vunpack.c.l.b16 %v3706
          %v4076 = vunpack.c.h.b16 %v3706
          %v4077 = vunpack.c.l.b16 %v3707
          %v4078 = vunpack.c.h.b16 %v3707
          %v4079 = vunpack.c.l.b16 %v3708
          %v4080 = vunpack.c.h.b16 %v3708
          %v4081 = vunpack.c.l.b16 %v3709
          %v4082 = vunpack.c.h.b16 %v3709
          %v4083 = vunpack.c.l.b16 %v3710
          %v4084 = vunpack.c.h.b16 %v3710
          %v4085 = vunpack.c.l.b16 %v3711
          %v4086 = vunpack.c.h.b16 %v3711
          %v4087 = vunpack.c.l.b16 %v3712
          %v4088 = vunpack.c.h.b16 %v3712
          %v4089 = vunpack.c.l.b16 %v3713
          %v4090 = vunpack.c.h.b16 %v3713
          %v4091 = vunpack.c.l.b16 %v3714
          %v4092 = vunpack.c.h.b16 %v3714
          %v4093 = vunpack.c.l.b16 %v3715
          %v4094 = vunpack.c.h.b16 %v3715
          %v4095 = vunpack.c.l.b16 %v3716
          %v4096 = vunpack.c.h.b16 %v3716
          %v4097 = vunpack.c.l.b16 %v3717
          %v4098 = vunpack.c.h.b16 %v3717
          %v4099 = vunpack.c.l.b16 %v3718
          %v4100 = vunpack.c.h.b16 %v3718
          %v4101 = vunpack.c.l.b16 %v3719
          %v4102 = vunpack.c.h.b16 %v3719
          %v4103 = vunpack.c.l.b16 %v3720
          %v4104 = vunpack.c.h.b16 %v3720
          %v4105 = vpack.c.b16 %v3851, %v3849
          %v4106 = vpack.c.b16 %v3852, %v3850
          %v4107 = vpack.c.b16 %v3855, %v3853
          %v4108 = vpack.c.b16 %v3856, %v3854
          %v4109 = vpack.c.b16 %v3859, %v3857
          %v4110 = vpack.c.b16 %v3860, %v3858
          %v4111 = vpack.c.b16 %v3863, %v3861
          %v4112 = vpack.c.b16 %v3864, %v3862
          %v4113 = vpack.c.b16 %v3867, %v3865
          %v4114 = vpack.c.b16 %v3868, %v3866
          %v4115 = vpack.c.b16 %v3871, %v3869
          %v4116 = vpack.c.b16 %v3872, %v3870
          %v4117 = vpack.c.b16 %v3875, %v3873
          %v4118 = vpack.c.b16 %v3876, %v3874
          %v4119 = vpack.c.b16 %v3879, %v3877
          %v4120 = vpack.c.b16 %v3880, %v3878
          %v4121 = vpack.c.b16 %v3883, %v3881
          %v4122 = vpack.c.b16 %v3884, %v3882
          %v4123 = vpack.c.b16 %v3887, %v3885
          %v4124 = vpack.c.b16 %v3888, %v3886
          %v4125 = vpack.c.b16 %v3891, %v3889
          %v4126 = vpack.c.b16 %v3892, %v3890
          %v4127 = vpack.c.b16 %v3895, %v3893
          %v4128 = vpack.c.b16 %v3896, %v3894
          %v4129 = vpack.c.b16 %v3899, %v3897
          %v4130 = vpack.c.b16 %v3900, %v3898
          %v4131 = vpack.c.b16 %v3903, %v3901
          %v4132 = vpack.c.b16 %v3904, %v3902
          %v4133 = vpack.c.b16 %v3907, %v3905
          %v4134 = vpack.c.b16 %v3908, %v3906
          %v4135 = vpack.c.b16 %v3911, %v3909
          %v4136 = vpack.c.b16 %v3912, %v3910
          %v4137 = vpack.c.b16 %v3915, %v3913
          %v4138 = vpack.c.b16 %v3916, %v3914
          %v4139 = vpack.c.b16 %v3919, %v3917
          %v4140 = vpack.c.b16 %v3920, %v3918
          %v4141 = vpack.c.b16 %v3923, %v3921
          %v4142 = vpack.c.b16 %v3924, %v3922
          %v4143 = vpack.c.b16 %v3927, %v3925
          %v4144 = vpack.c.b16 %v3928, %v3926
          %v4145 = vpack.c.b16 %v3931, %v3929
          %v4146 = vpack.c.b16 %v3932, %v3930
          %v4147 = vpack.c.b16 %v3935, %v3933
          %v4148 = vpack.c.b16 %v3936, %v3934
          %v4149 = vpack.c.b16 %v3939, %v3937
          %v4150 = vpack.c.b16 %v3940, %v3938
          %v4151 = vpack.c.b16 %v3943, %v3941
          %v4152 = vpack.c.b16 %v3944, %v3942
          %v4153 = vpack.c.b16 %v3947, %v3945
          %v4154 = vpack.c.b16 %v3948, %v3946
          %v4155 = vpack.c.b16 %v3951, %v3949
          %v4156 = vpack.c.b16 %v3952, %v3950
          %v4157 = vpack.c.b16 %v3955, %v3953
          %v4158 = vpack.c.b16 %v3956, %v3954
          %v4159 = vpack.c.b16 %v3959, %v3957
          %v4160 = vpack.c.b16 %v3960, %v3958
          %v4161 = vpack.c.b16 %v3963, %v3961
          %v4162 = vpack.c.b16 %v3964, %v3962
          %v4163 = vpack.c.b16 %v3967, %v3965
          %v4164 = vpack.c.b16 %v3968, %v3966
          %v4165 = vpack.c.b16 %v3971, %v3969
          %v4166 = vpack.c.b16 %v3972, %v3970
          %v4167 = vpack.c.b16 %v3975, %v3973
          %v4168 = vpack.c.b16 %v3976, %v3974
          %v4169 = vpack.c.b16 %v3979, %v3977
          %v4170 = vpack.c.b16 %v3980, %v3978
          %v4171 = vpack.c.b16 %v3983, %v3981
          %v4172 = vpack.c.b16 %v3984, %v3982
          %v4173 = vpack.c.b16 %v3987, %v3985
          %v4174 = vpack.c.b16 %v3988, %v3986
          %v4175 = vpack.c.b16 %v3991, %v3989
          %v4176 = vpack.c.b16 %v3992, %v3990
          %v4177 = vpack.c.b16 %v3995, %v3993
          %v4178 = vpack.c.b16 %v3996, %v3994
          %v4179 = vpack.c.b16 %v3999, %v3997
          %v4180 = vpack.c.b16 %v4000, %v3998
          %v4181 = vpack.c.b16 %v4003, %v4001
          %v4182 = vpack.c.b16 %v4004, %v4002
          %v4183 = vpack.c.b16 %v4007, %v4005
          %v4184 = vpack.c.b16 %v4008, %v4006
          %v4185 = vpack.c.b16 %v4011, %v4009
          %v4186 = vpack.c.b16 %v4012, %v4010
          %v4187 = vpack.c.b16 %v4015, %v4013
          %v4188 = vpack.c.b16 %v4016, %v4014
          %v4189 = vpack.c.b16 %v4019, %v4017
          %v4190 = vpack.c.b16 %v4020, %v4018
          %v4191 = vpack.c.b16 %v4023, %v4021
          %v4192 = vpack.c.b16 %v4024, %v4022
          %v4193 = vpack.c.b16 %v4027, %v4025
          %v4194 = vpack.c.b16 %v4028, %v4026
          %v4195 = vpack.c.b16 %v4031, %v4029
          %v4196 = vpack.c.b16 %v4032, %v4030
          %v4197 = vpack.c.b16 %v4035, %v4033
          %v4198 = vpack.c.b16 %v4036, %v4034
          %v4199 = vpack.c.b16 %v4039, %v4037
          %v4200 = vpack.c.b16 %v4040, %v4038
          %v4201 = vpack.c.b16 %v4043, %v4041
          %v4202 = vpack.c.b16 %v4044, %v4042
          %v4203 = vpack.c.b16 %v4047, %v4045
          %v4204 = vpack.c.b16 %v4048, %v4046
          %v4205 = vpack.c.b16 %v4051, %v4049
          %v4206 = vpack.c.b16 %v4052, %v4050
          %v4207 = vpack.c.b16 %v4055, %v4053
          %v4208 = vpack.c.b16 %v4056, %v4054
          %v4209 = vpack.c.b16 %v4059, %v4057
          %v4210 = vpack.c.b16 %v4060, %v4058
          %v4211 = vpack.c.b16 %v4063, %v4061
          %v4212 = vpack.c.b16 %v4064, %v4062
          %v4213 = vpack.c.b16 %v4067, %v4065
          %v4214 = vpack.c.b16 %v4068, %v4066
          %v4215 = vpack.c.b16 %v4071, %v4069
          %v4216 = vpack.c.b16 %v4072, %v4070
          %v4217 = vpack.c.b16 %v4075, %v4073
          %v4218 = vpack.c.b16 %v4076, %v4074
          %v4219 = vpack.c.b16 %v4079, %v4077
          %v4220 = vpack.c.b16 %v4080, %v4078
          %v4221 = vpack.c.b16 %v4083, %v4081
          %v4222 = vpack.c.b16 %v4084, %v4082
          %v4223 = vpack.c.b16 %v4087, %v4085
          %v4224 = vpack.c.b16 %v4088, %v4086
          %v4225 = vpack.c.b16 %v4091, %v4089
          %v4226 = vpack.c.b16 %v4092, %v4090
          %v4227 = vpack.c.b16 %v4095, %v4093
          %v4228 = vpack.c.b16 %v4096, %v4094
          %v4229 = vpack.c.b16 %v4099, %v4097
          %v4230 = vpack.c.b16 %v4100, %v4098
          %v4231 = vpack.c.b16 %v4103, %v4101
          %v4232 = vpack.c.b16 %v4104, %v4102
          %4361 = vmatpush.bf16.msra.mxu0 %v4119
          %4362 = vmatpush.bf16.msra.mxu0 %v4117
          %4363 = vmatpush.bf16.msra.mxu0 %v4115
          %4364 = vmatpush.bf16.msra.mxu0 %v4113
          %4365 = vmatpush.bf16.msra.mxu0 %v4111
          %4366 = vmatpush.bf16.msra.mxu0 %v4109
          %4367 = vmatpush.bf16.msra.mxu0 %v4107
          %4368 = vmatpush.bf16.msra.mxu0 %v4105
          %4369 = vmatmul.bf16.gmra.mxu0 %v3585
          %v4370 = vpop.f32.mrf.mxu0
          %v4371 = vadd.f32 0.0, %v4370
          %v4372 = vpop.f32.mrf.mxu0
          %4373 = vdwg.mxu0
          %4374 = vmatpush.bf16.msra.mxu0 %v4135
          %4375 = vmatpush.bf16.msra.mxu0 %v4133
          %4376 = vmatpush.bf16.msra.mxu0 %v4131
          %4377 = vmatpush.bf16.msra.mxu0 %v4129
          %4378 = vmatpush.bf16.msra.mxu0 %v4127
          %4379 = vmatpush.bf16.msra.mxu0 %v4125
          %4380 = vmatpush.bf16.msra.mxu0 %v4123
          %4381 = vmatpush.bf16.msra.mxu0 %v4121
          %4382 = vmatmul.bf16.gmra.mxu0 %v3586
          %v4383 = vpop.f32.mrf.mxu0
          %v4384 = vadd.f32 %v4371, %v4383
          %v4385 = vpop.f32.mrf.mxu0
          %4386 = vdwg.mxu0
          %4387 = vmatpush.bf16.msra.mxu0 %v4151
          %4388 = vmatpush.bf16.msra.mxu0 %v4149
          %4389 = vmatpush.bf16.msra.mxu0 %v4147
          %4390 = vmatpush.bf16.msra.mxu0 %v4145
          %4391 = vmatpush.bf16.msra.mxu0 %v4143
          %4392 = vmatpush.bf16.msra.mxu0 %v4141
          %4393 = vmatpush.bf16.msra.mxu0 %v4139
          %4394 = vmatpush.bf16.msra.mxu0 %v4137
          %4395 = vmatmul.bf16.gmra.mxu0 %v3587
          %v4396 = vpop.f32.mrf.mxu0
          %v4397 = vadd.f32 %v4384, %v4396
          %v4398 = vpop.f32.mrf.mxu0
          %4399 = vdwg.mxu0
          %4400 = vmatpush.bf16.msra.mxu0 %v4167
          %4401 = vmatpush.bf16.msra.mxu0 %v4165
          %4402 = vmatpush.bf16.msra.mxu0 %v4163
          %4403 = vmatpush.bf16.msra.mxu0 %v4161
          %4404 = vmatpush.bf16.msra.mxu0 %v4159
          %4405 = vmatpush.bf16.msra.mxu0 %v4157
          %4406 = vmatpush.bf16.msra.mxu0 %v4155
          %4407 = vmatpush.bf16.msra.mxu0 %v4153
          %4408 = vmatmul.bf16.gmra.mxu0 %v3588
          %v4409 = vpop.f32.mrf.mxu0
          %v4410 = vadd.f32 %v4397, %v4409
          %v4411 = vpop.f32.mrf.mxu0
          %4412 = vdwg.mxu0
          %4413 = vmatpush.bf16.msra.mxu0 %v4183
          %4414 = vmatpush.bf16.msra.mxu0 %v4181
          %4415 = vmatpush.bf16.msra.mxu0 %v4179
          %4416 = vmatpush.bf16.msra.mxu0 %v4177
          %4417 = vmatpush.bf16.msra.mxu0 %v4175
          %4418 = vmatpush.bf16.msra.mxu0 %v4173
          %4419 = vmatpush.bf16.msra.mxu0 %v4171
          %4420 = vmatpush.bf16.msra.mxu0 %v4169
          %4421 = vmatmul.bf16.gmra.mxu0 %v3589
          %v4422 = vpop.f32.mrf.mxu0
          %v4423 = vadd.f32 %v4410, %v4422
          %v4424 = vpop.f32.mrf.mxu0
          %4425 = vdwg.mxu0
          %4426 = vmatpush.bf16.msra.mxu0 %v4199
          %4427 = vmatpush.bf16.msra.mxu0 %v4197
          %4428 = vmatpush.bf16.msra.mxu0 %v4195
          %4429 = vmatpush.bf16.msra.mxu0 %v4193
          %4430 = vmatpush.bf16.msra.mxu0 %v4191
          %4431 = vmatpush.bf16.msra.mxu0 %v4189
          %4432 = vmatpush.bf16.msra.mxu0 %v4187
          %4433 = vmatpush.bf16.msra.mxu0 %v4185
          %4434 = vmatmul.bf16.gmra.mxu0 %v3590
          %v4435 = vpop.f32.mrf.mxu0
          %v4436 = vadd.f32 %v4423, %v4435
          %v4437 = vpop.f32.mrf.mxu0
          %4438 = vdwg.mxu0
          %4439 = vmatpush.bf16.msra.mxu0 %v4215
          %4440 = vmatpush.bf16.msra.mxu0 %v4213
          %4441 = vmatpush.bf16.msra.mxu0 %v4211
          %4442 = vmatpush.bf16.msra.mxu0 %v4209
          %4443 = vmatpush.bf16.msra.mxu0 %v4207
          %4444 = vmatpush.bf16.msra.mxu0 %v4205
          %4445 = vmatpush.bf16.msra.mxu0 %v4203
          %4446 = vmatpush.bf16.msra.mxu0 %v4201
          %4447 = vmatmul.bf16.gmra.mxu0 %v3591
          %v4448 = vpop.f32.mrf.mxu0
          %v4449 = vadd.f32 %v4436, %v4448
          %v4450 = vpop.f32.mrf.mxu0
          %4451 = vdwg.mxu0
          %4452 = vmatpush.bf16.msra.mxu0 %v4231
          %4453 = vmatpush.bf16.msra.mxu0 %v4229
          %4454 = vmatpush.bf16.msra.mxu0 %v4227
          %4455 = vmatpush.bf16.msra.mxu0 %v4225
          %4456 = vmatpush.bf16.msra.mxu0 %v4223
          %4457 = vmatpush.bf16.msra.mxu0 %v4221
          %4458 = vmatpush.bf16.msra.mxu0 %v4219
          %4459 = vmatpush.bf16.msra.mxu0 %v4217
          %4460 = vmatmul.bf16.gmra.mxu0 %v3592
          %v4461 = vpop.f32.mrf.mxu0
          %v4462 = vadd.f32 %v4449, %v4461
          %v4463 = vpop.f32.mrf.mxu0
          %4464 = vdwg.mxu0
          %4465 = vmatpush.bf16.msra.mxu0 %v4120
          %4466 = vmatpush.bf16.msra.mxu0 %v4118
          %4467 = vmatpush.bf16.msra.mxu0 %v4116
          %4468 = vmatpush.bf16.msra.mxu0 %v4114
          %4469 = vmatpush.bf16.msra.mxu0 %v4112
          %4470 = vmatpush.bf16.msra.mxu0 %v4110
          %4471 = vmatpush.bf16.msra.mxu0 %v4108
          %4472 = vmatpush.bf16.msra.mxu0 %v4106
          %4473 = vmatmul.bf16.gmra.mxu0 %v3585
          %v4474 = vpop.f32.mrf.mxu0
          %v4475 = vadd.f32 0.0, %v4474
          %v4476 = vpop.f32.mrf.mxu0
          %4477 = vdwg.mxu0
          %4478 = vmatpush.bf16.msra.mxu0 %v4136
          %4479 = vmatpush.bf16.msra.mxu0 %v4134
          %4480 = vmatpush.bf16.msra.mxu0 %v4132
          %4481 = vmatpush.bf16.msra.mxu0 %v4130
          %4482 = vmatpush.bf16.msra.mxu0 %v4128
          %4483 = vmatpush.bf16.msra.mxu0 %v4126
          %4484 = vmatpush.bf16.msra.mxu0 %v4124
          %4485 = vmatpush.bf16.msra.mxu0 %v4122
          %4486 = vmatmul.bf16.gmra.mxu0 %v3586
          %v4487 = vpop.f32.mrf.mxu0
          %v4488 = vadd.f32 %v4475, %v4487
          %v4489 = vpop.f32.mrf.mxu0
          %4490 = vdwg.mxu0
          %4491 = vmatpush.bf16.msra.mxu0 %v4152
          %4492 = vmatpush.bf16.msra.mxu0 %v4150
          %4493 = vmatpush.bf16.msra.mxu0 %v4148
          %4494 = vmatpush.bf16.msra.mxu0 %v4146
          %4495 = vmatpush.bf16.msra.mxu0 %v4144
          %4496 = vmatpush.bf16.msra.mxu0 %v4142
          %4497 = vmatpush.bf16.msra.mxu0 %v4140
          %4498 = vmatpush.bf16.msra.mxu0 %v4138
          %4499 = vmatmul.bf16.gmra.mxu0 %v3587
          %v4500 = vpop.f32.mrf.mxu0
          %v4501 = vadd.f32 %v4488, %v4500
          %v4502 = vpop.f32.mrf.mxu0
          %4503 = vdwg.mxu0
          %4504 = vmatpush.bf16.msra.mxu0 %v4168
          %4505 = vmatpush.bf16.msra.mxu0 %v4166
          %4506 = vmatpush.bf16.msra.mxu0 %v4164
          %4507 = vmatpush.bf16.msra.mxu0 %v4162
          %4508 = vmatpush.bf16.msra.mxu0 %v4160
          %4509 = vmatpush.bf16.msra.mxu0 %v4158
          %4510 = vmatpush.bf16.msra.mxu0 %v4156
          %4511 = vmatpush.bf16.msra.mxu0 %v4154
          %4512 = vmatmul.bf16.gmra.mxu0 %v3588
          %v4513 = vpop.f32.mrf.mxu0
          %v4514 = vadd.f32 %v4501, %v4513
          %v4515 = vpop.f32.mrf.mxu0
          %4516 = vdwg.mxu0
          %4517 = vmatpush.bf16.msra.mxu0 %v4184
          %4518 = vmatpush.bf16.msra.mxu0 %v4182
          %4519 = vmatpush.bf16.msra.mxu0 %v4180
          %4520 = vmatpush.bf16.msra.mxu0 %v4178
          %4521 = vmatpush.bf16.msra.mxu0 %v4176
          %4522 = vmatpush.bf16.msra.mxu0 %v4174
          %4523 = vmatpush.bf16.msra.mxu0 %v4172
          %4524 = vmatpush.bf16.msra.mxu0 %v4170
          %4525 = vmatmul.bf16.gmra.mxu0 %v3589
          %v4526 = vpop.f32.mrf.mxu0
          %v4527 = vadd.f32 %v4514, %v4526
          %v4528 = vpop.f32.mrf.mxu0
          %4529 = vdwg.mxu0
          %4530 = vmatpush.bf16.msra.mxu0 %v4200
          %4531 = vmatpush.bf16.msra.mxu0 %v4198
          %4532 = vmatpush.bf16.msra.mxu0 %v4196
          %4533 = vmatpush.bf16.msra.mxu0 %v4194
          %4534 = vmatpush.bf16.msra.mxu0 %v4192
          %4535 = vmatpush.bf16.msra.mxu0 %v4190
          %4536 = vmatpush.bf16.msra.mxu0 %v4188
          %4537 = vmatpush.bf16.msra.mxu0 %v4186
          %4538 = vmatmul.bf16.gmra.mxu0 %v3590
          %v4539 = vpop.f32.mrf.mxu0
          %v4540 = vadd.f32 %v4527, %v4539
          %v4541 = vpop.f32.mrf.mxu0
          %4542 = vdwg.mxu0
          %4543 = vmatpush.bf16.msra.mxu0 %v4216
          %4544 = vmatpush.bf16.msra.mxu0 %v4214
          %4545 = vmatpush.bf16.msra.mxu0 %v4212
          %4546 = vmatpush.bf16.msra.mxu0 %v4210
          %4547 = vmatpush.bf16.msra.mxu0 %v4208
          %4548 = vmatpush.bf16.msra.mxu0 %v4206
          %4549 = vmatpush.bf16.msra.mxu0 %v4204
          %4550 = vmatpush.bf16.msra.mxu0 %v4202
          %4551 = vmatmul.bf16.gmra.mxu0 %v3591
          %v4552 = vpop.f32.mrf.mxu0
          %v4553 = vadd.f32 %v4540, %v4552
          %v4554 = vpop.f32.mrf.mxu0
          %4555 = vdwg.mxu0
          %4556 = vmatpush.bf16.msra.mxu0 %v4232
          %4557 = vmatpush.bf16.msra.mxu0 %v4230
          %4558 = vmatpush.bf16.msra.mxu0 %v4228
          %4559 = vmatpush.bf16.msra.mxu0 %v4226
          %4560 = vmatpush.bf16.msra.mxu0 %v4224
          %4561 = vmatpush.bf16.msra.mxu0 %v4222
          %4562 = vmatpush.bf16.msra.mxu0 %v4220
          %4563 = vmatpush.bf16.msra.mxu0 %v4218
          %4564 = vmatmul.bf16.gmra.mxu0 %v3592
          %v4565 = vpop.f32.mrf.mxu0
          %v4566 = vadd.f32 %v4553, %v4565
          %v4567 = vpop.f32.mrf.mxu0
          %4568 = vdwg.mxu0
          %v4569 = vadd.f32 %v3575, %v4462
          %v4570 = vadd.f32 %v3576, %v4566
          %v4571 = vmax.f32 %v4569, 0.0
          %v4572 = vmax.f32 %v4570, 0.0
          %v4573 = vpack.c.bf16 %v4571, %v4571
          %v4574 = vpack.c.bf16 %v4572, %v4572
          %v4575 = vld [vmem:[#allocation12] sm:$0xff]
          %v4576 = vld [vmem:[#allocation12 + $0x8] sm:$0xff]
          %v4577 = vld [vmem:[#allocation12 + $0x10] sm:$0xff]
          %v4578 = vld [vmem:[#allocation12 + $0x18] sm:$0xff]
          %v4579 = vld [vmem:[#allocation12 + $0x20] sm:$0xff]
          %v4580 = vld [vmem:[#allocation12 + $0x28] sm:$0xff]
          %v4581 = vld [vmem:[#allocation12 + $0x30] sm:$0xff]
          %v4582 = vld [vmem:[#allocation12 + $0x38] sm:$0xff]
          %v4583 = vld [vmem:[#allocation12 + $0x40] sm:$0xff]
          %v4584 = vld [vmem:[#allocation12 + $0x48] sm:$0xff]
          %v4585 = vld [vmem:[#allocation12 + $0x50] sm:$0xff]
          %v4586 = vld [vmem:[#allocation12 + $0x58] sm:$0xff]
          %v4587 = vld [vmem:[#allocation12 + $0x60] sm:$0xff]
          %v4588 = vld [vmem:[#allocation12 + $0x68] sm:$0xff]
          %v4589 = vld [vmem:[#allocation12 + $0x70] sm:$0xff]
          %v4590 = vld [vmem:[#allocation12 + $0x78] sm:$0xff]
          %v4591 = vld [vmem:[#allocation12 + $0x80] sm:$0xff]
          %v4592 = vld [vmem:[#allocation12 + $0x88] sm:$0xff]
          %v4593 = vld [vmem:[#allocation12 + $0x90] sm:$0xff]
          %v4594 = vld [vmem:[#allocation12 + $0x98] sm:$0xff]
          %v4595 = vld [vmem:[#allocation12 + $0xa0] sm:$0xff]
          %v4596 = vld [vmem:[#allocation12 + $0xa8] sm:$0xff]
          %v4597 = vld [vmem:[#allocation12 + $0xb0] sm:$0xff]
          %v4598 = vld [vmem:[#allocation12 + $0xb8] sm:$0xff]
          %v4599 = vld [vmem:[#allocation12 + $0xc0] sm:$0xff]
          %v4600 = vld [vmem:[#allocation12 + $0xc8] sm:$0xff]
          %v4601 = vld [vmem:[#allocation12 + $0xd0] sm:$0xff]
          %v4602 = vld [vmem:[#allocation12 + $0xd8] sm:$0xff]
          %v4603 = vld [vmem:[#allocation12 + $0xe0] sm:$0xff]
          %v4604 = vld [vmem:[#allocation12 + $0xe8] sm:$0xff]
          %v4605 = vld [vmem:[#allocation12 + $0xf0] sm:$0xff]
          %v4606 = vld [vmem:[#allocation12 + $0xf8] sm:$0xff]
          %v4607 = vld [vmem:[#allocation14] sm:$0x3]
          %v4609 = vperm.slane %v4607, 0
          %v4610 = vperm.slane %v4607, 1
          %v4645 = vunpack.c.l.b16 %v4575
          %v4646 = vunpack.c.h.b16 %v4575
          %v4647 = vunpack.c.l.b16 %v4576
          %v4648 = vunpack.c.h.b16 %v4576
          %v4649 = vunpack.c.l.b16 %v4577
          %v4650 = vunpack.c.h.b16 %v4577
          %v4651 = vunpack.c.l.b16 %v4578
          %v4652 = vunpack.c.h.b16 %v4578
          %v4653 = vunpack.c.l.b16 %v4579
          %v4654 = vunpack.c.h.b16 %v4579
          %v4655 = vunpack.c.l.b16 %v4580
          %v4656 = vunpack.c.h.b16 %v4580
          %v4657 = vunpack.c.l.b16 %v4581
          %v4658 = vunpack.c.h.b16 %v4581
          %v4659 = vunpack.c.l.b16 %v4582
          %v4660 = vunpack.c.h.b16 %v4582
          %v4661 = vunpack.c.l.b16 %v4583
          %v4662 = vunpack.c.h.b16 %v4583
          %v4663 = vunpack.c.l.b16 %v4584
          %v4664 = vunpack.c.h.b16 %v4584
          %v4665 = vunpack.c.l.b16 %v4585
          %v4666 = vunpack.c.h.b16 %v4585
          %v4667 = vunpack.c.l.b16 %v4586
          %v4668 = vunpack.c.h.b16 %v4586
          %v4669 = vunpack.c.l.b16 %v4587
          %v4670 = vunpack.c.h.b16 %v4587
          %v4671 = vunpack.c.l.b16 %v4588
          %v4672 = vunpack.c.h.b16 %v4588
          %v4673 = vunpack.c.l.b16 %v4589
          %v4674 = vunpack.c.h.b16 %v4589
          %v4675 = vunpack.c.l.b16 %v4590
          %v4676 = vunpack.c.h.b16 %v4590
          %v4677 = vunpack.c.l.b16 %v4591
          %v4678 = vunpack.c.h.b16 %v4591
          %v4679 = vunpack.c.l.b16 %v4592
          %v4680 = vunpack.c.h.b16 %v4592
          %v4681 = vunpack.c.l.b16 %v4593
          %v4682 = vunpack.c.h.b16 %v4593
          %v4683 = vunpack.c.l.b16 %v4594
          %v4684 = vunpack.c.h.b16 %v4594
          %v4685 = vunpack.c.l.b16 %v4595
          %v4686 = vunpack.c.h.b16 %v4595
          %v4687 = vunpack.c.l.b16 %v4596
          %v4688 = vunpack.c.h.b16 %v4596
          %v4689 = vunpack.c.l.b16 %v4597
          %v4690 = vunpack.c.h.b16 %v4597
          %v4691 = vunpack.c.l.b16 %v4598
          %v4692 = vunpack.c.h.b16 %v4598
          %v4693 = vunpack.c.l.b16 %v4599
          %v4694 = vunpack.c.h.b16 %v4599
          %v4695 = vunpack.c.l.b16 %v4600
          %v4696 = vunpack.c.h.b16 %v4600
          %v4697 = vunpack.c.l.b16 %v4601
          %v4698 = vunpack.c.h.b16 %v4601
          %v4699 = vunpack.c.l.b16 %v4602
          %v4700 = vunpack.c.h.b16 %v4602
          %v4701 = vunpack.c.l.b16 %v4603
          %v4702 = vunpack.c.h.b16 %v4603
          %v4703 = vunpack.c.l.b16 %v4604
          %v4704 = vunpack.c.h.b16 %v4604
          %v4705 = vunpack.c.l.b16 %v4605
          %v4706 = vunpack.c.h.b16 %v4605
          %v4707 = vunpack.c.l.b16 %v4606
          %v4708 = vunpack.c.h.b16 %v4606
          %v4709 = vpack.c.b16 %v4647, %v4645
          %v4710 = vpack.c.b16 %v4648, %v4646
          %v4711 = vpack.c.b16 %v4651, %v4649
          %v4712 = vpack.c.b16 %v4652, %v4650
          %v4713 = vpack.c.b16 %v4655, %v4653
          %v4714 = vpack.c.b16 %v4656, %v4654
          %v4715 = vpack.c.b16 %v4659, %v4657
          %v4716 = vpack.c.b16 %v4660, %v4658
          %v4717 = vpack.c.b16 %v4663, %v4661
          %v4718 = vpack.c.b16 %v4664, %v4662
          %v4719 = vpack.c.b16 %v4667, %v4665
          %v4720 = vpack.c.b16 %v4668, %v4666
          %v4721 = vpack.c.b16 %v4671, %v4669
          %v4722 = vpack.c.b16 %v4672, %v4670
          %v4723 = vpack.c.b16 %v4675, %v4673
          %v4724 = vpack.c.b16 %v4676, %v4674
          %v4725 = vpack.c.b16 %v4679, %v4677
          %v4726 = vpack.c.b16 %v4680, %v4678
          %v4727 = vpack.c.b16 %v4683, %v4681
          %v4728 = vpack.c.b16 %v4684, %v4682
          %v4729 = vpack.c.b16 %v4687, %v4685
          %v4730 = vpack.c.b16 %v4688, %v4686
          %v4731 = vpack.c.b16 %v4691, %v4689
          %v4732 = vpack.c.b16 %v4692, %v4690
          %v4733 = vpack.c.b16 %v4695, %v4693
          %v4734 = vpack.c.b16 %v4696, %v4694
          %v4735 = vpack.c.b16 %v4699, %v4697
          %v4736 = vpack.c.b16 %v4700, %v4698
          %v4737 = vpack.c.b16 %v4703, %v4701
          %v4738 = vpack.c.b16 %v4704, %v4702
          %v4739 = vpack.c.b16 %v4707, %v4705
          %v4740 = vpack.c.b16 %v4708, %v4706
          %4773 = vmatpush.bf16.msra.mxu0 %v4723
          %4774 = vmatpush.bf16.msra.mxu0 %v4721
          %4775 = vmatpush.bf16.msra.mxu0 %v4719
          %4776 = vmatpush.bf16.msra.mxu0 %v4717
          %4777 = vmatpush.bf16.msra.mxu0 %v4715
          %4778 = vmatpush.bf16.msra.mxu0 %v4713
          %4779 = vmatpush.bf16.msra.mxu0 %v4711
          %4780 = vmatpush.bf16.msra.mxu0 %v4709
          %4781 = vmatmul.bf16.gmra.mxu0 %v4573
          %v4782 = vpop.f32.mrf.mxu0
          %v4783 = vadd.f32 %v4609, %v4782
          %v4784 = vpop.f32.mrf.mxu0
          %4785 = vdwg.mxu0
          %4786 = vmatpush.bf16.msra.mxu0 %v4739
          %4787 = vmatpush.bf16.msra.mxu0 %v4737
          %4788 = vmatpush.bf16.msra.mxu0 %v4735
          %4789 = vmatpush.bf16.msra.mxu0 %v4733
          %4790 = vmatpush.bf16.msra.mxu0 %v4731
          %4791 = vmatpush.bf16.msra.mxu0 %v4729
          %4792 = vmatpush.bf16.msra.mxu0 %v4727
          %4793 = vmatpush.bf16.msra.mxu0 %v4725
          %4794 = vmatmul.bf16.gmra.mxu0 %v4574
          %v4795 = vpop.f32.mrf.mxu0
          %v4796 = vadd.f32 %v4783, %v4795
          %v4797 = vpop.f32.mrf.mxu0
          %4798 = vdwg.mxu0
          %4799 = vmatpush.bf16.msra.mxu0 %v4724
          %4800 = vmatpush.bf16.msra.mxu0 %v4722
          %4801 = vmatpush.bf16.msra.mxu0 %v4720
          %4802 = vmatpush.bf16.msra.mxu0 %v4718
          %4803 = vmatpush.bf16.msra.mxu0 %v4716
          %4804 = vmatpush.bf16.msra.mxu0 %v4714
          %4805 = vmatpush.bf16.msra.mxu0 %v4712
          %4806 = vmatpush.bf16.msra.mxu0 %v4710
          %4807 = vmatmul.bf16.gmra.mxu0 %v4573
          %v4808 = vpop.f32.mrf.mxu0
          %v4809 = vadd.f32 %v4610, %v4808
          %v4810 = vpop.f32.mrf.mxu0
          %4811 = vdwg.mxu0
          %4812 = vmatpush.bf16.msra.mxu0 %v4740
          %4813 = vmatpush.bf16.msra.mxu0 %v4738
          %4814 = vmatpush.bf16.msra.mxu0 %v4736
          %4815 = vmatpush.bf16.msra.mxu0 %v4734
          %4816 = vmatpush.bf16.msra.mxu0 %v4732
          %4817 = vmatpush.bf16.msra.mxu0 %v4730
          %4818 = vmatpush.bf16.msra.mxu0 %v4728
          %4819 = vmatpush.bf16.msra.mxu0 %v4726
          %4820 = vmatmul.bf16.gmra.mxu0 %v4574
          %v4821 = vpop.f32.mrf.mxu0
          %v4822 = vadd.f32 %v4809, %v4821
          %v4823 = vpop.f32.mrf.mxu0
          %4824 = vdwg.mxu0
          %v4825 = vmax.f32 %v4796, 0.0
          %v4826 = vmax.f32 %v4822, 0.0
          %v4827 = vpack.c.bf16 %v4825, %v4825
          %v4828 = vpack.c.bf16 %v4826, %v4826
          %v4829 = vld [vmem:[#allocation15] sm:$0xf]
          %v4830 = vld [vmem:[#allocation15 + $0x4] sm:$0xf]
          %v4831 = vld [vmem:[#allocation15 + $0x8] sm:$0xf]
          %v4832 = vld [vmem:[#allocation15 + $0xc] sm:$0xf]
          %v4833 = vld [vmem:[#allocation15 + $0x10] sm:$0xf]
          %v4834 = vld [vmem:[#allocation15 + $0x14] sm:$0xf]
          %v4835 = vld [vmem:[#allocation15 + $0x18] sm:$0xf]
          %v4836 = vld [vmem:[#allocation15 + $0x1c] sm:$0xf]
          %v4837 = vld [vmem:[#allocation15 + $0x20] sm:$0xf]
          %v4838 = vld [vmem:[#allocation15 + $0x24] sm:$0xf]
          %v4839 = vld [vmem:[#allocation15 + $0x28] sm:$0xf]
          %v4840 = vld [vmem:[#allocation15 + $0x2c] sm:$0xf]
          %v4841 = vld [vmem:[#allocation15 + $0x30] sm:$0xf]
          %v4842 = vld [vmem:[#allocation15 + $0x34] sm:$0xf]
          %v4843 = vld [vmem:[#allocation15 + $0x38] sm:$0xf]
          %v4844 = vld [vmem:[#allocation15 + $0x3c] sm:$0xf]
          %v4845 = vld [vmem:[#allocation15 + $0x40] sm:$0xf]
          %v4846 = vld [vmem:[#allocation15 + $0x44] sm:$0xf]
          %v4847 = vld [vmem:[#allocation15 + $0x48] sm:$0xf]
          %v4848 = vld [vmem:[#allocation15 + $0x4c] sm:$0xf]
          %v4849 = vld [vmem:[#allocation15 + $0x50] sm:$0xf]
          %v4850 = vld [vmem:[#allocation15 + $0x54] sm:$0xf]
          %v4851 = vld [vmem:[#allocation15 + $0x58] sm:$0xf]
          %v4852 = vld [vmem:[#allocation15 + $0x5c] sm:$0xf]
          %v4853 = vld [vmem:[#allocation15 + $0x60] sm:$0xf]
          %v4854 = vld [vmem:[#allocation15 + $0x64] sm:$0xf]
          %v4855 = vld [vmem:[#allocation15 + $0x68] sm:$0xf]
          %v4856 = vld [vmem:[#allocation15 + $0x6c] sm:$0xf]
          %v4857 = vld [vmem:[#allocation15 + $0x70] sm:$0xf]
          %v4858 = vld [vmem:[#allocation15 + $0x74] sm:$0xf]
          %v4859 = vld [vmem:[#allocation15 + $0x78] sm:$0xf]
          %v4860 = vld [vmem:[#allocation15 + $0x7c] sm:$0xf]
          %v4861 = vld [vmem:[#allocation17] sm:$0x1]
          %v4863 = vperm.slane %v4861, 0
          %v4897 = vunpack.c.l.b16 %v4829
          %v4898 = vunpack.c.l.b16 %v4830
          %v4899 = vunpack.c.l.b16 %v4831
          %v4900 = vunpack.c.l.b16 %v4832
          %v4901 = vunpack.c.l.b16 %v4833
          %v4902 = vunpack.c.l.b16 %v4834
          %v4903 = vunpack.c.l.b16 %v4835
          %v4904 = vunpack.c.l.b16 %v4836
          %v4905 = vunpack.c.l.b16 %v4837
          %v4906 = vunpack.c.l.b16 %v4838
          %v4907 = vunpack.c.l.b16 %v4839
          %v4908 = vunpack.c.l.b16 %v4840
          %v4909 = vunpack.c.l.b16 %v4841
          %v4910 = vunpack.c.l.b16 %v4842
          %v4911 = vunpack.c.l.b16 %v4843
          %v4912 = vunpack.c.l.b16 %v4844
          %v4913 = vunpack.c.l.b16 %v4845
          %v4914 = vunpack.c.l.b16 %v4846
          %v4915 = vunpack.c.l.b16 %v4847
          %v4916 = vunpack.c.l.b16 %v4848
          %v4917 = vunpack.c.l.b16 %v4849
          %v4918 = vunpack.c.l.b16 %v4850
          %v4919 = vunpack.c.l.b16 %v4851
          %v4920 = vunpack.c.l.b16 %v4852
          %v4921 = vunpack.c.l.b16 %v4853
          %v4922 = vunpack.c.l.b16 %v4854
          %v4923 = vunpack.c.l.b16 %v4855
          %v4924 = vunpack.c.l.b16 %v4856
          %v4925 = vunpack.c.l.b16 %v4857
          %v4926 = vunpack.c.l.b16 %v4858
          %v4927 = vunpack.c.l.b16 %v4859
          %v4928 = vunpack.c.l.b16 %v4860
          %v4929 = vpack.c.b16 %v4898, %v4897
          %v4930 = vpack.c.b16 %v4900, %v4899
          %v4931 = vpack.c.b16 %v4902, %v4901
          %v4932 = vpack.c.b16 %v4904, %v4903
          %v4933 = vpack.c.b16 %v4906, %v4905
          %v4934 = vpack.c.b16 %v4908, %v4907
          %v4935 = vpack.c.b16 %v4910, %v4909
          %v4936 = vpack.c.b16 %v4912, %v4911
          %v4937 = vpack.c.b16 %v4914, %v4913
          %v4938 = vpack.c.b16 %v4916, %v4915
          %v4939 = vpack.c.b16 %v4918, %v4917
          %v4940 = vpack.c.b16 %v4920, %v4919
          %v4941 = vpack.c.b16 %v4922, %v4921
          %v4942 = vpack.c.b16 %v4924, %v4923
          %v4943 = vpack.c.b16 %v4926, %v4925
          %v4944 = vpack.c.b16 %v4928, %v4927
          %4961 = vmatpush.bf16.msra.mxu0 %v4936
          %4962 = vmatpush.bf16.msra.mxu0 %v4935
          %4963 = vmatpush.bf16.msra.mxu0 %v4934
          %4964 = vmatpush.bf16.msra.mxu0 %v4933
          %4965 = vmatpush.bf16.msra.mxu0 %v4932
          %4966 = vmatpush.bf16.msra.mxu0 %v4931
          %4967 = vmatpush.bf16.msra.mxu0 %v4930
          %4968 = vmatpush.bf16.msra.mxu0 %v4929
          %4969 = vmatmul.bf16.gmra.mxu0 %v4827
          %v4970 = vpop.f32.mrf.mxu0
          %v4971 = vadd.f32 %v4863, %v4970
          %v4972 = vpop.f32.mrf.mxu0
          %4973 = vdwg.mxu0
          %4974 = vmatpush.bf16.msra.mxu0 %v4944
          %4975 = vmatpush.bf16.msra.mxu0 %v4943
          %4976 = vmatpush.bf16.msra.mxu0 %v4942
          %4977 = vmatpush.bf16.msra.mxu0 %v4941
          %4978 = vmatpush.bf16.msra.mxu0 %v4940
          %4979 = vmatpush.bf16.msra.mxu0 %v4939
          %4980 = vmatpush.bf16.msra.mxu0 %v4938
          %4981 = vmatpush.bf16.msra.mxu0 %v4937
          %4982 = vmatmul.bf16.gmra.mxu0 %v4828
          %v4983 = vpop.f32.mrf.mxu0
          %v4984 = vadd.f32 %v4971, %v4983
          %v4985 = vpop.f32.mrf.mxu0
          %4986 = vdwg.mxu0
          %4987 = vst [vmem:[#allocation18] sm:$0xff] %v4984
        $region100: #{tpu_custom_call.1} parent=55 // pred_fallthru
          _
        // Predicated region
        $region101: #{tpu_custom_call.1} parent=55 // pred_check
          %p4988 = pneg %p242
        $region102: #{tpu_custom_call.1} parent=55 // pred_check_branch
          %4990 = sbr.rel (%p4988) target = $region104
        $region103: #{tpu_custom_call.1} parent=55 // pred_region
          %4992 = vsyncadd [#allocation5], 0
          %s4994 = sshll.u32 [#allocation18], 4
          %s4995 = int_to_ptr.vmem [resolvable:$true] %s4994
          %s4996 = sshll.u32 %s9, 4
          %s4997 = int_to_ptr.hbm [resolvable:$true] %s4996
          %4999 = dma.vmem_to_hbm [thread:$0]  %s4995, 128, %s4997, [#allocation5]
        $region104: #{tpu_custom_call.1} parent=55 // pred_fallthru
          _
        // Predicated region
        $region105: #{tpu_custom_call.1} parent=55 // pred_check
          %p5000 = pneg %p242
        $region106: #{tpu_custom_call.1} parent=55 // pred_check_branch
          %5002 = sbr.rel (%p5000) target = $region108
        $region107: #{tpu_custom_call.1} parent=55 // pred_region
          %5004 = dma.done [#allocation5], 128
        $region108: #{tpu_custom_call.1} parent=55 // pred_fallthru
          _
      $region56: #{tpu_custom_call.1} parent=5 // pred_fallthru
        _
      %p5005 = scmp.le.s32.totalorder 2, %s25
      // Predicated region
      $region109: #{tpu_custom_call.1} parent=5 // pred_check
        %p5006 = pneg %p5005
      $region110: #{tpu_custom_call.1} parent=5 // pred_check_branch
        %5008 = sbr.rel (%p5006) target = $region112
      $region111: #{tpu_custom_call.1} parent=5 // pred_region
        %s5009 = ssub.s32 %s25, 2
      $region112: #{tpu_custom_call.1} parent=5 // pred_fallthru
        _
    $region6: #{tpu_custom_call.1} parent=1 // loop_footer
      %s29 = sadd.s32 1, %s25
    $region7: #{tpu_custom_call.1} parent=1 // loop_footer_branch
      %24 = sbr.rel target = $region3
    $region8: #{tpu_custom_call.1} parent=1 // loop_exit
      _
    %5010 = vsyncpa [#allocation4], 1
    %s5011 = scalar_lea.sflag [#allocation4], 1
    %5012 = vsyncpa %s5011, 1
    %5013 = vsyncpa [#allocation7], 1
    %s5014 = scalar_lea.sflag [#allocation7], 1
    %5015 = vsyncpa %s5014, 1
    %5016 = vsyncpa [#allocation10], 1
    %5017 = vsyncpa [#allocation13], 1
    %5018 = vsyncpa [#allocation16], 1
    %5019 = vsyncpa [#allocation5], 1
    %s5020 = scalar_lea.sflag [#allocation5], 1
    %5021 = vsyncpa %s5020, 1

</llo_original>
